<compile_context>
chip_gen: v6e
topology: v6e:2x2x1
jax: 0.10.0
libtpu: 0.0.40
codegen_flags: <defaults>
</compile_context>

<pallas_src>
import functools

import jax
import jax.numpy as jnp
from jax.experimental import pallas as pl
from jax.experimental.pallas import tpu as pltpu

DIM = 128  # fixed self.dim in the PyTorch module


def _attention_aggregation_kernel(fuse_krs, *refs):
    """One row tile: x [G, tn, V] (bf16) -> aggregated logits [tn, Vp] (f32)."""
    if fuse_krs:
        (x_ref, wqk_ref, bqk_ref, wv_ref, bv_ref, wo_ref, bo_ref, out_ref) = refs
    else:
        (x_ref, wq_ref, bq_ref, wkc_ref, bks_ref, wv_ref, bv_ref, wo_ref,
         bo_ref, out_ref) = refs

    G, tn, V = x_ref.shape
    D = wv_ref.shape[1]
    inv_sqrt_d = 1.0 / jnp.sqrt(jnp.float32(D))

    # All-groups slab [G*tn, V] (bf16): one big MXU matmul instead of G small.
    x2d = x_ref[...].reshape(G * tn, V)

    if fuse_krs:
        # wqk = [Wq | colsum(Wk) replicated over D lanes]  -> qk[:, :D] is q and
        # qk[:, D:] is rowsum(k) already lane-broadcast; no VPU/XLU krs work.
        qk = (jnp.dot(x2d, wqk_ref[...], preferred_element_type=jnp.float32)
              + bqk_ref[...])                                   # [G*tn, 2D] f32
        scores = qk[:, :D] * qk[:, D:] * inv_sqrt_d             # [G*tn, D]  f32
    else:
        # 128-wide-MXU path (v5e and older): krs on the VPU/XLU, f32 elementwise.
        q = (jnp.dot(x2d, wq_ref[...], preferred_element_type=jnp.float32)
             + bq_ref[...])                                     # [G*tn, D]
        krs = (jnp.sum(x2d.astype(jnp.float32) * wkc_ref[...], axis=-1,
                       keepdims=True) + bks_ref[0])             # [G*tn, 1]
        scores = q * krs * inv_sqrt_d

    # Softmax over the group axis with a small live set.
    sg = [scores[g * tn:(g + 1) * tn] for g in range(G)]        # static slices
    m = sg[0]
    for g in range(1, G):
        m = jnp.maximum(m, sg[g])
    denom = jnp.exp(sg[0] - m)
    for g in range(1, G):
        denom = denom + jnp.exp(sg[g] - m)
    inv = pl.reciprocal(denom, approx=True)                     # EUP slot

    # weighted = (sum_g s_g * x_g) @ Wv + D * bv    (bv already scaled by D).
    wx = None
    for g in range(G):
        e_g = jnp.exp(sg[g] - m)   # recomputed (EUP idle here) -> no spilled tiles
        s_row = jnp.sum(e_g * inv, axis=-1, keepdims=True)      # [tn, 1]
        xg = x_ref[g].astype(jnp.float32)                       # [tn, V]
        wx = s_row * xg if wx is None else wx + s_row * xg

    weighted = (jnp.dot(wx.astype(jnp.bfloat16), wv_ref[...],
                        preferred_element_type=jnp.float32) + bv_ref[...])
    out = (jnp.dot(weighted.astype(jnp.bfloat16), wo_ref[...],
                   preferred_element_type=jnp.float32) + bo_ref[...])
    out_ref[...] = out.astype(out_ref.dtype)


def _default_fuse_krs():
    # 256-wide MXU output (v6e / v7x): fold colsum(Wk) into the Q matmul for free.
    # 128-wide MXU (v2-v5): keep the VPU/XLU krs path (widening doubles passes).
    try:
        kind = jax.devices()[0].device_kind.lower()
    except Exception:
        return True
    return not any(t in kind for t in ("v2", "v3", "v4", "v5"))


def attention_aggregation(group_logits, params, *, tile_n=128, fuse_krs=None):
    """group_logits: [G, B, S, V] -> aggregated logits [B, S, V] (f32)."""
    G, B, S, V = group_logits.shape
    N = B * S
    wq, bq, wk, bk, wv, bv, wo, bo = params
    D = wq.shape[1]

    if fuse_krs is None:
        fuse_krs = _default_fuse_krs()

    tile_n = max(8, (int(tile_n) // 8) * 8)
    Np = ((N + tile_n - 1) // tile_n) * tile_n          # pad rows, never shrink tile
    Vp = ((V + 127) // 128) * 128                       # lane-dense output

    # Stream activations in bf16 (halves HBM traffic / VMEM of the dominant block).
    x = group_logits.reshape(G, N, V).astype(jnp.bfloat16)
    if Np != N:
        x = jnp.pad(x, ((0, 0), (0, Np - N), (0, 0)))

    # Weight preprocessing (fold K projection, scale bv, pad/ cast). Under jit this
    # is compiled once with the call; in a serving loop precompute it outside.
    wk_col = jnp.sum(wk, axis=1)                                 # colsum(Wk) [V]
    bk_sum = jnp.sum(bk)
    wv_b = wv.astype(jnp.bfloat16)
    bv_sc = (jnp.float32(D) * bv.astype(jnp.float32)).reshape(1, D)  # sum_g s_g == D
    wo_p = wo if Vp == V else jnp.pad(wo, ((0, 0), (0, Vp - V)))
    bo_p = bo if Vp == V else jnp.pad(bo, ((0, 0), (0, Vp - V)))
    wo_b = wo_p.astype(jnp.bfloat16)
    bo_f = bo_p.astype(jnp.float32).reshape(1, Vp)

    full = lambda i: (0, 0)
    # Grid-invariant blocks: single-buffered (no dead second copy in VMEM).
    const = lambda shape: pl.BlockSpec(shape, full, pipeline_mode=pl.Buffered(1))

    if fuse_krs:
        wqk = jnp.concatenate(
            [wq, jnp.broadcast_to(wk_col[:, None], (V, D))],
            axis=1).astype(jnp.bfloat16)                         # [V, 2D]
        bqk = jnp.concatenate(
            [bq.astype(jnp.float32).reshape(1, D),
             jnp.full((1, D), bk_sum, jnp.float32)], axis=1)     # [1, 2D]
        w_args = (wqk, bqk, wv_b, bv_sc, wo_b, bo_f)
        w_specs = [const((V, 2 * D)), const((1, 2 * D)),
                   const((V, D)), const((1, D)),
                   const((D, Vp)), const((1, Vp))]
        w_bytes = (V * 2 * D + V * D + D * Vp) * 2 + (2 * D + D + Vp) * 4
    else:
        w_args = (wq.astype(jnp.bfloat16),
                  bq.astype(jnp.float32).reshape(1, D),
                  wk_col.astype(jnp.float32).reshape(1, V),
                  bk_sum.astype(jnp.float32).reshape(1),
                  wv_b, bv_sc, wo_b, bo_f)
        w_specs = [const((V, D)), const((1, D)), const((1, V)),
                   pl.BlockSpec(memory_space=pltpu.MemorySpace.SMEM),  # sum(bk)
                   const((V, D)), const((1, D)),
                   const((D, Vp)), const((1, Vp))]
        w_bytes = (V * D + V * D + D * Vp) * 2 + (D + V + D + Vp) * 4

    # VMEM budget: 2x streamed x/out blocks (double-buffered), 1x weights,
    # 25% headroom for Mosaic scratch/spills, capped at 3/4 of physical VMEM.
    x_block = G * tile_n * V * 2                      # bf16
    out_block = tile_n * Vp * 4                       # f32
    need = int((2 * (x_block + out_block) + w_bytes) * 1.25) + (2 << 20)
    try:
        vmem_cap = int(getattr(pltpu.get_tpu_info(), "vmem_capacity_bytes",
                               64 * 2 ** 20))
    except Exception:
        vmem_cap = 64 * 2 ** 20
    vmem_limit = int(max(16 * 2 ** 20, min(need, (vmem_cap * 3) // 4)))

    out = pl.pallas_call(
        functools.partial(_attention_aggregation_kernel, fuse_krs),
        out_shape=jax.ShapeDtypeStruct((Np, Vp), jnp.float32),
        grid_spec=pltpu.PrefetchScalarGridSpec(
            num_scalar_prefetch=0,
            grid=(Np // tile_n,),
            in_specs=[pl.BlockSpec((G, tile_n, V), lambda i: (0, i, 0))] + w_specs,
            out_specs=pl.BlockSpec((tile_n, Vp), lambda i: (i, 0)),
        ),
        compiler_params=pltpu.CompilerParams(
            dimension_semantics=("parallel",),
            vmem_limit_bytes=vmem_limit,
        ),
    )(x, *w_args)

    out = out[:N, :V]
    return out.reshape(B, S, V)


def reference(group_logits, params):
    """Pure-JAX f32 reference mirroring the PyTorch forward exactly."""
    G, B, S, V = group_logits.shape
    x = group_logits.reshape(G, B * S, V)
    wq, bq, wk, bk, wv, bv, wo, bo = params
    hp = jax.lax.Precision.HIGHEST
    q = jnp.dot(x, wq, precision=hp) + bq
    k = jnp.dot(x, wk, precision=hp) + bk
    v = jnp.dot(x, wv, precision=hp) + bv
    scores = jnp.einsum('gij,gik->gij', q, k, precision=hp) / jnp.sqrt(
        jnp.float32(DIM))
    w = jax.nn.softmax(scores, axis=0)
    weighted = jnp.einsum('gij,gik->ik', w, v, precision=hp)
    out = jnp.dot(weighted, wo, precision=hp) + bo
    return out.reshape(B, S, V)


def init_params(key, vocab_size):
    ks = jax.random.split(key, 8)
    scale_in = 1.0 / jnp.sqrt(jnp.float32(vocab_size))
    scale_d = 1.0 / jnp.sqrt(jnp.float32(DIM))
    wq = jax.random.normal(ks[0], (vocab_size, DIM), jnp.float32) * scale_in
    bq = jax.random.normal(ks[1], (1, DIM), jnp.float32) * 0.01
    wk = jax.random.normal(ks[2], (vocab_size, DIM), jnp.float32) * scale_in
    bk = jax.random.normal(ks[3], (1, DIM), jnp.float32) * 0.01
    wv = jax.random.normal(ks[4], (vocab_size, DIM), jnp.float32) * scale_in
    bv = jax.random.normal(ks[5], (1, DIM), jnp.float32) * 0.01
    wo = jax.random.normal(ks[6], (DIM, vocab_size), jnp.float32) * scale_d
    bo = jax.random.normal(ks[7], (1, vocab_size), jnp.float32) * 0.01
    return (wq, bq, wk, bk, wv, bv, wo, bo)


if __name__ == "__main__":
    # group_size, batch, seq_len, vocab_size: N = B*S = 1024 rows -> 8 grid
    # steps at tile_n=128 (>= 4 per TensorCore on v7x for pipelining).
    G, B, S, V = 4, 2, 512, 256

    key = jax.random.PRNGKey(0)
    k_x, k_p = jax.random.split(key)
    group_logits = jax.random.normal(k_x, (G, B, S, V), jnp.float32)
    params = init_params(k_p, V)

    agg = jax.jit(attention_aggregation)
    out = jax.block_until_ready(agg(group_logits, params))
    assert out.shape == (B, S, V)

    ref = reference(group_logits, params)
    err = float(jnp.max(jnp.abs(out - ref)))
    scale = float(jnp.max(jnp.abs(ref)))
    # bf16 matmul inputs (f32 accumulation) give ~0.5-1% relative error at the
    # O(100) output magnitude; the algebraic refactor itself is exact.
    assert err <= 3e-2 * scale, f"max abs err {err} vs output scale {scale}"

    print("KERNEL_OK")
</pallas_src>

<mosaic_0001>
module attributes {stable_mosaic.version = 11 : i64} {
  func.func @_attention_aggregation_kernel(%arg0: i32, %arg1: memref<4x128x256xbf16, #tpu.memory_space<vmem>>, %arg2: memref<256x256xbf16, #tpu.memory_space<vmem>>, %arg3: memref<1x256xf32, #tpu.memory_space<vmem>>, %arg4: memref<256x128xbf16, #tpu.memory_space<vmem>>, %arg5: memref<1x128xf32, #tpu.memory_space<vmem>>, %arg6: memref<128x256xbf16, #tpu.memory_space<vmem>>, %arg7: memref<1x256xf32, #tpu.memory_space<vmem>>, %arg8: memref<128x256xf32, #tpu.memory_space<vmem>>) attributes {dimension_semantics = [#tpu.dimension_semantics<parallel>], iteration_bounds = array<i64: 8>, scalar_prefetch = 0 : i64, scratch_operands = 0 : i64, tpu.core_type = #tpu.core_type<tc>, window_params = [{transform_indices = @transform_0, window_bounds = array<i64: 4, 128, 256>}, {pipeline_mode = #tpu.pipeline_mode<synchronous>, transform_indices = @transform_1, window_bounds = array<i64: 256, 256>}, {pipeline_mode = #tpu.pipeline_mode<synchronous>, transform_indices = @transform_2, window_bounds = array<i64: 1, 256>}, {pipeline_mode = #tpu.pipeline_mode<synchronous>, transform_indices = @transform_3, window_bounds = array<i64: 256, 128>}, {pipeline_mode = #tpu.pipeline_mode<synchronous>, transform_indices = @transform_4, window_bounds = array<i64: 1, 128>}, {pipeline_mode = #tpu.pipeline_mode<synchronous>, transform_indices = @transform_5, window_bounds = array<i64: 128, 256>}, {pipeline_mode = #tpu.pipeline_mode<synchronous>, transform_indices = @transform_6, window_bounds = array<i64: 1, 256>}, {transform_indices = @transform_7, window_bounds = array<i64: 128, 256>}]} {
    %cst = arith.constant 1.280000e+02 : f32
    %0 = math.sqrt %cst : f32
    %cst_0 = arith.constant 1.000000e+00 : f32
    %1 = arith.divf %cst_0, %0 : f32
    %c0 = arith.constant 0 : index
    %c0_1 = arith.constant 0 : index
    %c0_2 = arith.constant 0 : index
    %2 = vector.load %arg1[%c0, %c0_1, %c0_2] : memref<4x128x256xbf16, #tpu.memory_space<vmem>>, vector<4x128x256xbf16>
    %3 = vector.shape_cast %2 : vector<4x128x256xbf16> to vector<512x256xbf16>
    %c0_3 = arith.constant 0 : index
    %c0_4 = arith.constant 0 : index
    %4 = vector.load %arg2[%c0_3, %c0_4] : memref<256x256xbf16, #tpu.memory_space<vmem>>, vector<256x256xbf16>
    %cst_5 = arith.constant dense<0.000000e+00> : vector<512x256xf32>
    %5 = tpu.matmul %3, %4, %cst_5 {dimension_numbers = #tpu.dot_dimension_numbers<[1], [0], [0], [1], [0, 0, 1, 1], [], []>} : vector<512x256xbf16>, vector<256x256xbf16>, vector<512x256xf32> -> vector<512x256xf32>
    %c0_6 = arith.constant 0 : index
    %c0_7 = arith.constant 0 : index
    %6 = vector.load %arg3[%c0_6, %c0_7] : memref<1x256xf32, #tpu.memory_space<vmem>>, vector<1x256xf32>
    %7 = vector.broadcast %6 : vector<1x256xf32> to vector<512x256xf32>
    %8 = arith.addf %5, %7 : vector<512x256xf32>
    %9 = vector.extract_strided_slice %8 {offsets = [0, 0], sizes = [512, 128], strides = [1, 1]} : vector<512x256xf32> to vector<512x128xf32>
    %10 = vector.extract_strided_slice %8 {offsets = [0, 128], sizes = [512, 128], strides = [1, 1]} : vector<512x256xf32> to vector<512x128xf32>
    %11 = arith.mulf %9, %10 : vector<512x128xf32>
    %12 = vector.broadcast %1 : f32 to vector<512x128xf32>
    %13 = arith.mulf %11, %12 : vector<512x128xf32>
    %14 = vector.extract_strided_slice %13 {offsets = [0, 0], sizes = [128, 128], strides = [1, 1]} : vector<512x128xf32> to vector<128x128xf32>
    %15 = vector.extract_strided_slice %13 {offsets = [128, 0], sizes = [128, 128], strides = [1, 1]} : vector<512x128xf32> to vector<128x128xf32>
    %16 = vector.extract_strided_slice %13 {offsets = [256, 0], sizes = [128, 128], strides = [1, 1]} : vector<512x128xf32> to vector<128x128xf32>
    %17 = vector.extract_strided_slice %13 {offsets = [384, 0], sizes = [128, 128], strides = [1, 1]} : vector<512x128xf32> to vector<128x128xf32>
    %18 = arith.maximumf %14, %15 : vector<128x128xf32>
    %19 = arith.maximumf %18, %16 : vector<128x128xf32>
    %20 = arith.maximumf %19, %17 : vector<128x128xf32>
    %21 = arith.subf %14, %20 : vector<128x128xf32>
    %22 = math.exp %21 : vector<128x128xf32>
    %23 = arith.subf %15, %20 : vector<128x128xf32>
    %24 = math.exp %23 : vector<128x128xf32>
    %25 = arith.addf %22, %24 : vector<128x128xf32>
    %26 = arith.subf %16, %20 : vector<128x128xf32>
    %27 = math.exp %26 : vector<128x128xf32>
    %28 = arith.addf %25, %27 : vector<128x128xf32>
    %29 = arith.subf %17, %20 : vector<128x128xf32>
    %30 = math.exp %29 : vector<128x128xf32>
    %31 = arith.addf %28, %30 : vector<128x128xf32>
    %32 = tpu.reciprocal %31 {approx = true} : vector<128x128xf32> -> vector<128x128xf32>
    %33 = arith.subf %14, %20 : vector<128x128xf32>
    %34 = math.exp %33 : vector<128x128xf32>
    %35 = arith.mulf %34, %32 : vector<128x128xf32>
    %cst_8 = arith.constant dense<0.000000e+00> : vector<128xf32>
    %36 = vector.multi_reduction <add>, %35, %cst_8 [1] : vector<128x128xf32> to vector<128xf32>
    %37 = vector.shape_cast %36 : vector<128xf32> to vector<128x1xf32>
    %c0_9 = arith.constant 0 : index
    %c0_10 = arith.constant 0 : index
    %c0_11 = arith.constant 0 : index
    %38 = vector.load %arg1[%c0_9, %c0_10, %c0_11] : memref<4x128x256xbf16, #tpu.memory_space<vmem>>, vector<1x128x256xbf16>
    %39 = vector.shape_cast %38 : vector<1x128x256xbf16> to vector<128x256xbf16>
    %40 = arith.extf %39 : vector<128x256xbf16> to vector<128x256xf32>
    %41 = vector.broadcast %37 : vector<128x1xf32> to vector<128x256xf32>
    %42 = arith.mulf %41, %40 : vector<128x256xf32>
    %43 = arith.subf %15, %20 : vector<128x128xf32>
    %44 = math.exp %43 : vector<128x128xf32>
    %45 = arith.mulf %44, %32 : vector<128x128xf32>
    %cst_12 = arith.constant dense<0.000000e+00> : vector<128xf32>
    %46 = vector.multi_reduction <add>, %45, %cst_12 [1] : vector<128x128xf32> to vector<128xf32>
    %47 = vector.shape_cast %46 : vector<128xf32> to vector<128x1xf32>
    %c1 = arith.constant 1 : index
    %c0_13 = arith.constant 0 : index
    %c0_14 = arith.constant 0 : index
    %48 = vector.load %arg1[%c1, %c0_13, %c0_14] : memref<4x128x256xbf16, #tpu.memory_space<vmem>>, vector<1x128x256xbf16>
    %49 = vector.shape_cast %48 : vector<1x128x256xbf16> to vector<128x256xbf16>
    %50 = arith.extf %49 : vector<128x256xbf16> to vector<128x256xf32>
    %51 = vector.broadcast %47 : vector<128x1xf32> to vector<128x256xf32>
    %52 = arith.mulf %51, %50 : vector<128x256xf32>
    %53 = arith.addf %42, %52 : vector<128x256xf32>
    %54 = arith.subf %16, %20 : vector<128x128xf32>
    %55 = math.exp %54 : vector<128x128xf32>
    %56 = arith.mulf %55, %32 : vector<128x128xf32>
    %cst_15 = arith.constant dense<0.000000e+00> : vector<128xf32>
    %57 = vector.multi_reduction <add>, %56, %cst_15 [1] : vector<128x128xf32> to vector<128xf32>
    %58 = vector.shape_cast %57 : vector<128xf32> to vector<128x1xf32>
    %c2 = arith.constant 2 : index
    %c0_16 = arith.constant 0 : index
    %c0_17 = arith.constant 0 : index
    %59 = vector.load %arg1[%c2, %c0_16, %c0_17] : memref<4x128x256xbf16, #tpu.memory_space<vmem>>, vector<1x128x256xbf16>
    %60 = vector.shape_cast %59 : vector<1x128x256xbf16> to vector<128x256xbf16>
    %61 = arith.extf %60 : vector<128x256xbf16> to vector<128x256xf32>
    %62 = vector.broadcast %58 : vector<128x1xf32> to vector<128x256xf32>
    %63 = arith.mulf %62, %61 : vector<128x256xf32>
    %64 = arith.addf %53, %63 : vector<128x256xf32>
    %65 = arith.subf %17, %20 : vector<128x128xf32>
    %66 = math.exp %65 : vector<128x128xf32>
    %67 = arith.mulf %66, %32 : vector<128x128xf32>
    %cst_18 = arith.constant dense<0.000000e+00> : vector<128xf32>
    %68 = vector.multi_reduction <add>, %67, %cst_18 [1] : vector<128x128xf32> to vector<128xf32>
    %69 = vector.shape_cast %68 : vector<128xf32> to vector<128x1xf32>
    %c3 = arith.constant 3 : index
    %c0_19 = arith.constant 0 : index
    %c0_20 = arith.constant 0 : index
    %70 = vector.load %arg1[%c3, %c0_19, %c0_20] : memref<4x128x256xbf16, #tpu.memory_space<vmem>>, vector<1x128x256xbf16>
    %71 = vector.shape_cast %70 : vector<1x128x256xbf16> to vector<128x256xbf16>
    %72 = arith.extf %71 : vector<128x256xbf16> to vector<128x256xf32>
    %73 = vector.broadcast %69 : vector<128x1xf32> to vector<128x256xf32>
    %74 = arith.mulf %73, %72 : vector<128x256xf32>
    %75 = arith.addf %64, %74 : vector<128x256xf32>
    %76 = arith.truncf %75 : vector<128x256xf32> to vector<128x256xbf16>
    %c0_21 = arith.constant 0 : index
    %c0_22 = arith.constant 0 : index
    %77 = vector.load %arg4[%c0_21, %c0_22] : memref<256x128xbf16, #tpu.memory_space<vmem>>, vector<256x128xbf16>
    %cst_23 = arith.constant dense<0.000000e+00> : vector<128x128xf32>
    %78 = tpu.matmul %76, %77, %cst_23 {dimension_numbers = #tpu.dot_dimension_numbers<[1], [0], [0], [1], [0, 0, 1, 1], [], []>} : vector<128x256xbf16>, vector<256x128xbf16>, vector<128x128xf32> -> vector<128x128xf32>
    %c0_24 = arith.constant 0 : index
    %c0_25 = arith.constant 0 : index
    %79 = vector.load %arg5[%c0_24, %c0_25] : memref<1x128xf32, #tpu.memory_space<vmem>>, vector<1x128xf32>
    %80 = vector.broadcast %79 : vector<1x128xf32> to vector<128x128xf32>
    %81 = arith.addf %78, %80 : vector<128x128xf32>
    %82 = arith.truncf %81 : vector<128x128xf32> to vector<128x128xbf16>
    %c0_26 = arith.constant 0 : index
    %c0_27 = arith.constant 0 : index
    %83 = vector.load %arg6[%c0_26, %c0_27] : memref<128x256xbf16, #tpu.memory_space<vmem>>, vector<128x256xbf16>
    %cst_28 = arith.constant dense<0.000000e+00> : vector<128x256xf32>
    %84 = tpu.matmul %82, %83, %cst_28 {dimension_numbers = #tpu.dot_dimension_numbers<[1], [0], [0], [1], [0, 0, 1, 1], [], []>} : vector<128x128xbf16>, vector<128x256xbf16>, vector<128x256xf32> -> vector<128x256xf32>
    %c0_29 = arith.constant 0 : index
    %c0_30 = arith.constant 0 : index
    %85 = vector.load %arg7[%c0_29, %c0_30] : memref<1x256xf32, #tpu.memory_space<vmem>>, vector<1x256xf32>
    %86 = vector.broadcast %85 : vector<1x256xf32> to vector<128x256xf32>
    %87 = arith.addf %84, %86 : vector<128x256xf32>
    %c0_31 = arith.constant 0 : index
    %c0_32 = arith.constant 0 : index
    %88 = vector.load %arg8[%c0_31, %c0_32] : memref<128x256xf32, #tpu.memory_space<vmem>>, vector<128x256xf32>
    tpu.vector_store %arg8[%c0_31, %c0_32], %87 {strides = array<i32>} : memref<128x256xf32, #tpu.memory_space<vmem>>, vector<128x256xf32>,
    return
  }
  func.func @transform_0(%arg0: i32) -> (i32, i32, i32) {
    %c0_i32 = arith.constant 0 : i32
    %c0_i32_0 = arith.constant 0 : i32
    %c0_i32_1 = arith.constant 0 : i32
    return %c0_i32, %arg0, %c0_i32_0 : i32, i32, i32
  }
  func.func @transform_1(%arg0: i32) -> (i32, i32) {
    %c0_i32 = arith.constant 0 : i32
    %c0_i32_0 = arith.constant 0 : i32
    %c0_i32_1 = arith.constant 0 : i32
    return %c0_i32, %c0_i32_0 : i32, i32
  }
  func.func @transform_2(%arg0: i32) -> (i32, i32) {
    %c0_i32 = arith.constant 0 : i32
    %c0_i32_0 = arith.constant 0 : i32
    %c0_i32_1 = arith.constant 0 : i32
    return %c0_i32, %c0_i32_0 : i32, i32
  }
  func.func @transform_3(%arg0: i32) -> (i32, i32) {
    %c0_i32 = arith.constant 0 : i32
    %c0_i32_0 = arith.constant 0 : i32
    %c0_i32_1 = arith.constant 0 : i32
    return %c0_i32, %c0_i32_0 : i32, i32
  }
  func.func @transform_4(%arg0: i32) -> (i32, i32) {
    %c0_i32 = arith.constant 0 : i32
    %c0_i32_0 = arith.constant 0 : i32
    %c0_i32_1 = arith.constant 0 : i32
    return %c0_i32, %c0_i32_0 : i32, i32
  }
  func.func @transform_5(%arg0: i32) -> (i32, i32) {
    %c0_i32 = arith.constant 0 : i32
    %c0_i32_0 = arith.constant 0 : i32
    %c0_i32_1 = arith.constant 0 : i32
    return %c0_i32, %c0_i32_0 : i32, i32
  }
  func.func @transform_6(%arg0: i32) -> (i32, i32) {
    %c0_i32 = arith.constant 0 : i32
    %c0_i32_0 = arith.constant 0 : i32
    %c0_i32_1 = arith.constant 0 : i32
    return %c0_i32, %c0_i32_0 : i32, i32
  }
  func.func @transform_7(%arg0: i32) -> (i32, i32) {
    %c0_i32 = arith.constant 0 : i32
    %c0_i32_0 = arith.constant 0 : i32
    return %arg0, %c0_i32 : i32, i32
  }
}

</mosaic_0001>

<llo_original>
// kernel: attention_aggregation.1
$region0: #{attention_aggregation.1}
  #allocation0 [shape = 'u32[]', space=smem, size = 0x4, offset = 0x4, fixed_abs, tag = 'smem constant byte address 0x4 - core index']
  #allocation1 [shape = 'u32[144,128]{1,0:T(1,128)}', space=vmem, size = 0x12000, scoped, tag = 'internal scratch']
  %s0 = inlined_call_operand.vmem [shape: bf16[4,1024,256], index: 0, kind: input, shape index: {}]
  %s1 = inlined_call_operand.vmem [shape: bf16[256,256], index: 1, kind: input, shape index: {}]
  %s2 = inlined_call_operand.vmem [shape: f32[1,256], index: 2, kind: input, shape index: {}]
  %s3 = inlined_call_operand.vmem [shape: bf16[256,128], index: 3, kind: input, shape index: {}]
  %s4 = inlined_call_operand.vmem [shape: f32[1,128], index: 4, kind: input, shape index: {}]
  %s5 = inlined_call_operand.vmem [shape: bf16[128,256], index: 5, kind: input, shape index: {}]
  %s6 = inlined_call_operand.vmem [shape: f32[1,256], index: 6, kind: input, shape index: {}]
  %s7 = inlined_call_operand.hbm [shape: f32[1024,256], index: 7, kind: output, shape index: {}]
  %s8 = sld [smem:[#allocation0]]
  $region99: #{attention_aggregation.1} parent=0
    _
  %s10 = ssub.s32 1, %s8
  %s11 = scalar_select 0, %s10, %s8
  $region1: #{attention_aggregation.1} parent=0
    #allocation2 [shape = 'u8[524288]{0}', space=vmem, size = 0x80000, scoped, tag = 'input window, operand 0']
    #allocation3 [shape = 'u8[262144]{0}', space=vmem, size = 0x40000, scoped, tag = 'output window, operand 0']
    #allocation4 [shape = 's32[2]{0}', space=sflag, size = 0x8, scoped, tag = 'scoped memory for attention_aggregation.1']
    %12 = vsyncpa [#allocation4], 0
    %s13 = scalar_lea.sflag [#allocation4], 1
    %14 = vsyncpa %s13, 0
    loop: start=0, step=1, limit=10
    $region2: #{attention_aggregation.1} parent=1 // loop_pre_header
      _
    $region3: #{attention_aggregation.1} parent=1 // loop_header
      %s16 = sphi 0, %s20
      %p17 = scmp.ge.s32.totalorder %s16, 10
      %s26 = sphi 0, %s28
      %s29 = sphi 0, %s26
      %s30 = sphi 0, %s29
      %s46 = sphi 0, %s30
      %s50 = sphi 0, %s50
      %s52 = sphi 0, %s50
      %s53 = sphi 0, %s52
      %s67 = sphi 0, %s53
      %s71 = sphi 0, %s71
      %s73 = sphi 0, %s71
      %s74 = sphi 0, %s73
      %s88 = sphi 0, %s74
      %s92 = sphi 0, %s92
      %s94 = sphi 0, %s92
      %s95 = sphi 0, %s94
      %s109 = sphi 0, %s95
      %s113 = sphi 0, %s113
      %s115 = sphi 0, %s113
      %s116 = sphi 0, %s115
      %s130 = sphi 0, %s116
      %s134 = sphi 0, %s134
      %s136 = sphi 0, %s134
      %s137 = sphi 0, %s136
      %s151 = sphi 0, %s137
      %s155 = sphi 0, %s155
      %s157 = sphi 0, %s155
      %s158 = sphi 0, %s157
      %s172 = sphi 0, %s158
      %s178 = sphi 0, %s180
      %s181 = sphi 0, %s178
      %s182 = sphi 0, %s181
      %s198 = sphi 0, %s182
    $region4: #{attention_aggregation.1} parent=1 // loop_header_branch
      %19 = sbr.rel (%p17) target = $region8
    $region5: #{attention_aggregation.1} parent=1 // loop_body
      %s21 = ssub.s32 %s16, 1
      %s22 = ssub.s32 %s16, 2
      %s23 = sadd.s32 %s16, 1
      %s24 = ssub.s32 %s16, %s23
      %p25 = scmp.eq.s32.totalorder %s24, 0
      %s27 = sadd.s32 %s26, 1
      %s28 = scalar_select %p25, %s26, %s27
      %p31 = pneg %p25
      %p32 = scmp.eq.s32.totalorder %s16, 7
      %p33 = por %p31, %p32
      %p34 = scmp.ne.s32.totalorder %s26, %s29
      %p35 = scmp.eq.s32.totalorder %s16, 0
      %p36 = por %p34, %p35
      %p37 = scmp.ne.s32.totalorder %s26, %s29
      %p38 = scmp.eq.s32.totalorder %s21, 7
      %p39 = por %p37, %p38
      %p40 = scmp.ne.s32.totalorder %s29, %s30
      %p41 = scmp.eq.s32.totalorder %s21, 0
      %p42 = por %p40, %p41
      %p43 = scmp.ne.s32.totalorder %s29, %s30
      %p44 = scmp.eq.s32.totalorder %s22, 7
      %p45 = por %p43, %p44
      %p47 = scmp.ne.s32.totalorder %s30, %s46
      %p48 = scmp.eq.s32.totalorder %s22, 0
      %p49 = por %p47, %p48
      %s51 = sadd.s32 %s50, 1
      %p54 = scmp.eq.s32.totalorder %s16, 7
      %p55 = scmp.ne.s32.totalorder %s50, %s52
      %p56 = scmp.eq.s32.totalorder %s16, 0
      %p57 = por %p55, %p56
      %p58 = scmp.ne.s32.totalorder %s50, %s52
      %p59 = scmp.eq.s32.totalorder %s21, 7
      %p60 = por %p58, %p59
      %p61 = scmp.ne.s32.totalorder %s52, %s53
      %p62 = scmp.eq.s32.totalorder %s21, 0
      %p63 = por %p61, %p62
      %p64 = scmp.ne.s32.totalorder %s52, %s53
      %p65 = scmp.eq.s32.totalorder %s22, 7
      %p66 = por %p64, %p65
      %p68 = scmp.ne.s32.totalorder %s53, %s67
      %p69 = scmp.eq.s32.totalorder %s22, 0
      %p70 = por %p68, %p69
      %s72 = sadd.s32 %s71, 1
      %p75 = scmp.eq.s32.totalorder %s16, 7
      %p76 = scmp.ne.s32.totalorder %s71, %s73
      %p77 = scmp.eq.s32.totalorder %s16, 0
      %p78 = por %p76, %p77
      %p79 = scmp.ne.s32.totalorder %s71, %s73
      %p80 = scmp.eq.s32.totalorder %s21, 7
      %p81 = por %p79, %p80
      %p82 = scmp.ne.s32.totalorder %s73, %s74
      %p83 = scmp.eq.s32.totalorder %s21, 0
      %p84 = por %p82, %p83
      %p85 = scmp.ne.s32.totalorder %s73, %s74
      %p86 = scmp.eq.s32.totalorder %s22, 7
      %p87 = por %p85, %p86
      %p89 = scmp.ne.s32.totalorder %s74, %s88
      %p90 = scmp.eq.s32.totalorder %s22, 0
      %p91 = por %p89, %p90
      %s93 = sadd.s32 %s92, 1
      %p96 = scmp.eq.s32.totalorder %s16, 7
      %p97 = scmp.ne.s32.totalorder %s92, %s94
      %p98 = scmp.eq.s32.totalorder %s16, 0
      %p99 = por %p97, %p98
      %p100 = scmp.ne.s32.totalorder %s92, %s94
      %p101 = scmp.eq.s32.totalorder %s21, 7
      %p102 = por %p100, %p101
      %p103 = scmp.ne.s32.totalorder %s94, %s95
      %p104 = scmp.eq.s32.totalorder %s21, 0
      %p105 = por %p103, %p104
      %p106 = scmp.ne.s32.totalorder %s94, %s95
      %p107 = scmp.eq.s32.totalorder %s22, 7
      %p108 = por %p106, %p107
      %p110 = scmp.ne.s32.totalorder %s95, %s109
      %p111 = scmp.eq.s32.totalorder %s22, 0
      %p112 = por %p110, %p111
      %s114 = sadd.s32 %s113, 1
      %p117 = scmp.eq.s32.totalorder %s16, 7
      %p118 = scmp.ne.s32.totalorder %s113, %s115
      %p119 = scmp.eq.s32.totalorder %s16, 0
      %p120 = por %p118, %p119
      %p121 = scmp.ne.s32.totalorder %s113, %s115
      %p122 = scmp.eq.s32.totalorder %s21, 7
      %p123 = por %p121, %p122
      %p124 = scmp.ne.s32.totalorder %s115, %s116
      %p125 = scmp.eq.s32.totalorder %s21, 0
      %p126 = por %p124, %p125
      %p127 = scmp.ne.s32.totalorder %s115, %s116
      %p128 = scmp.eq.s32.totalorder %s22, 7
      %p129 = por %p127, %p128
      %p131 = scmp.ne.s32.totalorder %s116, %s130
      %p132 = scmp.eq.s32.totalorder %s22, 0
      %p133 = por %p131, %p132
      %s135 = sadd.s32 %s134, 1
      %p138 = scmp.eq.s32.totalorder %s16, 7
      %p139 = scmp.ne.s32.totalorder %s134, %s136
      %p140 = scmp.eq.s32.totalorder %s16, 0
      %p141 = por %p139, %p140
      %p142 = scmp.ne.s32.totalorder %s134, %s136
      %p143 = scmp.eq.s32.totalorder %s21, 7
      %p144 = por %p142, %p143
      %p145 = scmp.ne.s32.totalorder %s136, %s137
      %p146 = scmp.eq.s32.totalorder %s21, 0
      %p147 = por %p145, %p146
      %p148 = scmp.ne.s32.totalorder %s136, %s137
      %p149 = scmp.eq.s32.totalorder %s22, 7
      %p150 = por %p148, %p149
      %p152 = scmp.ne.s32.totalorder %s137, %s151
      %p153 = scmp.eq.s32.totalorder %s22, 0
      %p154 = por %p152, %p153
      %s156 = sadd.s32 %s155, 1
      %p159 = scmp.eq.s32.totalorder %s16, 7
      %p160 = scmp.ne.s32.totalorder %s155, %s157
      %p161 = scmp.eq.s32.totalorder %s16, 0
      %p162 = por %p160, %p161
      %p163 = scmp.ne.s32.totalorder %s155, %s157
      %p164 = scmp.eq.s32.totalorder %s21, 7
      %p165 = por %p163, %p164
      %p166 = scmp.ne.s32.totalorder %s157, %s158
      %p167 = scmp.eq.s32.totalorder %s21, 0
      %p168 = por %p166, %p167
      %p169 = scmp.ne.s32.totalorder %s157, %s158
      %p170 = scmp.eq.s32.totalorder %s22, 7
      %p171 = por %p169, %p170
      %p173 = scmp.ne.s32.totalorder %s158, %s172
      %p174 = scmp.eq.s32.totalorder %s22, 0
      %p175 = por %p173, %p174
      %s176 = ssub.s32 %s16, %s23
      %p177 = scmp.eq.s32.totalorder %s176, 0
      %s179 = sadd.s32 %s178, 1
      %s180 = scalar_select %p177, %s178, %s179
      %p183 = pneg %p177
      %p184 = scmp.eq.s32.totalorder %s16, 7
      %p185 = por %p183, %p184
      %p186 = scmp.ne.s32.totalorder %s178, %s181
      %p187 = scmp.eq.s32.totalorder %s16, 0
      %p188 = por %p186, %p187
      %p189 = scmp.ne.s32.totalorder %s178, %s181
      %p190 = scmp.eq.s32.totalorder %s21, 7
      %p191 = por %p189, %p190
      %p192 = scmp.ne.s32.totalorder %s181, %s182
      %p193 = scmp.eq.s32.totalorder %s21, 0
      %p194 = por %p192, %p193
      %p195 = scmp.ne.s32.totalorder %s181, %s182
      %p196 = scmp.eq.s32.totalorder %s22, 7
      %p197 = por %p195, %p196
      %p199 = scmp.ne.s32.totalorder %s182, %s198
      %p200 = scmp.eq.s32.totalorder %s22, 0
      %p201 = por %p199, %p200
      %p202 = scmp.le.s32.totalorder 1, %s16
      %p203 = scmp.lt.s32.totalorder %s16, 9
      %p204 = pnand %p202, %p203
      %p205 = pneg %p204
      // Predicated region
      $region9: #{attention_aggregation.1} parent=5 // pred_check
        _
      $region10: #{attention_aggregation.1} parent=5 // pred_check_branch
        %207 = sbr.rel (%p204) target = $region12
      $region11: #{attention_aggregation.1} parent=5 // pred_region
        %s208 = ssub.s32 %s16, 1
        // Predicated region
        $region13: #{attention_aggregation.1} parent=11 // pred_check
          %p209 = pneg %p63
        $region14: #{attention_aggregation.1} parent=11 // pred_check_branch
          %211 = sbr.rel (%p209) target = $region16
        $region15: #{attention_aggregation.1} parent=11 // pred_region
          _
        $region16: #{attention_aggregation.1} parent=11 // pred_fallthru
          _
        // Predicated region
        $region17: #{attention_aggregation.1} parent=11 // pred_check
          %p212 = pneg %p84
        $region18: #{attention_aggregation.1} parent=11 // pred_check_branch
          %214 = sbr.rel (%p212) target = $region20
        $region19: #{attention_aggregation.1} parent=11 // pred_region
          _
        $region20: #{attention_aggregation.1} parent=11 // pred_fallthru
          _
        // Predicated region
        $region21: #{attention_aggregation.1} parent=11 // pred_check
          %p215 = pneg %p105
        $region22: #{attention_aggregation.1} parent=11 // pred_check_branch
          %217 = sbr.rel (%p215) target = $region24
        $region23: #{attention_aggregation.1} parent=11 // pred_region
          _
        $region24: #{attention_aggregation.1} parent=11 // pred_fallthru
          _
        // Predicated region
        $region25: #{attention_aggregation.1} parent=11 // pred_check
          %p218 = pneg %p126
        $region26: #{attention_aggregation.1} parent=11 // pred_check_branch
          %220 = sbr.rel (%p218) target = $region28
        $region27: #{attention_aggregation.1} parent=11 // pred_region
          _
        $region28: #{attention_aggregation.1} parent=11 // pred_fallthru
          _
        // Predicated region
        $region29: #{attention_aggregation.1} parent=11 // pred_check
          %p221 = pneg %p147
        $region30: #{attention_aggregation.1} parent=11 // pred_check_branch
          %223 = sbr.rel (%p221) target = $region32
        $region31: #{attention_aggregation.1} parent=11 // pred_region
          _
        $region32: #{attention_aggregation.1} parent=11 // pred_fallthru
          _
        // Predicated region
        $region33: #{attention_aggregation.1} parent=11 // pred_check
          %p224 = pneg %p168
        $region34: #{attention_aggregation.1} parent=11 // pred_check_branch
          %226 = sbr.rel (%p224) target = $region36
        $region35: #{attention_aggregation.1} parent=11 // pred_region
          _
        $region36: #{attention_aggregation.1} parent=11 // pred_fallthru
          _
      $region12: #{attention_aggregation.1} parent=5 // pred_fallthru
        _
      %p227 = scmp.lt.s32.totalorder %s16, 8
      // Predicated region
      $region37: #{attention_aggregation.1} parent=5 // pred_check
        %p228 = pneg %p227
      $region38: #{attention_aggregation.1} parent=5 // pred_check_branch
        %230 = sbr.rel (%p228) target = $region40
      $region39: #{attention_aggregation.1} parent=5 // pred_region
        // Predicated region
        $region41: #{attention_aggregation.1} parent=39 // pred_check
          %p231 = pneg %p36
        $region42: #{attention_aggregation.1} parent=39 // pred_check_branch
          %233 = sbr.rel (%p231) target = $region44
        $region43: #{attention_aggregation.1} parent=39 // pred_region
          %s234 = sand.u32 %s26, 1
          %s235 = sand.u32 %s26, 1
          %s236 = smul.addr %s235, 512
          %s237 = scalar_lea.vmem [#allocation2], %s236
          %s238 = smul.u32 16, %s16
          %s239 = smul.addr %s238, 2
          %s240 = smul.addr %s239, 4
          %s241 = scalar_lea.vmem %s0, %s240
          // Predicated region
          $region45: #{attention_aggregation.1} parent=43 // pred_check
            _
          $region46: #{attention_aggregation.1} parent=43 // pred_check_branch
            %243 = sbr.rel (0) target = $region48
          $region47: #{attention_aggregation.1} parent=43 // pred_region
            // Predicated region
            $region49: #{attention_aggregation.1} parent=47 // pred_check
              _
            $region50: #{attention_aggregation.1} parent=47 // pred_check_branch
              %245 = sbr.rel (0) target = $region52
            $region51: #{attention_aggregation.1} parent=47 // pred_region
              // Predicated region
              $region64: #{attention_aggregation.1} parent=51 // pred_check
                _
              $region65: #{attention_aggregation.1} parent=51 // pred_check_branch
                %387 = sbr.rel (0) target = $region67
              $region66: #{attention_aggregation.1} parent=51 // pred_region
                loop: start=0, step=1, limit=1
                $region68: #{attention_aggregation.1} parent=66 // loop_pre_header
                  _
                $region69: #{attention_aggregation.1} parent=66 // loop_header
                  %s389 = sphi 0, %s393
                  %p390 = scmp.ge.s32.totalorder %s389, 1
                  %s394 = sphi %s241, %s241
                  %s395 = sphi %s237, %s237
                $region70: #{attention_aggregation.1} parent=66 // loop_header_branch
                  %392 = sbr.rel (%p390) target = $region74
                $region71: #{attention_aggregation.1} parent=66 // loop_body
                  %v396 = vld [vmem:[%s394] sm:$0xff]
                  %397 = vst [vmem:[%s395] sm:$0xff] %v396
                  %v398 = vld [vmem:[%s394 + $0x8] sm:$0xff]
                  %399 = vst [vmem:[%s395 + $0x8] sm:$0xff] %v398
                  %v400 = vld [vmem:[%s394 + $0x10] sm:$0xff]
                  %401 = vst [vmem:[%s395 + $0x10] sm:$0xff] %v400
                  %v402 = vld [vmem:[%s394 + $0x18] sm:$0xff]
                  %403 = vst [vmem:[%s395 + $0x18] sm:$0xff] %v402
                  %v404 = vld [vmem:[%s394 + $0x20] sm:$0xff]
                  %405 = vst [vmem:[%s395 + $0x20] sm:$0xff] %v404
                  %v406 = vld [vmem:[%s394 + $0x28] sm:$0xff]
                  %407 = vst [vmem:[%s395 + $0x28] sm:$0xff] %v406
                  %v408 = vld [vmem:[%s394 + $0x30] sm:$0xff]
                  %409 = vst [vmem:[%s395 + $0x30] sm:$0xff] %v408
                  %v410 = vld [vmem:[%s394 + $0x38] sm:$0xff]
                  %411 = vst [vmem:[%s395 + $0x38] sm:$0xff] %v410
                  %v412 = vld [vmem:[%s394 + $0x40] sm:$0xff]
                  %413 = vst [vmem:[%s395 + $0x40] sm:$0xff] %v412
                  %v414 = vld [vmem:[%s394 + $0x48] sm:$0xff]
                  %415 = vst [vmem:[%s395 + $0x48] sm:$0xff] %v414
                  %v416 = vld [vmem:[%s394 + $0x50] sm:$0xff]
                  %417 = vst [vmem:[%s395 + $0x50] sm:$0xff] %v416
                  %v418 = vld [vmem:[%s394 + $0x58] sm:$0xff]
                  %419 = vst [vmem:[%s395 + $0x58] sm:$0xff] %v418
                  %v420 = vld [vmem:[%s394 + $0x60] sm:$0xff]
                  %421 = vst [vmem:[%s395 + $0x60] sm:$0xff] %v420
                  %v422 = vld [vmem:[%s394 + $0x68] sm:$0xff]
                  %423 = vst [vmem:[%s395 + $0x68] sm:$0xff] %v422
                  %v424 = vld [vmem:[%s394 + $0x70] sm:$0xff]
                  %425 = vst [vmem:[%s395 + $0x70] sm:$0xff] %v424
                  %v426 = vld [vmem:[%s394 + $0x78] sm:$0xff]
                  %427 = vst [vmem:[%s395 + $0x78] sm:$0xff] %v426
                  %v428 = vld [vmem:[%s394 + $0x400] sm:$0xff]
                  %429 = vst [vmem:[%s395 + $0x80] sm:$0xff] %v428
                  %v430 = vld [vmem:[%s394 + $0x408] sm:$0xff]
                  %431 = vst [vmem:[%s395 + $0x88] sm:$0xff] %v430
                  %v432 = vld [vmem:[%s394 + $0x410] sm:$0xff]
                  %433 = vst [vmem:[%s395 + $0x90] sm:$0xff] %v432
                  %v434 = vld [vmem:[%s394 + $0x418] sm:$0xff]
                  %435 = vst [vmem:[%s395 + $0x98] sm:$0xff] %v434
                  %v436 = vld [vmem:[%s394 + $0x420] sm:$0xff]
                  %437 = vst [vmem:[%s395 + $0xa0] sm:$0xff] %v436
                  %v438 = vld [vmem:[%s394 + $0x428] sm:$0xff]
                  %439 = vst [vmem:[%s395 + $0xa8] sm:$0xff] %v438
                  %v440 = vld [vmem:[%s394 + $0x430] sm:$0xff]
                  %441 = vst [vmem:[%s395 + $0xb0] sm:$0xff] %v440
                  %v442 = vld [vmem:[%s394 + $0x438] sm:$0xff]
                  %443 = vst [vmem:[%s395 + $0xb8] sm:$0xff] %v442
                  %v444 = vld [vmem:[%s394 + $0x440] sm:$0xff]
                  %445 = vst [vmem:[%s395 + $0xc0] sm:$0xff] %v444
                  %v446 = vld [vmem:[%s394 + $0x448] sm:$0xff]
                  %447 = vst [vmem:[%s395 + $0xc8] sm:$0xff] %v446
                  %v448 = vld [vmem:[%s394 + $0x450] sm:$0xff]
                  %449 = vst [vmem:[%s395 + $0xd0] sm:$0xff] %v448
                  %v450 = vld [vmem:[%s394 + $0x458] sm:$0xff]
                  %451 = vst [vmem:[%s395 + $0xd8] sm:$0xff] %v450
                  %v452 = vld [vmem:[%s394 + $0x460] sm:$0xff]
                  %453 = vst [vmem:[%s395 + $0xe0] sm:$0xff] %v452
                  %v454 = vld [vmem:[%s394 + $0x468] sm:$0xff]
                  %455 = vst [vmem:[%s395 + $0xe8] sm:$0xff] %v454
                  %v456 = vld [vmem:[%s394 + $0x470] sm:$0xff]
                  %457 = vst [vmem:[%s395 + $0xf0] sm:$0xff] %v456
                  %v458 = vld [vmem:[%s394 + $0x478] sm:$0xff]
                  %459 = vst [vmem:[%s395 + $0xf8] sm:$0xff] %v458
                  %v460 = vld [vmem:[%s394 + $0x800] sm:$0xff]
                  %461 = vst [vmem:[%s395 + $0x100] sm:$0xff] %v460
                  %v462 = vld [vmem:[%s394 + $0x808] sm:$0xff]
                  %463 = vst [vmem:[%s395 + $0x108] sm:$0xff] %v462
                  %v464 = vld [vmem:[%s394 + $0x810] sm:$0xff]
                  %465 = vst [vmem:[%s395 + $0x110] sm:$0xff] %v464
                  %v466 = vld [vmem:[%s394 + $0x818] sm:$0xff]
                  %467 = vst [vmem:[%s395 + $0x118] sm:$0xff] %v466
                  %v468 = vld [vmem:[%s394 + $0x820] sm:$0xff]
                  %469 = vst [vmem:[%s395 + $0x120] sm:$0xff] %v468
                  %v470 = vld [vmem:[%s394 + $0x828] sm:$0xff]
                  %471 = vst [vmem:[%s395 + $0x128] sm:$0xff] %v470
                  %v472 = vld [vmem:[%s394 + $0x830] sm:$0xff]
                  %473 = vst [vmem:[%s395 + $0x130] sm:$0xff] %v472
                  %v474 = vld [vmem:[%s394 + $0x838] sm:$0xff]
                  %475 = vst [vmem:[%s395 + $0x138] sm:$0xff] %v474
                  %v476 = vld [vmem:[%s394 + $0x840] sm:$0xff]
                  %477 = vst [vmem:[%s395 + $0x140] sm:$0xff] %v476
                  %v478 = vld [vmem:[%s394 + $0x848] sm:$0xff]
                  %479 = vst [vmem:[%s395 + $0x148] sm:$0xff] %v478
                  %v480 = vld [vmem:[%s394 + $0x850] sm:$0xff]
                  %481 = vst [vmem:[%s395 + $0x150] sm:$0xff] %v480
                  %v482 = vld [vmem:[%s394 + $0x858] sm:$0xff]
                  %483 = vst [vmem:[%s395 + $0x158] sm:$0xff] %v482
                  %v484 = vld [vmem:[%s394 + $0x860] sm:$0xff]
                  %485 = vst [vmem:[%s395 + $0x160] sm:$0xff] %v484
                  %v486 = vld [vmem:[%s394 + $0x868] sm:$0xff]
                  %487 = vst [vmem:[%s395 + $0x168] sm:$0xff] %v486
                  %v488 = vld [vmem:[%s394 + $0x870] sm:$0xff]
                  %489 = vst [vmem:[%s395 + $0x170] sm:$0xff] %v488
                  %v490 = vld [vmem:[%s394 + $0x878] sm:$0xff]
                  %491 = vst [vmem:[%s395 + $0x178] sm:$0xff] %v490
                  %v492 = vld [vmem:[%s394 + $0xc00] sm:$0xff]
                  %493 = vst [vmem:[%s395 + $0x180] sm:$0xff] %v492
                  %v494 = vld [vmem:[%s394 + $0xc08] sm:$0xff]
                  %495 = vst [vmem:[%s395 + $0x188] sm:$0xff] %v494
                  %v496 = vld [vmem:[%s394 + $0xc10] sm:$0xff]
                  %497 = vst [vmem:[%s395 + $0x190] sm:$0xff] %v496
                  %v498 = vld [vmem:[%s394 + $0xc18] sm:$0xff]
                  %499 = vst [vmem:[%s395 + $0x198] sm:$0xff] %v498
                  %v500 = vld [vmem:[%s394 + $0xc20] sm:$0xff]
                  %501 = vst [vmem:[%s395 + $0x1a0] sm:$0xff] %v500
                  %v502 = vld [vmem:[%s394 + $0xc28] sm:$0xff]
                  %503 = vst [vmem:[%s395 + $0x1a8] sm:$0xff] %v502
                  %v504 = vld [vmem:[%s394 + $0xc30] sm:$0xff]
                  %505 = vst [vmem:[%s395 + $0x1b0] sm:$0xff] %v504
                  %v506 = vld [vmem:[%s394 + $0xc38] sm:$0xff]
                  %507 = vst [vmem:[%s395 + $0x1b8] sm:$0xff] %v506
                  %v508 = vld [vmem:[%s394 + $0xc40] sm:$0xff]
                  %509 = vst [vmem:[%s395 + $0x1c0] sm:$0xff] %v508
                  %v510 = vld [vmem:[%s394 + $0xc48] sm:$0xff]
                  %511 = vst [vmem:[%s395 + $0x1c8] sm:$0xff] %v510
                  %v512 = vld [vmem:[%s394 + $0xc50] sm:$0xff]
                  %513 = vst [vmem:[%s395 + $0x1d0] sm:$0xff] %v512
                  %v514 = vld [vmem:[%s394 + $0xc58] sm:$0xff]
                  %515 = vst [vmem:[%s395 + $0x1d8] sm:$0xff] %v514
                  %v516 = vld [vmem:[%s394 + $0xc60] sm:$0xff]
                  %517 = vst [vmem:[%s395 + $0x1e0] sm:$0xff] %v516
                  %v518 = vld [vmem:[%s394 + $0xc68] sm:$0xff]
                  %519 = vst [vmem:[%s395 + $0x1e8] sm:$0xff] %v518
                  %v520 = vld [vmem:[%s394 + $0xc70] sm:$0xff]
                  %521 = vst [vmem:[%s395 + $0x1f0] sm:$0xff] %v520
                  %v522 = vld [vmem:[%s394 + $0xc78] sm:$0xff]
                  %523 = vst [vmem:[%s395 + $0x1f8] sm:$0xff] %v522
                $region72: #{attention_aggregation.1} parent=66 // loop_footer
                  %s393 = sadd.s32 1, %s389
                $region73: #{attention_aggregation.1} parent=66 // loop_footer_branch
                  %388 = sbr.rel target = $region69
                $region74: #{attention_aggregation.1} parent=66 // loop_exit
                  _
              $region67: #{attention_aggregation.1} parent=51 // pred_fallthru
                _
              // Predicated region
              $region75: #{attention_aggregation.1} parent=51 // pred_check
                _
              $region76: #{attention_aggregation.1} parent=51 // pred_check_branch
                %525 = sbr.rel target = $region78
              $region77: #{attention_aggregation.1} parent=51 // pred_region
                _
              $region78: #{attention_aggregation.1} parent=51 // pred_fallthru
                _
            $region52: #{attention_aggregation.1} parent=47 // pred_fallthru
              _
            // Predicated region
            $region53: #{attention_aggregation.1} parent=47 // pred_check
              _
            $region54: #{attention_aggregation.1} parent=47 // pred_check_branch
              %247 = sbr.rel target = $region56
            $region55: #{attention_aggregation.1} parent=47 // pred_region
              %s249 = ssub.s32 256, 1
              loop: start=0, step=1, limit=1
              $region57: #{attention_aggregation.1} parent=55 // loop_pre_header
                _
              $region58: #{attention_aggregation.1} parent=55 // loop_header
                %s251 = sphi 0, %s255
                %p252 = scmp.ge.s32.totalorder %s251, 1
                %s256 = sphi %s241, %s241
                %s257 = sphi %s237, %s237
              $region59: #{attention_aggregation.1} parent=55 // loop_header_branch
                %254 = sbr.rel (%p252) target = $region63
              $region60: #{attention_aggregation.1} parent=55 // loop_body
                %v258 = vld [vmem:[%s256] sm:%s249]
                %259 = vst [vmem:[%s257] sm:%s249] %v258
                %v260 = vld [vmem:[%s256 + $0x8] sm:%s249]
                %261 = vst [vmem:[%s257 + $0x8] sm:%s249] %v260
                %v262 = vld [vmem:[%s256 + $0x10] sm:%s249]
                %263 = vst [vmem:[%s257 + $0x10] sm:%s249] %v262
                %v264 = vld [vmem:[%s256 + $0x18] sm:%s249]
                %265 = vst [vmem:[%s257 + $0x18] sm:%s249] %v264
                %v266 = vld [vmem:[%s256 + $0x20] sm:%s249]
                %267 = vst [vmem:[%s257 + $0x20] sm:%s249] %v266
                %v268 = vld [vmem:[%s256 + $0x28] sm:%s249]
                %269 = vst [vmem:[%s257 + $0x28] sm:%s249] %v268
                %v270 = vld [vmem:[%s256 + $0x30] sm:%s249]
                %271 = vst [vmem:[%s257 + $0x30] sm:%s249] %v270
                %v272 = vld [vmem:[%s256 + $0x38] sm:%s249]
                %273 = vst [vmem:[%s257 + $0x38] sm:%s249] %v272
                %v274 = vld [vmem:[%s256 + $0x40] sm:%s249]
                %275 = vst [vmem:[%s257 + $0x40] sm:%s249] %v274
                %v276 = vld [vmem:[%s256 + $0x48] sm:%s249]
                %277 = vst [vmem:[%s257 + $0x48] sm:%s249] %v276
                %v278 = vld [vmem:[%s256 + $0x50] sm:%s249]
                %279 = vst [vmem:[%s257 + $0x50] sm:%s249] %v278
                %v280 = vld [vmem:[%s256 + $0x58] sm:%s249]
                %281 = vst [vmem:[%s257 + $0x58] sm:%s249] %v280
                %v282 = vld [vmem:[%s256 + $0x60] sm:%s249]
                %283 = vst [vmem:[%s257 + $0x60] sm:%s249] %v282
                %v284 = vld [vmem:[%s256 + $0x68] sm:%s249]
                %285 = vst [vmem:[%s257 + $0x68] sm:%s249] %v284
                %v286 = vld [vmem:[%s256 + $0x70] sm:%s249]
                %287 = vst [vmem:[%s257 + $0x70] sm:%s249] %v286
                %v288 = vld [vmem:[%s256 + $0x78] sm:%s249]
                %289 = vst [vmem:[%s257 + $0x78] sm:%s249] %v288
                %v290 = vld [vmem:[%s256 + $0x400] sm:%s249]
                %291 = vst [vmem:[%s257 + $0x80] sm:%s249] %v290
                %v292 = vld [vmem:[%s256 + $0x408] sm:%s249]
                %293 = vst [vmem:[%s257 + $0x88] sm:%s249] %v292
                %v294 = vld [vmem:[%s256 + $0x410] sm:%s249]
                %295 = vst [vmem:[%s257 + $0x90] sm:%s249] %v294
                %v296 = vld [vmem:[%s256 + $0x418] sm:%s249]
                %297 = vst [vmem:[%s257 + $0x98] sm:%s249] %v296
                %v298 = vld [vmem:[%s256 + $0x420] sm:%s249]
                %299 = vst [vmem:[%s257 + $0xa0] sm:%s249] %v298
                %v300 = vld [vmem:[%s256 + $0x428] sm:%s249]
                %301 = vst [vmem:[%s257 + $0xa8] sm:%s249] %v300
                %v302 = vld [vmem:[%s256 + $0x430] sm:%s249]
                %303 = vst [vmem:[%s257 + $0xb0] sm:%s249] %v302
                %v304 = vld [vmem:[%s256 + $0x438] sm:%s249]
                %305 = vst [vmem:[%s257 + $0xb8] sm:%s249] %v304
                %v306 = vld [vmem:[%s256 + $0x440] sm:%s249]
                %307 = vst [vmem:[%s257 + $0xc0] sm:%s249] %v306
                %v308 = vld [vmem:[%s256 + $0x448] sm:%s249]
                %309 = vst [vmem:[%s257 + $0xc8] sm:%s249] %v308
                %v310 = vld [vmem:[%s256 + $0x450] sm:%s249]
                %311 = vst [vmem:[%s257 + $0xd0] sm:%s249] %v310
                %v312 = vld [vmem:[%s256 + $0x458] sm:%s249]
                %313 = vst [vmem:[%s257 + $0xd8] sm:%s249] %v312
                %v314 = vld [vmem:[%s256 + $0x460] sm:%s249]
                %315 = vst [vmem:[%s257 + $0xe0] sm:%s249] %v314
                %v316 = vld [vmem:[%s256 + $0x468] sm:%s249]
                %317 = vst [vmem:[%s257 + $0xe8] sm:%s249] %v316
                %v318 = vld [vmem:[%s256 + $0x470] sm:%s249]
                %319 = vst [vmem:[%s257 + $0xf0] sm:%s249] %v318
                %v320 = vld [vmem:[%s256 + $0x478] sm:%s249]
                %321 = vst [vmem:[%s257 + $0xf8] sm:%s249] %v320
                %v322 = vld [vmem:[%s256 + $0x800] sm:%s249]
                %323 = vst [vmem:[%s257 + $0x100] sm:%s249] %v322
                %v324 = vld [vmem:[%s256 + $0x808] sm:%s249]
                %325 = vst [vmem:[%s257 + $0x108] sm:%s249] %v324
                %v326 = vld [vmem:[%s256 + $0x810] sm:%s249]
                %327 = vst [vmem:[%s257 + $0x110] sm:%s249] %v326
                %v328 = vld [vmem:[%s256 + $0x818] sm:%s249]
                %329 = vst [vmem:[%s257 + $0x118] sm:%s249] %v328
                %v330 = vld [vmem:[%s256 + $0x820] sm:%s249]
                %331 = vst [vmem:[%s257 + $0x120] sm:%s249] %v330
                %v332 = vld [vmem:[%s256 + $0x828] sm:%s249]
                %333 = vst [vmem:[%s257 + $0x128] sm:%s249] %v332
                %v334 = vld [vmem:[%s256 + $0x830] sm:%s249]
                %335 = vst [vmem:[%s257 + $0x130] sm:%s249] %v334
                %v336 = vld [vmem:[%s256 + $0x838] sm:%s249]
                %337 = vst [vmem:[%s257 + $0x138] sm:%s249] %v336
                %v338 = vld [vmem:[%s256 + $0x840] sm:%s249]
                %339 = vst [vmem:[%s257 + $0x140] sm:%s249] %v338
                %v340 = vld [vmem:[%s256 + $0x848] sm:%s249]
                %341 = vst [vmem:[%s257 + $0x148] sm:%s249] %v340
                %v342 = vld [vmem:[%s256 + $0x850] sm:%s249]
                %343 = vst [vmem:[%s257 + $0x150] sm:%s249] %v342
                %v344 = vld [vmem:[%s256 + $0x858] sm:%s249]
                %345 = vst [vmem:[%s257 + $0x158] sm:%s249] %v344
                %v346 = vld [vmem:[%s256 + $0x860] sm:%s249]
                %347 = vst [vmem:[%s257 + $0x160] sm:%s249] %v346
                %v348 = vld [vmem:[%s256 + $0x868] sm:%s249]
                %349 = vst [vmem:[%s257 + $0x168] sm:%s249] %v348
                %v350 = vld [vmem:[%s256 + $0x870] sm:%s249]
                %351 = vst [vmem:[%s257 + $0x170] sm:%s249] %v350
                %v352 = vld [vmem:[%s256 + $0x878] sm:%s249]
                %353 = vst [vmem:[%s257 + $0x178] sm:%s249] %v352
                %v354 = vld [vmem:[%s256 + $0xc00] sm:%s249]
                %355 = vst [vmem:[%s257 + $0x180] sm:%s249] %v354
                %v356 = vld [vmem:[%s256 + $0xc08] sm:%s249]
                %357 = vst [vmem:[%s257 + $0x188] sm:%s249] %v356
                %v358 = vld [vmem:[%s256 + $0xc10] sm:%s249]
                %359 = vst [vmem:[%s257 + $0x190] sm:%s249] %v358
                %v360 = vld [vmem:[%s256 + $0xc18] sm:%s249]
                %361 = vst [vmem:[%s257 + $0x198] sm:%s249] %v360
                %v362 = vld [vmem:[%s256 + $0xc20] sm:%s249]
                %363 = vst [vmem:[%s257 + $0x1a0] sm:%s249] %v362
                %v364 = vld [vmem:[%s256 + $0xc28] sm:%s249]
                %365 = vst [vmem:[%s257 + $0x1a8] sm:%s249] %v364
                %v366 = vld [vmem:[%s256 + $0xc30] sm:%s249]
                %367 = vst [vmem:[%s257 + $0x1b0] sm:%s249] %v366
                %v368 = vld [vmem:[%s256 + $0xc38] sm:%s249]
                %369 = vst [vmem:[%s257 + $0x1b8] sm:%s249] %v368
                %v370 = vld [vmem:[%s256 + $0xc40] sm:%s249]
                %371 = vst [vmem:[%s257 + $0x1c0] sm:%s249] %v370
                %v372 = vld [vmem:[%s256 + $0xc48] sm:%s249]
                %373 = vst [vmem:[%s257 + $0x1c8] sm:%s249] %v372
                %v374 = vld [vmem:[%s256 + $0xc50] sm:%s249]
                %375 = vst [vmem:[%s257 + $0x1d0] sm:%s249] %v374
                %v376 = vld [vmem:[%s256 + $0xc58] sm:%s249]
                %377 = vst [vmem:[%s257 + $0x1d8] sm:%s249] %v376
                %v378 = vld [vmem:[%s256 + $0xc60] sm:%s249]
                %379 = vst [vmem:[%s257 + $0x1e0] sm:%s249] %v378
                %v380 = vld [vmem:[%s256 + $0xc68] sm:%s249]
                %381 = vst [vmem:[%s257 + $0x1e8] sm:%s249] %v380
                %v382 = vld [vmem:[%s256 + $0xc70] sm:%s249]
                %383 = vst [vmem:[%s257 + $0x1f0] sm:%s249] %v382
                %v384 = vld [vmem:[%s256 + $0xc78] sm:%s249]
                %385 = vst [vmem:[%s257 + $0x1f8] sm:%s249] %v384
              $region61: #{attention_aggregation.1} parent=55 // loop_footer
                %s255 = sadd.s32 1, %s251
              $region62: #{attention_aggregation.1} parent=55 // loop_footer_branch
                %250 = sbr.rel target = $region58
              $region63: #{attention_aggregation.1} parent=55 // loop_exit
                _
            $region56: #{attention_aggregation.1} parent=47 // pred_fallthru
              _
          $region48: #{attention_aggregation.1} parent=43 // pred_fallthru
            _
          %526 = vnop
        $region44: #{attention_aggregation.1} parent=39 // pred_fallthru
          _
      $region40: #{attention_aggregation.1} parent=5 // pred_fallthru
        _
      %p527 = scmp.le.s32.totalorder 1, %s16
      %p528 = scmp.lt.s32.totalorder %s16, 9
      %p529 = pnand %p527, %p528
      %p530 = pneg %p529
      // Predicated region
      $region79: #{attention_aggregation.1} parent=5 // pred_check
        _
      $region80: #{attention_aggregation.1} parent=5 // pred_check_branch
        %532 = sbr.rel (%p529) target = $region82
      $region81: #{attention_aggregation.1} parent=5 // pred_region
        %s533 = ssub.s32 %s16, 1
        %s534 = sand.u32 %s29, 1
        %s535 = sand.u32 %s29, 1
        %s536 = smul.addr %s535, 512
        %s537 = scalar_lea.vmem [#allocation2], %s536
        // Predicated region
        $region83: #{attention_aggregation.1} parent=81 // pred_check
          %p538 = pneg %p42
        $region84: #{attention_aggregation.1} parent=81 // pred_check_branch
          %540 = sbr.rel (%p538) target = $region86
        $region85: #{attention_aggregation.1} parent=81 // pred_region
          _
        $region86: #{attention_aggregation.1} parent=81 // pred_fallthru
          _
        %s541 = sand.u32 %s29, 1
        %s542 = sand.u32 %s29, 1
        %s543 = smul.addr %s542, 512
        %s544 = scalar_lea.vmem [#allocation2], %s543
        %p545 = pneg %p42
        %p546 = pneg %p39
        %p547 = pneg %p63
        %p548 = pneg %p60
        %p549 = pneg %p84
        %p550 = pneg %p81
        %p551 = pneg %p105
        %p552 = pneg %p102
        %p553 = pneg %p126
        %p554 = pneg %p123
        %p555 = pneg %p147
        %p556 = pneg %p144
        %p557 = pneg %p168
        %p558 = pneg %p165
        %p559 = pneg %p194
        %p560 = pneg %p191
        %s561 = sand.u32 %s181, 1
        %s562 = scalar_lea.sflag [#allocation4], %s561
        %s563 = sand.u32 %s181, 1
        %s564 = smul.addr %s563, 256
        %s565 = scalar_lea.vmem [#allocation3], %s564
        %s566 = smul.u32 16, %s21
        %s567 = smul.u32 16, %s21
        %v569 = vld [vmem:[%s537] sm:$0xff]
        %v570 = vld [vmem:[%s537 + $0x8] sm:$0xff]
        %v571 = vld [vmem:[%s537 + $0x10] sm:$0xff]
        %v572 = vld [vmem:[%s537 + $0x18] sm:$0xff]
        %v573 = vld [vmem:[%s537 + $0x20] sm:$0xff]
        %v574 = vld [vmem:[%s537 + $0x28] sm:$0xff]
        %v575 = vld [vmem:[%s537 + $0x30] sm:$0xff]
        %v576 = vld [vmem:[%s537 + $0x38] sm:$0xff]
        %v577 = vld [vmem:[%s537 + $0x40] sm:$0xff]
        %v578 = vld [vmem:[%s537 + $0x48] sm:$0xff]
        %v579 = vld [vmem:[%s537 + $0x50] sm:$0xff]
        %v580 = vld [vmem:[%s537 + $0x58] sm:$0xff]
        %v581 = vld [vmem:[%s537 + $0x60] sm:$0xff]
        %v582 = vld [vmem:[%s537 + $0x68] sm:$0xff]
        %v583 = vld [vmem:[%s537 + $0x70] sm:$0xff]
        %v584 = vld [vmem:[%s537 + $0x78] sm:$0xff]
        %v585 = vld [vmem:[%s537 + $0x80] sm:$0xff]
        %v586 = vld [vmem:[%s537 + $0x88] sm:$0xff]
        %v587 = vld [vmem:[%s537 + $0x90] sm:$0xff]
        %v588 = vld [vmem:[%s537 + $0x98] sm:$0xff]
        %v589 = vld [vmem:[%s537 + $0xa0] sm:$0xff]
        %v590 = vld [vmem:[%s537 + $0xa8] sm:$0xff]
        %v591 = vld [vmem:[%s537 + $0xb0] sm:$0xff]
        %v592 = vld [vmem:[%s537 + $0xb8] sm:$0xff]
        %v593 = vld [vmem:[%s537 + $0xc0] sm:$0xff]
        %v594 = vld [vmem:[%s537 + $0xc8] sm:$0xff]
        %v595 = vld [vmem:[%s537 + $0xd0] sm:$0xff]
        %v596 = vld [vmem:[%s537 + $0xd8] sm:$0xff]
        %v597 = vld [vmem:[%s537 + $0xe0] sm:$0xff]
        %v598 = vld [vmem:[%s537 + $0xe8] sm:$0xff]
        %v599 = vld [vmem:[%s537 + $0xf0] sm:$0xff]
        %v600 = vld [vmem:[%s537 + $0xf8] sm:$0xff]
        %v601 = vld [vmem:[%s537 + $0x100] sm:$0xff]
        %v602 = vld [vmem:[%s537 + $0x108] sm:$0xff]
        %v603 = vld [vmem:[%s537 + $0x110] sm:$0xff]
        %v604 = vld [vmem:[%s537 + $0x118] sm:$0xff]
        %v605 = vld [vmem:[%s537 + $0x120] sm:$0xff]
        %v606 = vld [vmem:[%s537 + $0x128] sm:$0xff]
        %v607 = vld [vmem:[%s537 + $0x130] sm:$0xff]
        %v608 = vld [vmem:[%s537 + $0x138] sm:$0xff]
        %v609 = vld [vmem:[%s537 + $0x140] sm:$0xff]
        %v610 = vld [vmem:[%s537 + $0x148] sm:$0xff]
        %v611 = vld [vmem:[%s537 + $0x150] sm:$0xff]
        %v612 = vld [vmem:[%s537 + $0x158] sm:$0xff]
        %v613 = vld [vmem:[%s537 + $0x160] sm:$0xff]
        %v614 = vld [vmem:[%s537 + $0x168] sm:$0xff]
        %v615 = vld [vmem:[%s537 + $0x170] sm:$0xff]
        %v616 = vld [vmem:[%s537 + $0x178] sm:$0xff]
        %v617 = vld [vmem:[%s537 + $0x180] sm:$0xff]
        %v618 = vld [vmem:[%s537 + $0x188] sm:$0xff]
        %v619 = vld [vmem:[%s537 + $0x190] sm:$0xff]
        %v620 = vld [vmem:[%s537 + $0x198] sm:$0xff]
        %v621 = vld [vmem:[%s537 + $0x1a0] sm:$0xff]
        %v622 = vld [vmem:[%s537 + $0x1a8] sm:$0xff]
        %v623 = vld [vmem:[%s537 + $0x1b0] sm:$0xff]
        %v624 = vld [vmem:[%s537 + $0x1b8] sm:$0xff]
        %v625 = vld [vmem:[%s537 + $0x1c0] sm:$0xff]
        %v626 = vld [vmem:[%s537 + $0x1c8] sm:$0xff]
        %v627 = vld [vmem:[%s537 + $0x1d0] sm:$0xff]
        %v628 = vld [vmem:[%s537 + $0x1d8] sm:$0xff]
        %v629 = vld [vmem:[%s537 + $0x1e0] sm:$0xff]
        %v630 = vld [vmem:[%s537 + $0x1e8] sm:$0xff]
        %v631 = vld [vmem:[%s537 + $0x1f0] sm:$0xff]
        %v632 = vld [vmem:[%s537 + $0x1f8] sm:$0xff]
        %v633 = vld [vmem:[%s1] sm:$0xff]
        %v634 = vld [vmem:[%s1 + $0x8] sm:$0xff]
        %v635 = vld [vmem:[%s1 + $0x10] sm:$0xff]
        %v636 = vld [vmem:[%s1 + $0x18] sm:$0xff]
        %v637 = vld [vmem:[%s1 + $0x20] sm:$0xff]
        %v638 = vld [vmem:[%s1 + $0x28] sm:$0xff]
        %v639 = vld [vmem:[%s1 + $0x30] sm:$0xff]
        %v640 = vld [vmem:[%s1 + $0x38] sm:$0xff]
        %v641 = vld [vmem:[%s1 + $0x40] sm:$0xff]
        %v642 = vld [vmem:[%s1 + $0x48] sm:$0xff]
        %v643 = vld [vmem:[%s1 + $0x50] sm:$0xff]
        %v644 = vld [vmem:[%s1 + $0x58] sm:$0xff]
        %v645 = vld [vmem:[%s1 + $0x60] sm:$0xff]
        %v646 = vld [vmem:[%s1 + $0x68] sm:$0xff]
        %v647 = vld [vmem:[%s1 + $0x70] sm:$0xff]
        %v648 = vld [vmem:[%s1 + $0x78] sm:$0xff]
        %v649 = vld [vmem:[%s1 + $0x80] sm:$0xff]
        %v650 = vld [vmem:[%s1 + $0x88] sm:$0xff]
        %v651 = vld [vmem:[%s1 + $0x90] sm:$0xff]
        %v652 = vld [vmem:[%s1 + $0x98] sm:$0xff]
        %v653 = vld [vmem:[%s1 + $0xa0] sm:$0xff]
        %v654 = vld [vmem:[%s1 + $0xa8] sm:$0xff]
        %v655 = vld [vmem:[%s1 + $0xb0] sm:$0xff]
        %v656 = vld [vmem:[%s1 + $0xb8] sm:$0xff]
        %v657 = vld [vmem:[%s1 + $0xc0] sm:$0xff]
        %v658 = vld [vmem:[%s1 + $0xc8] sm:$0xff]
        %v659 = vld [vmem:[%s1 + $0xd0] sm:$0xff]
        %v660 = vld [vmem:[%s1 + $0xd8] sm:$0xff]
        %v661 = vld [vmem:[%s1 + $0xe0] sm:$0xff]
        %v662 = vld [vmem:[%s1 + $0xe8] sm:$0xff]
        %v663 = vld [vmem:[%s1 + $0xf0] sm:$0xff]
        %v664 = vld [vmem:[%s1 + $0xf8] sm:$0xff]
        %v665 = vld [vmem:[%s2] sm:$0x3]
        %v667 = vlaneseq
        %v668 = vshrl.u32 %v667, 7
        %v669 = vsub.s32 0, %v668
        %v670 = vrot.slane %v665, %v669
        %v671 = vlaneseq
        %v672 = vshrl.u32 %v671, 7
        %v673 = vsub.s32 1, %v672
        %v674 = vrot.slane %v665, %v673
        %v741 = vunpack.c.l.b16 %v569
        %v742 = vunpack.c.h.b16 %v569
        %v743 = vunpack.c.l.b16 %v570
        %v744 = vunpack.c.h.b16 %v570
        %v745 = vunpack.c.l.b16 %v571
        %v746 = vunpack.c.h.b16 %v571
        %v747 = vunpack.c.l.b16 %v572
        %v748 = vunpack.c.h.b16 %v572
        %v749 = vunpack.c.l.b16 %v573
        %v750 = vunpack.c.h.b16 %v573
        %v751 = vunpack.c.l.b16 %v574
        %v752 = vunpack.c.h.b16 %v574
        %v753 = vunpack.c.l.b16 %v575
        %v754 = vunpack.c.h.b16 %v575
        %v755 = vunpack.c.l.b16 %v576
        %v756 = vunpack.c.h.b16 %v576
        %v757 = vunpack.c.l.b16 %v577
        %v758 = vunpack.c.h.b16 %v577
        %v759 = vunpack.c.l.b16 %v578
        %v760 = vunpack.c.h.b16 %v578
        %v761 = vunpack.c.l.b16 %v579
        %v762 = vunpack.c.h.b16 %v579
        %v763 = vunpack.c.l.b16 %v580
        %v764 = vunpack.c.h.b16 %v580
        %v765 = vunpack.c.l.b16 %v581
        %v766 = vunpack.c.h.b16 %v581
        %v767 = vunpack.c.l.b16 %v582
        %v768 = vunpack.c.h.b16 %v582
        %v769 = vunpack.c.l.b16 %v583
        %v770 = vunpack.c.h.b16 %v583
        %v771 = vunpack.c.l.b16 %v584
        %v772 = vunpack.c.h.b16 %v584
        %v773 = vunpack.c.l.b16 %v585
        %v774 = vunpack.c.h.b16 %v585
        %v775 = vunpack.c.l.b16 %v586
        %v776 = vunpack.c.h.b16 %v586
        %v777 = vunpack.c.l.b16 %v587
        %v778 = vunpack.c.h.b16 %v587
        %v779 = vunpack.c.l.b16 %v588
        %v780 = vunpack.c.h.b16 %v588
        %v781 = vunpack.c.l.b16 %v589
        %v782 = vunpack.c.h.b16 %v589
        %v783 = vunpack.c.l.b16 %v590
        %v784 = vunpack.c.h.b16 %v590
        %v785 = vunpack.c.l.b16 %v591
        %v786 = vunpack.c.h.b16 %v591
        %v787 = vunpack.c.l.b16 %v592
        %v788 = vunpack.c.h.b16 %v592
        %v789 = vunpack.c.l.b16 %v593
        %v790 = vunpack.c.h.b16 %v593
        %v791 = vunpack.c.l.b16 %v594
        %v792 = vunpack.c.h.b16 %v594
        %v793 = vunpack.c.l.b16 %v595
        %v794 = vunpack.c.h.b16 %v595
        %v795 = vunpack.c.l.b16 %v596
        %v796 = vunpack.c.h.b16 %v596
        %v797 = vunpack.c.l.b16 %v597
        %v798 = vunpack.c.h.b16 %v597
        %v799 = vunpack.c.l.b16 %v598
        %v800 = vunpack.c.h.b16 %v598
        %v801 = vunpack.c.l.b16 %v599
        %v802 = vunpack.c.h.b16 %v599
        %v803 = vunpack.c.l.b16 %v600
        %v804 = vunpack.c.h.b16 %v600
        %v805 = vunpack.c.l.b16 %v601
        %v806 = vunpack.c.h.b16 %v601
        %v807 = vunpack.c.l.b16 %v602
        %v808 = vunpack.c.h.b16 %v602
        %v809 = vunpack.c.l.b16 %v603
        %v810 = vunpack.c.h.b16 %v603
        %v811 = vunpack.c.l.b16 %v604
        %v812 = vunpack.c.h.b16 %v604
        %v813 = vunpack.c.l.b16 %v605
        %v814 = vunpack.c.h.b16 %v605
        %v815 = vunpack.c.l.b16 %v606
        %v816 = vunpack.c.h.b16 %v606
        %v817 = vunpack.c.l.b16 %v607
        %v818 = vunpack.c.h.b16 %v607
        %v819 = vunpack.c.l.b16 %v608
        %v820 = vunpack.c.h.b16 %v608
        %v821 = vunpack.c.l.b16 %v609
        %v822 = vunpack.c.h.b16 %v609
        %v823 = vunpack.c.l.b16 %v610
        %v824 = vunpack.c.h.b16 %v610
        %v825 = vunpack.c.l.b16 %v611
        %v826 = vunpack.c.h.b16 %v611
        %v827 = vunpack.c.l.b16 %v612
        %v828 = vunpack.c.h.b16 %v612
        %v829 = vunpack.c.l.b16 %v613
        %v830 = vunpack.c.h.b16 %v613
        %v831 = vunpack.c.l.b16 %v614
        %v832 = vunpack.c.h.b16 %v614
        %v833 = vunpack.c.l.b16 %v615
        %v834 = vunpack.c.h.b16 %v615
        %v835 = vunpack.c.l.b16 %v616
        %v836 = vunpack.c.h.b16 %v616
        %v837 = vunpack.c.l.b16 %v617
        %v838 = vunpack.c.h.b16 %v617
        %v839 = vunpack.c.l.b16 %v618
        %v840 = vunpack.c.h.b16 %v618
        %v841 = vunpack.c.l.b16 %v619
        %v842 = vunpack.c.h.b16 %v619
        %v843 = vunpack.c.l.b16 %v620
        %v844 = vunpack.c.h.b16 %v620
        %v845 = vunpack.c.l.b16 %v621
        %v846 = vunpack.c.h.b16 %v621
        %v847 = vunpack.c.l.b16 %v622
        %v848 = vunpack.c.h.b16 %v622
        %v849 = vunpack.c.l.b16 %v623
        %v850 = vunpack.c.h.b16 %v623
        %v851 = vunpack.c.l.b16 %v624
        %v852 = vunpack.c.h.b16 %v624
        %v853 = vunpack.c.l.b16 %v625
        %v854 = vunpack.c.h.b16 %v625
        %v855 = vunpack.c.l.b16 %v626
        %v856 = vunpack.c.h.b16 %v626
        %v857 = vunpack.c.l.b16 %v627
        %v858 = vunpack.c.h.b16 %v627
        %v859 = vunpack.c.l.b16 %v628
        %v860 = vunpack.c.h.b16 %v628
        %v861 = vunpack.c.l.b16 %v629
        %v862 = vunpack.c.h.b16 %v629
        %v863 = vunpack.c.l.b16 %v630
        %v864 = vunpack.c.h.b16 %v630
        %v865 = vunpack.c.l.b16 %v631
        %v866 = vunpack.c.h.b16 %v631
        %v867 = vunpack.c.l.b16 %v632
        %v868 = vunpack.c.h.b16 %v632
        %v869 = vpack.c.b16 %v743, %v741
        %v870 = vpack.c.b16 %v744, %v742
        %v871 = vpack.c.b16 %v747, %v745
        %v872 = vpack.c.b16 %v748, %v746
        %v873 = vpack.c.b16 %v751, %v749
        %v874 = vpack.c.b16 %v752, %v750
        %v875 = vpack.c.b16 %v755, %v753
        %v876 = vpack.c.b16 %v756, %v754
        %v877 = vpack.c.b16 %v759, %v757
        %v878 = vpack.c.b16 %v760, %v758
        %v879 = vpack.c.b16 %v763, %v761
        %v880 = vpack.c.b16 %v764, %v762
        %v881 = vpack.c.b16 %v767, %v765
        %v882 = vpack.c.b16 %v768, %v766
        %v883 = vpack.c.b16 %v771, %v769
        %v884 = vpack.c.b16 %v772, %v770
        %v885 = vpack.c.b16 %v775, %v773
        %v886 = vpack.c.b16 %v776, %v774
        %v887 = vpack.c.b16 %v779, %v777
        %v888 = vpack.c.b16 %v780, %v778
        %v889 = vpack.c.b16 %v783, %v781
        %v890 = vpack.c.b16 %v784, %v782
        %v891 = vpack.c.b16 %v787, %v785
        %v892 = vpack.c.b16 %v788, %v786
        %v893 = vpack.c.b16 %v791, %v789
        %v894 = vpack.c.b16 %v792, %v790
        %v895 = vpack.c.b16 %v795, %v793
        %v896 = vpack.c.b16 %v796, %v794
        %v897 = vpack.c.b16 %v799, %v797
        %v898 = vpack.c.b16 %v800, %v798
        %v899 = vpack.c.b16 %v803, %v801
        %v900 = vpack.c.b16 %v804, %v802
        %v901 = vpack.c.b16 %v807, %v805
        %v902 = vpack.c.b16 %v808, %v806
        %v903 = vpack.c.b16 %v811, %v809
        %v904 = vpack.c.b16 %v812, %v810
        %v905 = vpack.c.b16 %v815, %v813
        %v906 = vpack.c.b16 %v816, %v814
        %v907 = vpack.c.b16 %v819, %v817
        %v908 = vpack.c.b16 %v820, %v818
        %v909 = vpack.c.b16 %v823, %v821
        %v910 = vpack.c.b16 %v824, %v822
        %v911 = vpack.c.b16 %v827, %v825
        %v912 = vpack.c.b16 %v828, %v826
        %v913 = vpack.c.b16 %v831, %v829
        %v914 = vpack.c.b16 %v832, %v830
        %v915 = vpack.c.b16 %v835, %v833
        %v916 = vpack.c.b16 %v836, %v834
        %v917 = vpack.c.b16 %v839, %v837
        %v918 = vpack.c.b16 %v840, %v838
        %v919 = vpack.c.b16 %v843, %v841
        %v920 = vpack.c.b16 %v844, %v842
        %v921 = vpack.c.b16 %v847, %v845
        %v922 = vpack.c.b16 %v848, %v846
        %v923 = vpack.c.b16 %v851, %v849
        %v924 = vpack.c.b16 %v852, %v850
        %v925 = vpack.c.b16 %v855, %v853
        %v926 = vpack.c.b16 %v856, %v854
        %v927 = vpack.c.b16 %v859, %v857
        %v928 = vpack.c.b16 %v860, %v858
        %v929 = vpack.c.b16 %v863, %v861
        %v930 = vpack.c.b16 %v864, %v862
        %v931 = vpack.c.b16 %v867, %v865
        %v932 = vpack.c.b16 %v868, %v866
        %v1029 = vunpack.c.l.b16 %v633
        %v1030 = vunpack.c.h.b16 %v633
        %v1031 = vunpack.c.l.b16 %v634
        %v1032 = vunpack.c.h.b16 %v634
        %v1033 = vunpack.c.l.b16 %v635
        %v1034 = vunpack.c.h.b16 %v635
        %v1035 = vunpack.c.l.b16 %v636
        %v1036 = vunpack.c.h.b16 %v636
        %v1037 = vunpack.c.l.b16 %v637
        %v1038 = vunpack.c.h.b16 %v637
        %v1039 = vunpack.c.l.b16 %v638
        %v1040 = vunpack.c.h.b16 %v638
        %v1041 = vunpack.c.l.b16 %v639
        %v1042 = vunpack.c.h.b16 %v639
        %v1043 = vunpack.c.l.b16 %v640
        %v1044 = vunpack.c.h.b16 %v640
        %v1045 = vunpack.c.l.b16 %v641
        %v1046 = vunpack.c.h.b16 %v641
        %v1047 = vunpack.c.l.b16 %v642
        %v1048 = vunpack.c.h.b16 %v642
        %v1049 = vunpack.c.l.b16 %v643
        %v1050 = vunpack.c.h.b16 %v643
        %v1051 = vunpack.c.l.b16 %v644
        %v1052 = vunpack.c.h.b16 %v644
        %v1053 = vunpack.c.l.b16 %v645
        %v1054 = vunpack.c.h.b16 %v645
        %v1055 = vunpack.c.l.b16 %v646
        %v1056 = vunpack.c.h.b16 %v646
        %v1057 = vunpack.c.l.b16 %v647
        %v1058 = vunpack.c.h.b16 %v647
        %v1059 = vunpack.c.l.b16 %v648
        %v1060 = vunpack.c.h.b16 %v648
        %v1061 = vunpack.c.l.b16 %v649
        %v1062 = vunpack.c.h.b16 %v649
        %v1063 = vunpack.c.l.b16 %v650
        %v1064 = vunpack.c.h.b16 %v650
        %v1065 = vunpack.c.l.b16 %v651
        %v1066 = vunpack.c.h.b16 %v651
        %v1067 = vunpack.c.l.b16 %v652
        %v1068 = vunpack.c.h.b16 %v652
        %v1069 = vunpack.c.l.b16 %v653
        %v1070 = vunpack.c.h.b16 %v653
        %v1071 = vunpack.c.l.b16 %v654
        %v1072 = vunpack.c.h.b16 %v654
        %v1073 = vunpack.c.l.b16 %v655
        %v1074 = vunpack.c.h.b16 %v655
        %v1075 = vunpack.c.l.b16 %v656
        %v1076 = vunpack.c.h.b16 %v656
        %v1077 = vunpack.c.l.b16 %v657
        %v1078 = vunpack.c.h.b16 %v657
        %v1079 = vunpack.c.l.b16 %v658
        %v1080 = vunpack.c.h.b16 %v658
        %v1081 = vunpack.c.l.b16 %v659
        %v1082 = vunpack.c.h.b16 %v659
        %v1083 = vunpack.c.l.b16 %v660
        %v1084 = vunpack.c.h.b16 %v660
        %v1085 = vunpack.c.l.b16 %v661
        %v1086 = vunpack.c.h.b16 %v661
        %v1087 = vunpack.c.l.b16 %v662
        %v1088 = vunpack.c.h.b16 %v662
        %v1089 = vunpack.c.l.b16 %v663
        %v1090 = vunpack.c.h.b16 %v663
        %v1091 = vunpack.c.l.b16 %v664
        %v1092 = vunpack.c.h.b16 %v664
        %v1093 = vpack.c.b16 %v1031, %v1029
        %v1094 = vpack.c.b16 %v1032, %v1030
        %v1095 = vpack.c.b16 %v1035, %v1033
        %v1096 = vpack.c.b16 %v1036, %v1034
        %v1097 = vpack.c.b16 %v1039, %v1037
        %v1098 = vpack.c.b16 %v1040, %v1038
        %v1099 = vpack.c.b16 %v1043, %v1041
        %v1100 = vpack.c.b16 %v1044, %v1042
        %v1101 = vpack.c.b16 %v1047, %v1045
        %v1102 = vpack.c.b16 %v1048, %v1046
        %v1103 = vpack.c.b16 %v1051, %v1049
        %v1104 = vpack.c.b16 %v1052, %v1050
        %v1105 = vpack.c.b16 %v1055, %v1053
        %v1106 = vpack.c.b16 %v1056, %v1054
        %v1107 = vpack.c.b16 %v1059, %v1057
        %v1108 = vpack.c.b16 %v1060, %v1058
        %v1109 = vpack.c.b16 %v1063, %v1061
        %v1110 = vpack.c.b16 %v1064, %v1062
        %v1111 = vpack.c.b16 %v1067, %v1065
        %v1112 = vpack.c.b16 %v1068, %v1066
        %v1113 = vpack.c.b16 %v1071, %v1069
        %v1114 = vpack.c.b16 %v1072, %v1070
        %v1115 = vpack.c.b16 %v1075, %v1073
        %v1116 = vpack.c.b16 %v1076, %v1074
        %v1117 = vpack.c.b16 %v1079, %v1077
        %v1118 = vpack.c.b16 %v1080, %v1078
        %v1119 = vpack.c.b16 %v1083, %v1081
        %v1120 = vpack.c.b16 %v1084, %v1082
        %v1121 = vpack.c.b16 %v1087, %v1085
        %v1122 = vpack.c.b16 %v1088, %v1086
        %v1123 = vpack.c.b16 %v1091, %v1089
        %v1124 = vpack.c.b16 %v1092, %v1090
        %1157 = vmatprep.subr.bf16.mxu0 %v1108
        %1158 = vmatpush1.bf16.msra.mxu0 %v1107
        %1159 = vmatprep.subr.bf16.mxu0 %v1106
        %1160 = vmatpush1.bf16.msra.mxu0 %v1105
        %1161 = vmatprep.subr.bf16.mxu0 %v1104
        %1162 = vmatpush1.bf16.msra.mxu0 %v1103
        %1163 = vmatprep.subr.bf16.mxu0 %v1102
        %1164 = vmatpush1.bf16.msra.mxu0 %v1101
        %1165 = vmatprep.subr.bf16.mxu0 %v1100
        %1166 = vmatpush1.bf16.msra.mxu0 %v1099
        %1167 = vmatprep.subr.bf16.mxu0 %v1098
        %1168 = vmatpush1.bf16.msra.mxu0 %v1097
        %1169 = vmatprep.subr.bf16.mxu0 %v1096
        %1170 = vmatpush1.bf16.msra.mxu0 %v1095
        %1171 = vmatprep.subr.bf16.mxu0 %v1094
        %1172 = vmatpush1.bf16.msra.mxu0 %v1093
        %1173 = vmatprep.subr.bf16.mxu0 %v1124
        %1174 = vmatpush2.bf16.msra.mxu0 %v1123
        %1175 = vmatprep.subr.bf16.mxu0 %v1122
        %1176 = vmatpush2.bf16.msra.mxu0 %v1121
        %1177 = vmatprep.subr.bf16.mxu0 %v1120
        %1178 = vmatpush2.bf16.msra.mxu0 %v1119
        %1179 = vmatprep.subr.bf16.mxu0 %v1118
        %1180 = vmatpush2.bf16.msra.mxu0 %v1117
        %1181 = vmatprep.subr.bf16.mxu0 %v1116
        %1182 = vmatpush2.bf16.msra.mxu0 %v1115
        %1183 = vmatprep.subr.bf16.mxu0 %v1114
        %1184 = vmatpush2.bf16.msra.mxu0 %v1113
        %1185 = vmatprep.subr.bf16.mxu0 %v1112
        %1186 = vmatpush2.bf16.msra.mxu0 %v1111
        %1187 = vmatprep.subr.bf16.mxu0 %v1110
        %1188 = vmatpush2.bf16.msra.mxu0 %v1109
        %1189 = vmatprep.mubr.bf16.mxu0 %v870
        %1190 = vmatmul.mubr.bf16.gmra.mxu0 %v869
        %v1191 = vpop.f32.mrf.mxu0
        %v1192 = vadd.f32 %v670, %v1191
        %v1193 = vpop.f32.mrf.mxu0
        %v1194 = vadd.f32 %v674, %v1193
        %v1195 = vpop.f32.mrf.mxu0
        %v1196 = vadd.f32 %v670, %v1195
        %v1197 = vpop.f32.mrf.mxu0
        %v1198 = vadd.f32 %v674, %v1197
        %1199 = vmatprep.mubr.bf16.mxu0 %v872
        %1200 = vmatmul.mubr.bf16.gmra.mxu0 %v871
        %v1201 = vpop.f32.mrf.mxu0
        %v1202 = vadd.f32 %v670, %v1201
        %v1203 = vpop.f32.mrf.mxu0
        %v1204 = vadd.f32 %v674, %v1203
        %v1205 = vpop.f32.mrf.mxu0
        %v1206 = vadd.f32 %v670, %v1205
        %v1207 = vpop.f32.mrf.mxu0
        %v1208 = vadd.f32 %v674, %v1207
        %1209 = vmatprep.mubr.bf16.mxu0 %v874
        %1210 = vmatmul.mubr.bf16.gmra.mxu0 %v873
        %v1211 = vpop.f32.mrf.mxu0
        %v1212 = vadd.f32 %v670, %v1211
        %v1213 = vpop.f32.mrf.mxu0
        %v1214 = vadd.f32 %v674, %v1213
        %v1215 = vpop.f32.mrf.mxu0
        %v1216 = vadd.f32 %v670, %v1215
        %v1217 = vpop.f32.mrf.mxu0
        %v1218 = vadd.f32 %v674, %v1217
        %1219 = vmatprep.mubr.bf16.mxu0 %v876
        %1220 = vmatmul.mubr.bf16.gmra.mxu0 %v875
        %v1221 = vpop.f32.mrf.mxu0
        %v1222 = vadd.f32 %v670, %v1221
        %v1223 = vpop.f32.mrf.mxu0
        %v1224 = vadd.f32 %v674, %v1223
        %v1225 = vpop.f32.mrf.mxu0
        %v1226 = vadd.f32 %v670, %v1225
        %v1227 = vpop.f32.mrf.mxu0
        %v1228 = vadd.f32 %v674, %v1227
        %1229 = vmatprep.mubr.bf16.mxu0 %v878
        %1230 = vmatmul.mubr.bf16.gmra.mxu0 %v877
        %v1231 = vpop.f32.mrf.mxu0
        %v1232 = vadd.f32 %v670, %v1231
        %v1233 = vpop.f32.mrf.mxu0
        %v1234 = vadd.f32 %v674, %v1233
        %v1235 = vpop.f32.mrf.mxu0
        %v1236 = vadd.f32 %v670, %v1235
        %v1237 = vpop.f32.mrf.mxu0
        %v1238 = vadd.f32 %v674, %v1237
        %1239 = vmatprep.mubr.bf16.mxu0 %v880
        %1240 = vmatmul.mubr.bf16.gmra.mxu0 %v879
        %v1241 = vpop.f32.mrf.mxu0
        %v1242 = vadd.f32 %v670, %v1241
        %v1243 = vpop.f32.mrf.mxu0
        %v1244 = vadd.f32 %v674, %v1243
        %v1245 = vpop.f32.mrf.mxu0
        %v1246 = vadd.f32 %v670, %v1245
        %v1247 = vpop.f32.mrf.mxu0
        %v1248 = vadd.f32 %v674, %v1247
        %1249 = vmatprep.mubr.bf16.mxu0 %v882
        %1250 = vmatmul.mubr.bf16.gmra.mxu0 %v881
        %v1251 = vpop.f32.mrf.mxu0
        %v1252 = vadd.f32 %v670, %v1251
        %v1253 = vpop.f32.mrf.mxu0
        %v1254 = vadd.f32 %v674, %v1253
        %v1255 = vpop.f32.mrf.mxu0
        %v1256 = vadd.f32 %v670, %v1255
        %v1257 = vpop.f32.mrf.mxu0
        %v1258 = vadd.f32 %v674, %v1257
        %1259 = vmatprep.mubr.bf16.mxu0 %v884
        %1260 = vmatmul.mubr.bf16.gmra.mxu0 %v883
        %v1261 = vpop.f32.mrf.mxu0
        %v1262 = vadd.f32 %v670, %v1261
        %v1263 = vpop.f32.mrf.mxu0
        %v1264 = vadd.f32 %v674, %v1263
        %v1265 = vpop.f32.mrf.mxu0
        %v1266 = vadd.f32 %v670, %v1265
        %v1267 = vpop.f32.mrf.mxu0
        %v1268 = vadd.f32 %v674, %v1267
        %1269 = vmatprep.mubr.bf16.mxu0 %v886
        %1270 = vmatmul.mubr.bf16.gmra.mxu0 %v885
        %v1271 = vpop.f32.mrf.mxu0
        %v1272 = vadd.f32 %v670, %v1271
        %v1273 = vpop.f32.mrf.mxu0
        %v1274 = vadd.f32 %v674, %v1273
        %v1275 = vpop.f32.mrf.mxu0
        %v1276 = vadd.f32 %v670, %v1275
        %v1277 = vpop.f32.mrf.mxu0
        %v1278 = vadd.f32 %v674, %v1277
        %1279 = vmatprep.mubr.bf16.mxu0 %v888
        %1280 = vmatmul.mubr.bf16.gmra.mxu0 %v887
        %v1281 = vpop.f32.mrf.mxu0
        %v1282 = vadd.f32 %v670, %v1281
        %v1283 = vpop.f32.mrf.mxu0
        %v1284 = vadd.f32 %v674, %v1283
        %v1285 = vpop.f32.mrf.mxu0
        %v1286 = vadd.f32 %v670, %v1285
        %v1287 = vpop.f32.mrf.mxu0
        %v1288 = vadd.f32 %v674, %v1287
        %1289 = vmatprep.mubr.bf16.mxu0 %v890
        %1290 = vmatmul.mubr.bf16.gmra.mxu0 %v889
        %v1291 = vpop.f32.mrf.mxu0
        %v1292 = vadd.f32 %v670, %v1291
        %v1293 = vpop.f32.mrf.mxu0
        %v1294 = vadd.f32 %v674, %v1293
        %v1295 = vpop.f32.mrf.mxu0
        %v1296 = vadd.f32 %v670, %v1295
        %v1297 = vpop.f32.mrf.mxu0
        %v1298 = vadd.f32 %v674, %v1297
        %1299 = vmatprep.mubr.bf16.mxu0 %v892
        %1300 = vmatmul.mubr.bf16.gmra.mxu0 %v891
        %v1301 = vpop.f32.mrf.mxu0
        %v1302 = vadd.f32 %v670, %v1301
        %v1303 = vpop.f32.mrf.mxu0
        %v1304 = vadd.f32 %v674, %v1303
        %v1305 = vpop.f32.mrf.mxu0
        %v1306 = vadd.f32 %v670, %v1305
        %v1307 = vpop.f32.mrf.mxu0
        %v1308 = vadd.f32 %v674, %v1307
        %1309 = vmatprep.mubr.bf16.mxu0 %v894
        %1310 = vmatmul.mubr.bf16.gmra.mxu0 %v893
        %v1311 = vpop.f32.mrf.mxu0
        %v1312 = vadd.f32 %v670, %v1311
        %v1313 = vpop.f32.mrf.mxu0
        %v1314 = vadd.f32 %v674, %v1313
        %v1315 = vpop.f32.mrf.mxu0
        %v1316 = vadd.f32 %v670, %v1315
        %v1317 = vpop.f32.mrf.mxu0
        %v1318 = vadd.f32 %v674, %v1317
        %1319 = vmatprep.mubr.bf16.mxu0 %v896
        %1320 = vmatmul.mubr.bf16.gmra.mxu0 %v895
        %v1321 = vpop.f32.mrf.mxu0
        %v1322 = vadd.f32 %v670, %v1321
        %v1323 = vpop.f32.mrf.mxu0
        %v1324 = vadd.f32 %v674, %v1323
        %v1325 = vpop.f32.mrf.mxu0
        %v1326 = vadd.f32 %v670, %v1325
        %v1327 = vpop.f32.mrf.mxu0
        %v1328 = vadd.f32 %v674, %v1327
        %1329 = vmatprep.mubr.bf16.mxu0 %v898
        %1330 = vmatmul.mubr.bf16.gmra.mxu0 %v897
        %v1331 = vpop.f32.mrf.mxu0
        %v1332 = vadd.f32 %v670, %v1331
        %v1333 = vpop.f32.mrf.mxu0
        %v1334 = vadd.f32 %v674, %v1333
        %v1335 = vpop.f32.mrf.mxu0
        %v1336 = vadd.f32 %v670, %v1335
        %v1337 = vpop.f32.mrf.mxu0
        %v1338 = vadd.f32 %v674, %v1337
        %1339 = vmatprep.mubr.bf16.mxu0 %v900
        %1340 = vmatmul.mubr.bf16.gmra.mxu0 %v899
        %v1341 = vpop.f32.mrf.mxu0
        %v1342 = vadd.f32 %v670, %v1341
        %v1343 = vpop.f32.mrf.mxu0
        %v1344 = vadd.f32 %v674, %v1343
        %v1345 = vpop.f32.mrf.mxu0
        %v1346 = vadd.f32 %v670, %v1345
        %v1347 = vpop.f32.mrf.mxu0
        %v1348 = vadd.f32 %v674, %v1347
        %1349 = vmatprep.mubr.bf16.mxu0 %v902
        %1350 = vmatmul.mubr.bf16.gmra.mxu0 %v901
        %v1351 = vpop.f32.mrf.mxu0
        %v1352 = vadd.f32 %v670, %v1351
        %v1353 = vpop.f32.mrf.mxu0
        %v1354 = vadd.f32 %v674, %v1353
        %v1355 = vpop.f32.mrf.mxu0
        %v1356 = vadd.f32 %v670, %v1355
        %v1357 = vpop.f32.mrf.mxu0
        %v1358 = vadd.f32 %v674, %v1357
        %1359 = vmatprep.mubr.bf16.mxu0 %v904
        %1360 = vmatmul.mubr.bf16.gmra.mxu0 %v903
        %v1361 = vpop.f32.mrf.mxu0
        %v1362 = vadd.f32 %v670, %v1361
        %v1363 = vpop.f32.mrf.mxu0
        %v1364 = vadd.f32 %v674, %v1363
        %v1365 = vpop.f32.mrf.mxu0
        %v1366 = vadd.f32 %v670, %v1365
        %v1367 = vpop.f32.mrf.mxu0
        %v1368 = vadd.f32 %v674, %v1367
        %1369 = vmatprep.mubr.bf16.mxu0 %v906
        %1370 = vmatmul.mubr.bf16.gmra.mxu0 %v905
        %v1371 = vpop.f32.mrf.mxu0
        %v1372 = vadd.f32 %v670, %v1371
        %v1373 = vpop.f32.mrf.mxu0
        %v1374 = vadd.f32 %v674, %v1373
        %v1375 = vpop.f32.mrf.mxu0
        %v1376 = vadd.f32 %v670, %v1375
        %v1377 = vpop.f32.mrf.mxu0
        %v1378 = vadd.f32 %v674, %v1377
        %1379 = vmatprep.mubr.bf16.mxu0 %v908
        %1380 = vmatmul.mubr.bf16.gmra.mxu0 %v907
        %v1381 = vpop.f32.mrf.mxu0
        %v1382 = vadd.f32 %v670, %v1381
        %v1383 = vpop.f32.mrf.mxu0
        %v1384 = vadd.f32 %v674, %v1383
        %v1385 = vpop.f32.mrf.mxu0
        %v1386 = vadd.f32 %v670, %v1385
        %v1387 = vpop.f32.mrf.mxu0
        %v1388 = vadd.f32 %v674, %v1387
        %1389 = vmatprep.mubr.bf16.mxu0 %v910
        %1390 = vmatmul.mubr.bf16.gmra.mxu0 %v909
        %v1391 = vpop.f32.mrf.mxu0
        %v1392 = vadd.f32 %v670, %v1391
        %v1393 = vpop.f32.mrf.mxu0
        %v1394 = vadd.f32 %v674, %v1393
        %v1395 = vpop.f32.mrf.mxu0
        %v1396 = vadd.f32 %v670, %v1395
        %v1397 = vpop.f32.mrf.mxu0
        %v1398 = vadd.f32 %v674, %v1397
        %1399 = vmatprep.mubr.bf16.mxu0 %v912
        %1400 = vmatmul.mubr.bf16.gmra.mxu0 %v911
        %v1401 = vpop.f32.mrf.mxu0
        %v1402 = vadd.f32 %v670, %v1401
        %v1403 = vpop.f32.mrf.mxu0
        %v1404 = vadd.f32 %v674, %v1403
        %v1405 = vpop.f32.mrf.mxu0
        %v1406 = vadd.f32 %v670, %v1405
        %v1407 = vpop.f32.mrf.mxu0
        %v1408 = vadd.f32 %v674, %v1407
        %1409 = vmatprep.mubr.bf16.mxu0 %v914
        %1410 = vmatmul.mubr.bf16.gmra.mxu0 %v913
        %v1411 = vpop.f32.mrf.mxu0
        %v1412 = vadd.f32 %v670, %v1411
        %v1413 = vpop.f32.mrf.mxu0
        %v1414 = vadd.f32 %v674, %v1413
        %v1415 = vpop.f32.mrf.mxu0
        %v1416 = vadd.f32 %v670, %v1415
        %v1417 = vpop.f32.mrf.mxu0
        %v1418 = vadd.f32 %v674, %v1417
        %1419 = vmatprep.mubr.bf16.mxu0 %v916
        %1420 = vmatmul.mubr.bf16.gmra.mxu0 %v915
        %v1421 = vpop.f32.mrf.mxu0
        %v1422 = vadd.f32 %v670, %v1421
        %v1423 = vpop.f32.mrf.mxu0
        %v1424 = vadd.f32 %v674, %v1423
        %v1425 = vpop.f32.mrf.mxu0
        %v1426 = vadd.f32 %v670, %v1425
        %v1427 = vpop.f32.mrf.mxu0
        %v1428 = vadd.f32 %v674, %v1427
        %1429 = vmatprep.mubr.bf16.mxu0 %v918
        %1430 = vmatmul.mubr.bf16.gmra.mxu0 %v917
        %v1431 = vpop.f32.mrf.mxu0
        %v1432 = vadd.f32 %v670, %v1431
        %v1433 = vpop.f32.mrf.mxu0
        %v1434 = vadd.f32 %v674, %v1433
        %v1435 = vpop.f32.mrf.mxu0
        %v1436 = vadd.f32 %v670, %v1435
        %v1437 = vpop.f32.mrf.mxu0
        %v1438 = vadd.f32 %v674, %v1437
        %1439 = vmatprep.mubr.bf16.mxu0 %v920
        %1440 = vmatmul.mubr.bf16.gmra.mxu0 %v919
        %v1441 = vpop.f32.mrf.mxu0
        %v1442 = vadd.f32 %v670, %v1441
        %v1443 = vpop.f32.mrf.mxu0
        %v1444 = vadd.f32 %v674, %v1443
        %v1445 = vpop.f32.mrf.mxu0
        %v1446 = vadd.f32 %v670, %v1445
        %v1447 = vpop.f32.mrf.mxu0
        %v1448 = vadd.f32 %v674, %v1447
        %1449 = vmatprep.mubr.bf16.mxu0 %v922
        %1450 = vmatmul.mubr.bf16.gmra.mxu0 %v921
        %v1451 = vpop.f32.mrf.mxu0
        %v1452 = vadd.f32 %v670, %v1451
        %v1453 = vpop.f32.mrf.mxu0
        %v1454 = vadd.f32 %v674, %v1453
        %v1455 = vpop.f32.mrf.mxu0
        %v1456 = vadd.f32 %v670, %v1455
        %v1457 = vpop.f32.mrf.mxu0
        %v1458 = vadd.f32 %v674, %v1457
        %1459 = vmatprep.mubr.bf16.mxu0 %v924
        %1460 = vmatmul.mubr.bf16.gmra.mxu0 %v923
        %v1461 = vpop.f32.mrf.mxu0
        %v1462 = vadd.f32 %v670, %v1461
        %v1463 = vpop.f32.mrf.mxu0
        %v1464 = vadd.f32 %v674, %v1463
        %v1465 = vpop.f32.mrf.mxu0
        %v1466 = vadd.f32 %v670, %v1465
        %v1467 = vpop.f32.mrf.mxu0
        %v1468 = vadd.f32 %v674, %v1467
        %1469 = vmatprep.mubr.bf16.mxu0 %v926
        %1470 = vmatmul.mubr.bf16.gmra.mxu0 %v925
        %v1471 = vpop.f32.mrf.mxu0
        %v1472 = vadd.f32 %v670, %v1471
        %v1473 = vpop.f32.mrf.mxu0
        %v1474 = vadd.f32 %v674, %v1473
        %v1475 = vpop.f32.mrf.mxu0
        %v1476 = vadd.f32 %v670, %v1475
        %v1477 = vpop.f32.mrf.mxu0
        %v1478 = vadd.f32 %v674, %v1477
        %1479 = vmatprep.mubr.bf16.mxu0 %v928
        %1480 = vmatmul.mubr.bf16.gmra.mxu0 %v927
        %v1481 = vpop.f32.mrf.mxu0
        %v1482 = vadd.f32 %v670, %v1481
        %v1483 = vpop.f32.mrf.mxu0
        %v1484 = vadd.f32 %v674, %v1483
        %v1485 = vpop.f32.mrf.mxu0
        %v1486 = vadd.f32 %v670, %v1485
        %v1487 = vpop.f32.mrf.mxu0
        %v1488 = vadd.f32 %v674, %v1487
        %1489 = vmatprep.mubr.bf16.mxu0 %v930
        %1490 = vmatmul.mubr.bf16.gmra.mxu0 %v929
        %v1491 = vpop.f32.mrf.mxu0
        %v1492 = vadd.f32 %v670, %v1491
        %v1493 = vpop.f32.mrf.mxu0
        %v1494 = vadd.f32 %v674, %v1493
        %v1495 = vpop.f32.mrf.mxu0
        %v1496 = vadd.f32 %v670, %v1495
        %v1497 = vpop.f32.mrf.mxu0
        %v1498 = vadd.f32 %v674, %v1497
        %1499 = vmatprep.mubr.bf16.mxu0 %v932
        %1500 = vmatmul.mubr.bf16.gmra.mxu0 %v931
        %v1501 = vpop.f32.mrf.mxu0
        %v1502 = vadd.f32 %v670, %v1501
        %v1503 = vpop.f32.mrf.mxu0
        %v1504 = vadd.f32 %v674, %v1503
        %v1505 = vpop.f32.mrf.mxu0
        %v1506 = vadd.f32 %v670, %v1505
        %v1507 = vpop.f32.mrf.mxu0
        %v1508 = vadd.f32 %v674, %v1507
        %1509 = vdwg.mxu0
        %v1510 = vmul.f32 %v1192, %v1194
        %v1511 = vmul.f32 %v1196, %v1198
        %v1512 = vmul.f32 %v1202, %v1204
        %v1513 = vmul.f32 %v1206, %v1208
        %v1514 = vmul.f32 %v1212, %v1214
        %v1515 = vmul.f32 %v1216, %v1218
        %v1516 = vmul.f32 %v1222, %v1224
        %v1517 = vmul.f32 %v1226, %v1228
        %v1518 = vmul.f32 %v1232, %v1234
        %v1519 = vmul.f32 %v1236, %v1238
        %v1520 = vmul.f32 %v1242, %v1244
        %v1521 = vmul.f32 %v1246, %v1248
        %v1522 = vmul.f32 %v1252, %v1254
        %v1523 = vmul.f32 %v1256, %v1258
        %v1524 = vmul.f32 %v1262, %v1264
        %v1525 = vmul.f32 %v1266, %v1268
        %v1526 = vmul.f32 %v1272, %v1274
        %v1527 = vmul.f32 %v1276, %v1278
        %v1528 = vmul.f32 %v1282, %v1284
        %v1529 = vmul.f32 %v1286, %v1288
        %v1530 = vmul.f32 %v1292, %v1294
        %v1531 = vmul.f32 %v1296, %v1298
        %v1532 = vmul.f32 %v1302, %v1304
        %v1533 = vmul.f32 %v1306, %v1308
        %v1534 = vmul.f32 %v1312, %v1314
        %v1535 = vmul.f32 %v1316, %v1318
        %v1536 = vmul.f32 %v1322, %v1324
        %v1537 = vmul.f32 %v1326, %v1328
        %v1538 = vmul.f32 %v1332, %v1334
        %v1539 = vmul.f32 %v1336, %v1338
        %v1540 = vmul.f32 %v1342, %v1344
        %v1541 = vmul.f32 %v1346, %v1348
        %v1542 = vmul.f32 %v1352, %v1354
        %v1543 = vmul.f32 %v1356, %v1358
        %v1544 = vmul.f32 %v1362, %v1364
        %v1545 = vmul.f32 %v1366, %v1368
        %v1546 = vmul.f32 %v1372, %v1374
        %v1547 = vmul.f32 %v1376, %v1378
        %v1548 = vmul.f32 %v1382, %v1384
        %v1549 = vmul.f32 %v1386, %v1388
        %v1550 = vmul.f32 %v1392, %v1394
        %v1551 = vmul.f32 %v1396, %v1398
        %v1552 = vmul.f32 %v1402, %v1404
        %v1553 = vmul.f32 %v1406, %v1408
        %v1554 = vmul.f32 %v1412, %v1414
        %v1555 = vmul.f32 %v1416, %v1418
        %v1556 = vmul.f32 %v1422, %v1424
        %v1557 = vmul.f32 %v1426, %v1428
        %v1558 = vmul.f32 %v1432, %v1434
        %v1559 = vmul.f32 %v1436, %v1438
        %v1560 = vmul.f32 %v1442, %v1444
        %v1561 = vmul.f32 %v1446, %v1448
        %v1562 = vmul.f32 %v1452, %v1454
        %v1563 = vmul.f32 %v1456, %v1458
        %v1564 = vmul.f32 %v1462, %v1464
        %v1565 = vmul.f32 %v1466, %v1468
        %v1566 = vmul.f32 %v1472, %v1474
        %v1567 = vmul.f32 %v1476, %v1478
        %v1568 = vmul.f32 %v1482, %v1484
        %v1569 = vmul.f32 %v1486, %v1488
        %v1570 = vmul.f32 %v1492, %v1494
        %v1571 = vmul.f32 %v1496, %v1498
        %v1572 = vmul.f32 %v1502, %v1504
        %v1573 = vmul.f32 %v1506, %v1508
        %v1574 = vmul.f32 %v1510, 0.088388346
        %v1575 = vmul.f32 %v1511, 0.088388346
        %v1576 = vmul.f32 %v1512, 0.088388346
        %v1577 = vmul.f32 %v1513, 0.088388346
        %v1578 = vmul.f32 %v1514, 0.088388346
        %v1579 = vmul.f32 %v1515, 0.088388346
        %v1580 = vmul.f32 %v1516, 0.088388346
        %v1581 = vmul.f32 %v1517, 0.088388346
        %v1582 = vmul.f32 %v1518, 0.088388346
        %v1583 = vmul.f32 %v1519, 0.088388346
        %v1584 = vmul.f32 %v1520, 0.088388346
        %v1585 = vmul.f32 %v1521, 0.088388346
        %v1586 = vmul.f32 %v1522, 0.088388346
        %v1587 = vmul.f32 %v1523, 0.088388346
        %v1588 = vmul.f32 %v1524, 0.088388346
        %v1589 = vmul.f32 %v1525, 0.088388346
        %v1590 = vmul.f32 %v1526, 0.088388346
        %v1591 = vmul.f32 %v1527, 0.088388346
        %v1592 = vmul.f32 %v1528, 0.088388346
        %v1593 = vmul.f32 %v1529, 0.088388346
        %v1594 = vmul.f32 %v1530, 0.088388346
        %v1595 = vmul.f32 %v1531, 0.088388346
        %v1596 = vmul.f32 %v1532, 0.088388346
        %v1597 = vmul.f32 %v1533, 0.088388346
        %v1598 = vmul.f32 %v1534, 0.088388346
        %v1599 = vmul.f32 %v1535, 0.088388346
        %v1600 = vmul.f32 %v1536, 0.088388346
        %v1601 = vmul.f32 %v1537, 0.088388346
        %v1602 = vmul.f32 %v1538, 0.088388346
        %v1603 = vmul.f32 %v1539, 0.088388346
        %v1604 = vmul.f32 %v1540, 0.088388346
        %v1605 = vmul.f32 %v1541, 0.088388346
        %v1606 = vmul.f32 %v1542, 0.088388346
        %v1607 = vmul.f32 %v1543, 0.088388346
        %v1608 = vmul.f32 %v1544, 0.088388346
        %v1609 = vmul.f32 %v1545, 0.088388346
        %v1610 = vmul.f32 %v1546, 0.088388346
        %v1611 = vmul.f32 %v1547, 0.088388346
        %v1612 = vmul.f32 %v1548, 0.088388346
        %v1613 = vmul.f32 %v1549, 0.088388346
        %v1614 = vmul.f32 %v1550, 0.088388346
        %v1615 = vmul.f32 %v1551, 0.088388346
        %v1616 = vmul.f32 %v1552, 0.088388346
        %v1617 = vmul.f32 %v1553, 0.088388346
        %v1618 = vmul.f32 %v1554, 0.088388346
        %v1619 = vmul.f32 %v1555, 0.088388346
        %v1620 = vmul.f32 %v1556, 0.088388346
        %v1621 = vmul.f32 %v1557, 0.088388346
        %v1622 = vmul.f32 %v1558, 0.088388346
        %v1623 = vmul.f32 %v1559, 0.088388346
        %v1624 = vmul.f32 %v1560, 0.088388346
        %v1625 = vmul.f32 %v1561, 0.088388346
        %v1626 = vmul.f32 %v1562, 0.088388346
        %v1627 = vmul.f32 %v1563, 0.088388346
        %v1628 = vmul.f32 %v1564, 0.088388346
        %v1629 = vmul.f32 %v1565, 0.088388346
        %v1630 = vmul.f32 %v1566, 0.088388346
        %v1631 = vmul.f32 %v1567, 0.088388346
        %v1632 = vmul.f32 %v1568, 0.088388346
        %v1633 = vmul.f32 %v1569, 0.088388346
        %v1634 = vmul.f32 %v1570, 0.088388346
        %v1635 = vmul.f32 %v1571, 0.088388346
        %v1636 = vmul.f32 %v1572, 0.088388346
        %v1637 = vmul.f32 %v1573, 0.088388346
        %v1638 = vmax.f32 %v1574, %v1590
        %v1639 = vmax.f32 %v1575, %v1591
        %v1640 = vmax.f32 %v1576, %v1592
        %v1641 = vmax.f32 %v1577, %v1593
        %v1642 = vmax.f32 %v1578, %v1594
        %v1643 = vmax.f32 %v1579, %v1595
        %v1644 = vmax.f32 %v1580, %v1596
        %v1645 = vmax.f32 %v1581, %v1597
        %v1646 = vmax.f32 %v1582, %v1598
        %v1647 = vmax.f32 %v1583, %v1599
        %v1648 = vmax.f32 %v1584, %v1600
        %v1649 = vmax.f32 %v1585, %v1601
        %v1650 = vmax.f32 %v1586, %v1602
        %v1651 = vmax.f32 %v1587, %v1603
        %v1652 = vmax.f32 %v1588, %v1604
        %v1653 = vmax.f32 %v1589, %v1605
        %v1654 = vmax.f32 %v1638, %v1606
        %v1655 = vmax.f32 %v1639, %v1607
        %v1656 = vmax.f32 %v1640, %v1608
        %v1657 = vmax.f32 %v1641, %v1609
        %v1658 = vmax.f32 %v1642, %v1610
        %v1659 = vmax.f32 %v1643, %v1611
        %v1660 = vmax.f32 %v1644, %v1612
        %v1661 = vmax.f32 %v1645, %v1613
        %v1662 = vmax.f32 %v1646, %v1614
        %v1663 = vmax.f32 %v1647, %v1615
        %v1664 = vmax.f32 %v1648, %v1616
        %v1665 = vmax.f32 %v1649, %v1617
        %v1666 = vmax.f32 %v1650, %v1618
        %v1667 = vmax.f32 %v1651, %v1619
        %v1668 = vmax.f32 %v1652, %v1620
        %v1669 = vmax.f32 %v1653, %v1621
        %v1670 = vmax.f32 %v1654, %v1622
        %v1671 = vmax.f32 %v1655, %v1623
        %v1672 = vmax.f32 %v1656, %v1624
        %v1673 = vmax.f32 %v1657, %v1625
        %v1674 = vmax.f32 %v1658, %v1626
        %v1675 = vmax.f32 %v1659, %v1627
        %v1676 = vmax.f32 %v1660, %v1628
        %v1677 = vmax.f32 %v1661, %v1629
        %v1678 = vmax.f32 %v1662, %v1630
        %v1679 = vmax.f32 %v1663, %v1631
        %v1680 = vmax.f32 %v1664, %v1632
        %v1681 = vmax.f32 %v1665, %v1633
        %v1682 = vmax.f32 %v1666, %v1634
        %v1683 = vmax.f32 %v1667, %v1635
        %v1684 = vmax.f32 %v1668, %v1636
        %v1685 = vmax.f32 %v1669, %v1637
        %v1686 = vsub.f32 %v1574, %v1670
        %v1687 = vsub.f32 %v1575, %v1671
        %v1688 = vsub.f32 %v1576, %v1672
        %v1689 = vsub.f32 %v1577, %v1673
        %v1690 = vsub.f32 %v1578, %v1674
        %v1691 = vsub.f32 %v1579, %v1675
        %v1692 = vsub.f32 %v1580, %v1676
        %v1693 = vsub.f32 %v1581, %v1677
        %v1694 = vsub.f32 %v1582, %v1678
        %v1695 = vsub.f32 %v1583, %v1679
        %v1696 = vsub.f32 %v1584, %v1680
        %v1697 = vsub.f32 %v1585, %v1681
        %v1698 = vsub.f32 %v1586, %v1682
        %v1699 = vsub.f32 %v1587, %v1683
        %v1700 = vsub.f32 %v1588, %v1684
        %v1701 = vsub.f32 %v1589, %v1685
        %v1702 = vmul.f32 %v1686, 1.442695
        %v1703 = vpow.pop %v1702
        %v1704 = vmul.f32 %v1687, 1.442695
        %v1705 = vpow.pop %v1704
        %v1706 = vmul.f32 %v1688, 1.442695
        %v1707 = vpow.pop %v1706
        %v1708 = vmul.f32 %v1689, 1.442695
        %v1709 = vpow.pop %v1708
        %v1710 = vmul.f32 %v1690, 1.442695
        %v1711 = vpow.pop %v1710
        %v1712 = vmul.f32 %v1691, 1.442695
        %v1713 = vpow.pop %v1712
        %v1714 = vmul.f32 %v1692, 1.442695
        %v1715 = vpow.pop %v1714
        %v1716 = vmul.f32 %v1693, 1.442695
        %v1717 = vpow.pop %v1716
        %v1718 = vmul.f32 %v1694, 1.442695
        %v1719 = vpow.pop %v1718
        %v1720 = vmul.f32 %v1695, 1.442695
        %v1721 = vpow.pop %v1720
        %v1722 = vmul.f32 %v1696, 1.442695
        %v1723 = vpow.pop %v1722
        %v1724 = vmul.f32 %v1697, 1.442695
        %v1725 = vpow.pop %v1724
        %v1726 = vmul.f32 %v1698, 1.442695
        %v1727 = vpow.pop %v1726
        %v1728 = vmul.f32 %v1699, 1.442695
        %v1729 = vpow.pop %v1728
        %v1730 = vmul.f32 %v1700, 1.442695
        %v1731 = vpow.pop %v1730
        %v1732 = vmul.f32 %v1701, 1.442695
        %v1733 = vpow.pop %v1732
        %v1734 = vsub.f32 %v1590, %v1670
        %v1735 = vsub.f32 %v1591, %v1671
        %v1736 = vsub.f32 %v1592, %v1672
        %v1737 = vsub.f32 %v1593, %v1673
        %v1738 = vsub.f32 %v1594, %v1674
        %v1739 = vsub.f32 %v1595, %v1675
        %v1740 = vsub.f32 %v1596, %v1676
        %v1741 = vsub.f32 %v1597, %v1677
        %v1742 = vsub.f32 %v1598, %v1678
        %v1743 = vsub.f32 %v1599, %v1679
        %v1744 = vsub.f32 %v1600, %v1680
        %v1745 = vsub.f32 %v1601, %v1681
        %v1746 = vsub.f32 %v1602, %v1682
        %v1747 = vsub.f32 %v1603, %v1683
        %v1748 = vsub.f32 %v1604, %v1684
        %v1749 = vsub.f32 %v1605, %v1685
        %v1750 = vmul.f32 %v1734, 1.442695
        %v1751 = vpow.pop %v1750
        %v1752 = vmul.f32 %v1735, 1.442695
        %v1753 = vpow.pop %v1752
        %v1754 = vmul.f32 %v1736, 1.442695
        %v1755 = vpow.pop %v1754
        %v1756 = vmul.f32 %v1737, 1.442695
        %v1757 = vpow.pop %v1756
        %v1758 = vmul.f32 %v1738, 1.442695
        %v1759 = vpow.pop %v1758
        %v1760 = vmul.f32 %v1739, 1.442695
        %v1761 = vpow.pop %v1760
        %v1762 = vmul.f32 %v1740, 1.442695
        %v1763 = vpow.pop %v1762
        %v1764 = vmul.f32 %v1741, 1.442695
        %v1765 = vpow.pop %v1764
        %v1766 = vmul.f32 %v1742, 1.442695
        %v1767 = vpow.pop %v1766
        %v1768 = vmul.f32 %v1743, 1.442695
        %v1769 = vpow.pop %v1768
        %v1770 = vmul.f32 %v1744, 1.442695
        %v1771 = vpow.pop %v1770
        %v1772 = vmul.f32 %v1745, 1.442695
        %v1773 = vpow.pop %v1772
        %v1774 = vmul.f32 %v1746, 1.442695
        %v1775 = vpow.pop %v1774
        %v1776 = vmul.f32 %v1747, 1.442695
        %v1777 = vpow.pop %v1776
        %v1778 = vmul.f32 %v1748, 1.442695
        %v1779 = vpow.pop %v1778
        %v1780 = vmul.f32 %v1749, 1.442695
        %v1781 = vpow.pop %v1780
        %v1782 = vadd.f32 %v1703, %v1751
        %v1783 = vadd.f32 %v1705, %v1753
        %v1784 = vadd.f32 %v1707, %v1755
        %v1785 = vadd.f32 %v1709, %v1757
        %v1786 = vadd.f32 %v1711, %v1759
        %v1787 = vadd.f32 %v1713, %v1761
        %v1788 = vadd.f32 %v1715, %v1763
        %v1789 = vadd.f32 %v1717, %v1765
        %v1790 = vadd.f32 %v1719, %v1767
        %v1791 = vadd.f32 %v1721, %v1769
        %v1792 = vadd.f32 %v1723, %v1771
        %v1793 = vadd.f32 %v1725, %v1773
        %v1794 = vadd.f32 %v1727, %v1775
        %v1795 = vadd.f32 %v1729, %v1777
        %v1796 = vadd.f32 %v1731, %v1779
        %v1797 = vadd.f32 %v1733, %v1781
        %v1798 = vsub.f32 %v1606, %v1670
        %v1799 = vsub.f32 %v1607, %v1671
        %v1800 = vsub.f32 %v1608, %v1672
        %v1801 = vsub.f32 %v1609, %v1673
        %v1802 = vsub.f32 %v1610, %v1674
        %v1803 = vsub.f32 %v1611, %v1675
        %v1804 = vsub.f32 %v1612, %v1676
        %v1805 = vsub.f32 %v1613, %v1677
        %v1806 = vsub.f32 %v1614, %v1678
        %v1807 = vsub.f32 %v1615, %v1679
        %v1808 = vsub.f32 %v1616, %v1680
        %v1809 = vsub.f32 %v1617, %v1681
        %v1810 = vsub.f32 %v1618, %v1682
        %v1811 = vsub.f32 %v1619, %v1683
        %v1812 = vsub.f32 %v1620, %v1684
        %v1813 = vsub.f32 %v1621, %v1685
        %v1814 = vmul.f32 %v1798, 1.442695
        %v1815 = vpow.pop %v1814
        %v1816 = vmul.f32 %v1799, 1.442695
        %v1817 = vpow.pop %v1816
        %v1818 = vmul.f32 %v1800, 1.442695
        %v1819 = vpow.pop %v1818
        %v1820 = vmul.f32 %v1801, 1.442695
        %v1821 = vpow.pop %v1820
        %v1822 = vmul.f32 %v1802, 1.442695
        %v1823 = vpow.pop %v1822
        %v1824 = vmul.f32 %v1803, 1.442695
        %v1825 = vpow.pop %v1824
        %v1826 = vmul.f32 %v1804, 1.442695
        %v1827 = vpow.pop %v1826
        %v1828 = vmul.f32 %v1805, 1.442695
        %v1829 = vpow.pop %v1828
        %v1830 = vmul.f32 %v1806, 1.442695
        %v1831 = vpow.pop %v1830
        %v1832 = vmul.f32 %v1807, 1.442695
        %v1833 = vpow.pop %v1832
        %v1834 = vmul.f32 %v1808, 1.442695
        %v1835 = vpow.pop %v1834
        %v1836 = vmul.f32 %v1809, 1.442695
        %v1837 = vpow.pop %v1836
        %v1838 = vmul.f32 %v1810, 1.442695
        %v1839 = vpow.pop %v1838
        %v1840 = vmul.f32 %v1811, 1.442695
        %v1841 = vpow.pop %v1840
        %v1842 = vmul.f32 %v1812, 1.442695
        %v1843 = vpow.pop %v1842
        %v1844 = vmul.f32 %v1813, 1.442695
        %v1845 = vpow.pop %v1844
        %v1846 = vadd.f32 %v1782, %v1815
        %v1847 = vadd.f32 %v1783, %v1817
        %v1848 = vadd.f32 %v1784, %v1819
        %v1849 = vadd.f32 %v1785, %v1821
        %v1850 = vadd.f32 %v1786, %v1823
        %v1851 = vadd.f32 %v1787, %v1825
        %v1852 = vadd.f32 %v1788, %v1827
        %v1853 = vadd.f32 %v1789, %v1829
        %v1854 = vadd.f32 %v1790, %v1831
        %v1855 = vadd.f32 %v1791, %v1833
        %v1856 = vadd.f32 %v1792, %v1835
        %v1857 = vadd.f32 %v1793, %v1837
        %v1858 = vadd.f32 %v1794, %v1839
        %v1859 = vadd.f32 %v1795, %v1841
        %v1860 = vadd.f32 %v1796, %v1843
        %v1861 = vadd.f32 %v1797, %v1845
        %v1862 = vsub.f32 %v1622, %v1670
        %v1863 = vsub.f32 %v1623, %v1671
        %v1864 = vsub.f32 %v1624, %v1672
        %v1865 = vsub.f32 %v1625, %v1673
        %v1866 = vsub.f32 %v1626, %v1674
        %v1867 = vsub.f32 %v1627, %v1675
        %v1868 = vsub.f32 %v1628, %v1676
        %v1869 = vsub.f32 %v1629, %v1677
        %v1870 = vsub.f32 %v1630, %v1678
        %v1871 = vsub.f32 %v1631, %v1679
        %v1872 = vsub.f32 %v1632, %v1680
        %v1873 = vsub.f32 %v1633, %v1681
        %v1874 = vsub.f32 %v1634, %v1682
        %v1875 = vsub.f32 %v1635, %v1683
        %v1876 = vsub.f32 %v1636, %v1684
        %v1877 = vsub.f32 %v1637, %v1685
        %v1878 = vmul.f32 %v1862, 1.442695
        %v1879 = vpow.pop %v1878
        %v1880 = vmul.f32 %v1863, 1.442695
        %v1881 = vpow.pop %v1880
        %v1882 = vmul.f32 %v1864, 1.442695
        %v1883 = vpow.pop %v1882
        %v1884 = vmul.f32 %v1865, 1.442695
        %v1885 = vpow.pop %v1884
        %v1886 = vmul.f32 %v1866, 1.442695
        %v1887 = vpow.pop %v1886
        %v1888 = vmul.f32 %v1867, 1.442695
        %v1889 = vpow.pop %v1888
        %v1890 = vmul.f32 %v1868, 1.442695
        %v1891 = vpow.pop %v1890
        %v1892 = vmul.f32 %v1869, 1.442695
        %v1893 = vpow.pop %v1892
        %v1894 = vmul.f32 %v1870, 1.442695
        %v1895 = vpow.pop %v1894
        %v1896 = vmul.f32 %v1871, 1.442695
        %v1897 = vpow.pop %v1896
        %v1898 = vmul.f32 %v1872, 1.442695
        %v1899 = vpow.pop %v1898
        %v1900 = vmul.f32 %v1873, 1.442695
        %v1901 = vpow.pop %v1900
        %v1902 = vmul.f32 %v1874, 1.442695
        %v1903 = vpow.pop %v1902
        %v1904 = vmul.f32 %v1875, 1.442695
        %v1905 = vpow.pop %v1904
        %v1906 = vmul.f32 %v1876, 1.442695
        %v1907 = vpow.pop %v1906
        %v1908 = vmul.f32 %v1877, 1.442695
        %v1909 = vpow.pop %v1908
        %v1910 = vadd.f32 %v1846, %v1879
        %v1911 = vadd.f32 %v1847, %v1881
        %v1912 = vadd.f32 %v1848, %v1883
        %v1913 = vadd.f32 %v1849, %v1885
        %v1914 = vadd.f32 %v1850, %v1887
        %v1915 = vadd.f32 %v1851, %v1889
        %v1916 = vadd.f32 %v1852, %v1891
        %v1917 = vadd.f32 %v1853, %v1893
        %v1918 = vadd.f32 %v1854, %v1895
        %v1919 = vadd.f32 %v1855, %v1897
        %v1920 = vadd.f32 %v1856, %v1899
        %v1921 = vadd.f32 %v1857, %v1901
        %v1922 = vadd.f32 %v1858, %v1903
        %v1923 = vadd.f32 %v1859, %v1905
        %v1924 = vadd.f32 %v1860, %v1907
        %v1925 = vadd.f32 %v1861, %v1909
        %v1926 = vrcp.pop %v1910
        %v1927 = vrcp.pop %v1911
        %v1928 = vrcp.pop %v1912
        %v1929 = vrcp.pop %v1913
        %v1930 = vrcp.pop %v1914
        %v1931 = vrcp.pop %v1915
        %v1932 = vrcp.pop %v1916
        %v1933 = vrcp.pop %v1917
        %v1934 = vrcp.pop %v1918
        %v1935 = vrcp.pop %v1919
        %v1936 = vrcp.pop %v1920
        %v1937 = vrcp.pop %v1921
        %v1938 = vrcp.pop %v1922
        %v1939 = vrcp.pop %v1923
        %v1940 = vrcp.pop %v1924
        %v1941 = vrcp.pop %v1925
        %v1942 = vmul.f32 %v1703, %v1926
        %v1943 = vmul.f32 %v1705, %v1927
        %v1944 = vmul.f32 %v1707, %v1928
        %v1945 = vmul.f32 %v1709, %v1929
        %v1946 = vmul.f32 %v1711, %v1930
        %v1947 = vmul.f32 %v1713, %v1931
        %v1948 = vmul.f32 %v1715, %v1932
        %v1949 = vmul.f32 %v1717, %v1933
        %v1950 = vmul.f32 %v1719, %v1934
        %v1951 = vmul.f32 %v1721, %v1935
        %v1952 = vmul.f32 %v1723, %v1936
        %v1953 = vmul.f32 %v1725, %v1937
        %v1954 = vmul.f32 %v1727, %v1938
        %v1955 = vmul.f32 %v1729, %v1939
        %v1956 = vmul.f32 %v1731, %v1940
        %v1957 = vmul.f32 %v1733, %v1941
        %1958 = vadd.xlane.f32.xlu0 %v1942
        %v1959 = vpop.xlane.xlu0 %1958
        %1960 = vadd.xlane.f32.xlu0 %v1943
        %v1961 = vpop.xlane.xlu0 %1960
        %1962 = vadd.xlane.f32.xlu0 %v1944
        %v1963 = vpop.xlane.xlu0 %1962
        %1964 = vadd.xlane.f32.xlu0 %v1945
        %v1965 = vpop.xlane.xlu0 %1964
        %1966 = vadd.xlane.f32.xlu0 %v1946
        %v1967 = vpop.xlane.xlu0 %1966
        %1968 = vadd.xlane.f32.xlu0 %v1947
        %v1969 = vpop.xlane.xlu0 %1968
        %1970 = vadd.xlane.f32.xlu0 %v1948
        %v1971 = vpop.xlane.xlu0 %1970
        %1972 = vadd.xlane.f32.xlu0 %v1949
        %v1973 = vpop.xlane.xlu0 %1972
        %1974 = vadd.xlane.f32.xlu0 %v1950
        %v1975 = vpop.xlane.xlu0 %1974
        %1976 = vadd.xlane.f32.xlu0 %v1951
        %v1977 = vpop.xlane.xlu0 %1976
        %1978 = vadd.xlane.f32.xlu0 %v1952
        %v1979 = vpop.xlane.xlu0 %1978
        %1980 = vadd.xlane.f32.xlu0 %v1953
        %v1981 = vpop.xlane.xlu0 %1980
        %1982 = vadd.xlane.f32.xlu0 %v1954
        %v1983 = vpop.xlane.xlu0 %1982
        %1984 = vadd.xlane.f32.xlu0 %v1955
        %v1985 = vpop.xlane.xlu0 %1984
        %1986 = vadd.xlane.f32.xlu0 %v1956
        %v1987 = vpop.xlane.xlu0 %1986
        %1988 = vadd.xlane.f32.xlu0 %v1957
        %v1989 = vpop.xlane.xlu0 %1988
        %v1990 = vld [vmem:[%s537] sm:$0xff]
        %v1991 = vld [vmem:[%s537 + $0x8] sm:$0xff]
        %v1992 = vld [vmem:[%s537 + $0x10] sm:$0xff]
        %v1993 = vld [vmem:[%s537 + $0x18] sm:$0xff]
        %v1994 = vld [vmem:[%s537 + $0x20] sm:$0xff]
        %v1995 = vld [vmem:[%s537 + $0x28] sm:$0xff]
        %v1996 = vld [vmem:[%s537 + $0x30] sm:$0xff]
        %v1997 = vld [vmem:[%s537 + $0x38] sm:$0xff]
        %v1998 = vld [vmem:[%s537 + $0x40] sm:$0xff]
        %v1999 = vld [vmem:[%s537 + $0x48] sm:$0xff]
        %v2000 = vld [vmem:[%s537 + $0x50] sm:$0xff]
        %v2001 = vld [vmem:[%s537 + $0x58] sm:$0xff]
        %v2002 = vld [vmem:[%s537 + $0x60] sm:$0xff]
        %v2003 = vld [vmem:[%s537 + $0x68] sm:$0xff]
        %v2004 = vld [vmem:[%s537 + $0x70] sm:$0xff]
        %v2005 = vld [vmem:[%s537 + $0x78] sm:$0xff]
        %v2006 = vunpack.c.l.bf16 %v1990
        %v2007 = vunpack.c.h.bf16 %v1990
        %v2008 = vunpack.c.l.bf16 %v1991
        %v2009 = vunpack.c.h.bf16 %v1991
        %v2010 = vunpack.c.l.bf16 %v1992
        %v2011 = vunpack.c.h.bf16 %v1992
        %v2012 = vunpack.c.l.bf16 %v1993
        %v2013 = vunpack.c.h.bf16 %v1993
        %v2014 = vunpack.c.l.bf16 %v1994
        %v2015 = vunpack.c.h.bf16 %v1994
        %v2016 = vunpack.c.l.bf16 %v1995
        %v2017 = vunpack.c.h.bf16 %v1995
        %v2018 = vunpack.c.l.bf16 %v1996
        %v2019 = vunpack.c.h.bf16 %v1996
        %v2020 = vunpack.c.l.bf16 %v1997
        %v2021 = vunpack.c.h.bf16 %v1997
        %v2022 = vunpack.c.l.bf16 %v1998
        %v2023 = vunpack.c.h.bf16 %v1998
        %v2024 = vunpack.c.l.bf16 %v1999
        %v2025 = vunpack.c.h.bf16 %v1999
        %v2026 = vunpack.c.l.bf16 %v2000
        %v2027 = vunpack.c.h.bf16 %v2000
        %v2028 = vunpack.c.l.bf16 %v2001
        %v2029 = vunpack.c.h.bf16 %v2001
        %v2030 = vunpack.c.l.bf16 %v2002
        %v2031 = vunpack.c.h.bf16 %v2002
        %v2032 = vunpack.c.l.bf16 %v2003
        %v2033 = vunpack.c.h.bf16 %v2003
        %v2034 = vunpack.c.l.bf16 %v2004
        %v2035 = vunpack.c.h.bf16 %v2004
        %v2036 = vunpack.c.l.bf16 %v2005
        %v2037 = vunpack.c.h.bf16 %v2005
        %v2038 = vmul.f32 %v1959, %v2006
        %v2039 = vmul.f32 %v1959, %v2007
        %v2040 = vmul.f32 %v1961, %v2008
        %v2041 = vmul.f32 %v1961, %v2009
        %v2042 = vmul.f32 %v1963, %v2010
        %v2043 = vmul.f32 %v1963, %v2011
        %v2044 = vmul.f32 %v1965, %v2012
        %v2045 = vmul.f32 %v1965, %v2013
        %v2046 = vmul.f32 %v1967, %v2014
        %v2047 = vmul.f32 %v1967, %v2015
        %v2048 = vmul.f32 %v1969, %v2016
        %v2049 = vmul.f32 %v1969, %v2017
        %v2050 = vmul.f32 %v1971, %v2018
        %v2051 = vmul.f32 %v1971, %v2019
        %v2052 = vmul.f32 %v1973, %v2020
        %v2053 = vmul.f32 %v1973, %v2021
        %v2054 = vmul.f32 %v1975, %v2022
        %v2055 = vmul.f32 %v1975, %v2023
        %v2056 = vmul.f32 %v1977, %v2024
        %v2057 = vmul.f32 %v1977, %v2025
        %v2058 = vmul.f32 %v1979, %v2026
        %v2059 = vmul.f32 %v1979, %v2027
        %v2060 = vmul.f32 %v1981, %v2028
        %v2061 = vmul.f32 %v1981, %v2029
        %v2062 = vmul.f32 %v1983, %v2030
        %v2063 = vmul.f32 %v1983, %v2031
        %v2064 = vmul.f32 %v1985, %v2032
        %v2065 = vmul.f32 %v1985, %v2033
        %v2066 = vmul.f32 %v1987, %v2034
        %v2067 = vmul.f32 %v1987, %v2035
        %v2068 = vmul.f32 %v1989, %v2036
        %v2069 = vmul.f32 %v1989, %v2037
        %v2070 = vmul.f32 %v1751, %v1926
        %v2071 = vmul.f32 %v1753, %v1927
        %v2072 = vmul.f32 %v1755, %v1928
        %v2073 = vmul.f32 %v1757, %v1929
        %v2074 = vmul.f32 %v1759, %v1930
        %v2075 = vmul.f32 %v1761, %v1931
        %v2076 = vmul.f32 %v1763, %v1932
        %v2077 = vmul.f32 %v1765, %v1933
        %v2078 = vmul.f32 %v1767, %v1934
        %v2079 = vmul.f32 %v1769, %v1935
        %v2080 = vmul.f32 %v1771, %v1936
        %v2081 = vmul.f32 %v1773, %v1937
        %v2082 = vmul.f32 %v1775, %v1938
        %v2083 = vmul.f32 %v1777, %v1939
        %v2084 = vmul.f32 %v1779, %v1940
        %v2085 = vmul.f32 %v1781, %v1941
        %2086 = vadd.xlane.f32.xlu0 %v2070
        %v2087 = vpop.xlane.xlu0 %2086
        %2088 = vadd.xlane.f32.xlu0 %v2071
        %v2089 = vpop.xlane.xlu0 %2088
        %2090 = vadd.xlane.f32.xlu0 %v2072
        %v2091 = vpop.xlane.xlu0 %2090
        %2092 = vadd.xlane.f32.xlu0 %v2073
        %v2093 = vpop.xlane.xlu0 %2092
        %2094 = vadd.xlane.f32.xlu0 %v2074
        %v2095 = vpop.xlane.xlu0 %2094
        %2096 = vadd.xlane.f32.xlu0 %v2075
        %v2097 = vpop.xlane.xlu0 %2096
        %2098 = vadd.xlane.f32.xlu0 %v2076
        %v2099 = vpop.xlane.xlu0 %2098
        %2100 = vadd.xlane.f32.xlu0 %v2077
        %v2101 = vpop.xlane.xlu0 %2100
        %2102 = vadd.xlane.f32.xlu0 %v2078
        %v2103 = vpop.xlane.xlu0 %2102
        %2104 = vadd.xlane.f32.xlu0 %v2079
        %v2105 = vpop.xlane.xlu0 %2104
        %2106 = vadd.xlane.f32.xlu0 %v2080
        %v2107 = vpop.xlane.xlu0 %2106
        %2108 = vadd.xlane.f32.xlu0 %v2081
        %v2109 = vpop.xlane.xlu0 %2108
        %2110 = vadd.xlane.f32.xlu0 %v2082
        %v2111 = vpop.xlane.xlu0 %2110
        %2112 = vadd.xlane.f32.xlu0 %v2083
        %v2113 = vpop.xlane.xlu0 %2112
        %2114 = vadd.xlane.f32.xlu0 %v2084
        %v2115 = vpop.xlane.xlu0 %2114
        %2116 = vadd.xlane.f32.xlu0 %v2085
        %v2117 = vpop.xlane.xlu0 %2116
        %s2118 = scalar_lea.vmem %s537, 128 [#allocation2]
        %v2119 = vld [vmem:[%s2118] sm:$0xff]
        %v2120 = vld [vmem:[%s2118 + $0x8] sm:$0xff]
        %v2121 = vld [vmem:[%s2118 + $0x10] sm:$0xff]
        %v2122 = vld [vmem:[%s2118 + $0x18] sm:$0xff]
        %v2123 = vld [vmem:[%s2118 + $0x20] sm:$0xff]
        %v2124 = vld [vmem:[%s2118 + $0x28] sm:$0xff]
        %v2125 = vld [vmem:[%s2118 + $0x30] sm:$0xff]
        %v2126 = vld [vmem:[%s2118 + $0x38] sm:$0xff]
        %v2127 = vld [vmem:[%s2118 + $0x40] sm:$0xff]
        %v2128 = vld [vmem:[%s2118 + $0x48] sm:$0xff]
        %v2129 = vld [vmem:[%s2118 + $0x50] sm:$0xff]
        %v2130 = vld [vmem:[%s2118 + $0x58] sm:$0xff]
        %v2131 = vld [vmem:[%s2118 + $0x60] sm:$0xff]
        %v2132 = vld [vmem:[%s2118 + $0x68] sm:$0xff]
        %v2133 = vld [vmem:[%s2118 + $0x70] sm:$0xff]
        %v2134 = vld [vmem:[%s2118 + $0x78] sm:$0xff]
        %v2135 = vunpack.c.l.bf16 %v2119
        %v2136 = vunpack.c.h.bf16 %v2119
        %v2137 = vunpack.c.l.bf16 %v2120
        %v2138 = vunpack.c.h.bf16 %v2120
        %v2139 = vunpack.c.l.bf16 %v2121
        %v2140 = vunpack.c.h.bf16 %v2121
        %v2141 = vunpack.c.l.bf16 %v2122
        %v2142 = vunpack.c.h.bf16 %v2122
        %v2143 = vunpack.c.l.bf16 %v2123
        %v2144 = vunpack.c.h.bf16 %v2123
        %v2145 = vunpack.c.l.bf16 %v2124
        %v2146 = vunpack.c.h.bf16 %v2124
        %v2147 = vunpack.c.l.bf16 %v2125
        %v2148 = vunpack.c.h.bf16 %v2125
        %v2149 = vunpack.c.l.bf16 %v2126
        %v2150 = vunpack.c.h.bf16 %v2126
        %v2151 = vunpack.c.l.bf16 %v2127
        %v2152 = vunpack.c.h.bf16 %v2127
        %v2153 = vunpack.c.l.bf16 %v2128
        %v2154 = vunpack.c.h.bf16 %v2128
        %v2155 = vunpack.c.l.bf16 %v2129
        %v2156 = vunpack.c.h.bf16 %v2129
        %v2157 = vunpack.c.l.bf16 %v2130
        %v2158 = vunpack.c.h.bf16 %v2130
        %v2159 = vunpack.c.l.bf16 %v2131
        %v2160 = vunpack.c.h.bf16 %v2131
        %v2161 = vunpack.c.l.bf16 %v2132
        %v2162 = vunpack.c.h.bf16 %v2132
        %v2163 = vunpack.c.l.bf16 %v2133
        %v2164 = vunpack.c.h.bf16 %v2133
        %v2165 = vunpack.c.l.bf16 %v2134
        %v2166 = vunpack.c.h.bf16 %v2134
        %v2167 = vmul.f32 %v2087, %v2135
        %v2168 = vmul.f32 %v2087, %v2136
        %v2169 = vmul.f32 %v2089, %v2137
        %v2170 = vmul.f32 %v2089, %v2138
        %v2171 = vmul.f32 %v2091, %v2139
        %v2172 = vmul.f32 %v2091, %v2140
        %v2173 = vmul.f32 %v2093, %v2141
        %v2174 = vmul.f32 %v2093, %v2142
        %v2175 = vmul.f32 %v2095, %v2143
        %v2176 = vmul.f32 %v2095, %v2144
        %v2177 = vmul.f32 %v2097, %v2145
        %v2178 = vmul.f32 %v2097, %v2146
        %v2179 = vmul.f32 %v2099, %v2147
        %v2180 = vmul.f32 %v2099, %v2148
        %v2181 = vmul.f32 %v2101, %v2149
        %v2182 = vmul.f32 %v2101, %v2150
        %v2183 = vmul.f32 %v2103, %v2151
        %v2184 = vmul.f32 %v2103, %v2152
        %v2185 = vmul.f32 %v2105, %v2153
        %v2186 = vmul.f32 %v2105, %v2154
        %v2187 = vmul.f32 %v2107, %v2155
        %v2188 = vmul.f32 %v2107, %v2156
        %v2189 = vmul.f32 %v2109, %v2157
        %v2190 = vmul.f32 %v2109, %v2158
        %v2191 = vmul.f32 %v2111, %v2159
        %v2192 = vmul.f32 %v2111, %v2160
        %v2193 = vmul.f32 %v2113, %v2161
        %v2194 = vmul.f32 %v2113, %v2162
        %v2195 = vmul.f32 %v2115, %v2163
        %v2196 = vmul.f32 %v2115, %v2164
        %v2197 = vmul.f32 %v2117, %v2165
        %v2198 = vmul.f32 %v2117, %v2166
        %v2199 = vadd.f32 %v2038, %v2167
        %v2200 = vadd.f32 %v2039, %v2168
        %v2201 = vadd.f32 %v2040, %v2169
        %v2202 = vadd.f32 %v2041, %v2170
        %v2203 = vadd.f32 %v2042, %v2171
        %v2204 = vadd.f32 %v2043, %v2172
        %v2205 = vadd.f32 %v2044, %v2173
        %v2206 = vadd.f32 %v2045, %v2174
        %v2207 = vadd.f32 %v2046, %v2175
        %v2208 = vadd.f32 %v2047, %v2176
        %v2209 = vadd.f32 %v2048, %v2177
        %v2210 = vadd.f32 %v2049, %v2178
        %v2211 = vadd.f32 %v2050, %v2179
        %v2212 = vadd.f32 %v2051, %v2180
        %v2213 = vadd.f32 %v2052, %v2181
        %v2214 = vadd.f32 %v2053, %v2182
        %v2215 = vadd.f32 %v2054, %v2183
        %v2216 = vadd.f32 %v2055, %v2184
        %v2217 = vadd.f32 %v2056, %v2185
        %v2218 = vadd.f32 %v2057, %v2186
        %v2219 = vadd.f32 %v2058, %v2187
        %v2220 = vadd.f32 %v2059, %v2188
        %v2221 = vadd.f32 %v2060, %v2189
        %v2222 = vadd.f32 %v2061, %v2190
        %v2223 = vadd.f32 %v2062, %v2191
        %v2224 = vadd.f32 %v2063, %v2192
        %v2225 = vadd.f32 %v2064, %v2193
        %v2226 = vadd.f32 %v2065, %v2194
        %v2227 = vadd.f32 %v2066, %v2195
        %v2228 = vadd.f32 %v2067, %v2196
        %v2229 = vadd.f32 %v2068, %v2197
        %v2230 = vadd.f32 %v2069, %v2198
        %v2231 = vmul.f32 %v1815, %v1926
        %v2232 = vmul.f32 %v1817, %v1927
        %v2233 = vmul.f32 %v1819, %v1928
        %v2234 = vmul.f32 %v1821, %v1929
        %v2235 = vmul.f32 %v1823, %v1930
        %v2236 = vmul.f32 %v1825, %v1931
        %v2237 = vmul.f32 %v1827, %v1932
        %v2238 = vmul.f32 %v1829, %v1933
        %v2239 = vmul.f32 %v1831, %v1934
        %v2240 = vmul.f32 %v1833, %v1935
        %v2241 = vmul.f32 %v1835, %v1936
        %v2242 = vmul.f32 %v1837, %v1937
        %v2243 = vmul.f32 %v1839, %v1938
        %v2244 = vmul.f32 %v1841, %v1939
        %v2245 = vmul.f32 %v1843, %v1940
        %v2246 = vmul.f32 %v1845, %v1941
        %2247 = vadd.xlane.f32.xlu0 %v2231
        %v2248 = vpop.xlane.xlu0 %2247
        %2249 = vadd.xlane.f32.xlu0 %v2232
        %v2250 = vpop.xlane.xlu0 %2249
        %2251 = vadd.xlane.f32.xlu0 %v2233
        %v2252 = vpop.xlane.xlu0 %2251
        %2253 = vadd.xlane.f32.xlu0 %v2234
        %v2254 = vpop.xlane.xlu0 %2253
        %2255 = vadd.xlane.f32.xlu0 %v2235
        %v2256 = vpop.xlane.xlu0 %2255
        %2257 = vadd.xlane.f32.xlu0 %v2236
        %v2258 = vpop.xlane.xlu0 %2257
        %2259 = vadd.xlane.f32.xlu0 %v2237
        %v2260 = vpop.xlane.xlu0 %2259
        %2261 = vadd.xlane.f32.xlu0 %v2238
        %v2262 = vpop.xlane.xlu0 %2261
        %2263 = vadd.xlane.f32.xlu0 %v2239
        %v2264 = vpop.xlane.xlu0 %2263
        %2265 = vadd.xlane.f32.xlu0 %v2240
        %v2266 = vpop.xlane.xlu0 %2265
        %2267 = vadd.xlane.f32.xlu0 %v2241
        %v2268 = vpop.xlane.xlu0 %2267
        %2269 = vadd.xlane.f32.xlu0 %v2242
        %v2270 = vpop.xlane.xlu0 %2269
        %2271 = vadd.xlane.f32.xlu0 %v2243
        %v2272 = vpop.xlane.xlu0 %2271
        %2273 = vadd.xlane.f32.xlu0 %v2244
        %v2274 = vpop.xlane.xlu0 %2273
        %2275 = vadd.xlane.f32.xlu0 %v2245
        %v2276 = vpop.xlane.xlu0 %2275
        %2277 = vadd.xlane.f32.xlu0 %v2246
        %v2278 = vpop.xlane.xlu0 %2277
        %s2279 = scalar_lea.vmem %s537, 256 [#allocation2]
        %v2280 = vld [vmem:[%s2279] sm:$0xff]
        %v2281 = vld [vmem:[%s2279 + $0x8] sm:$0xff]
        %v2282 = vld [vmem:[%s2279 + $0x10] sm:$0xff]
        %v2283 = vld [vmem:[%s2279 + $0x18] sm:$0xff]
        %v2284 = vld [vmem:[%s2279 + $0x20] sm:$0xff]
        %v2285 = vld [vmem:[%s2279 + $0x28] sm:$0xff]
        %v2286 = vld [vmem:[%s2279 + $0x30] sm:$0xff]
        %v2287 = vld [vmem:[%s2279 + $0x38] sm:$0xff]
        %v2288 = vld [vmem:[%s2279 + $0x40] sm:$0xff]
        %v2289 = vld [vmem:[%s2279 + $0x48] sm:$0xff]
        %v2290 = vld [vmem:[%s2279 + $0x50] sm:$0xff]
        %v2291 = vld [vmem:[%s2279 + $0x58] sm:$0xff]
        %v2292 = vld [vmem:[%s2279 + $0x60] sm:$0xff]
        %v2293 = vld [vmem:[%s2279 + $0x68] sm:$0xff]
        %v2294 = vld [vmem:[%s2279 + $0x70] sm:$0xff]
        %v2295 = vld [vmem:[%s2279 + $0x78] sm:$0xff]
        %v2296 = vunpack.c.l.bf16 %v2280
        %v2297 = vunpack.c.h.bf16 %v2280
        %v2298 = vunpack.c.l.bf16 %v2281
        %v2299 = vunpack.c.h.bf16 %v2281
        %v2300 = vunpack.c.l.bf16 %v2282
        %v2301 = vunpack.c.h.bf16 %v2282
        %v2302 = vunpack.c.l.bf16 %v2283
        %v2303 = vunpack.c.h.bf16 %v2283
        %v2304 = vunpack.c.l.bf16 %v2284
        %v2305 = vunpack.c.h.bf16 %v2284
        %v2306 = vunpack.c.l.bf16 %v2285
        %v2307 = vunpack.c.h.bf16 %v2285
        %v2308 = vunpack.c.l.bf16 %v2286
        %v2309 = vunpack.c.h.bf16 %v2286
        %v2310 = vunpack.c.l.bf16 %v2287
        %v2311 = vunpack.c.h.bf16 %v2287
        %v2312 = vunpack.c.l.bf16 %v2288
        %v2313 = vunpack.c.h.bf16 %v2288
        %v2314 = vunpack.c.l.bf16 %v2289
        %v2315 = vunpack.c.h.bf16 %v2289
        %v2316 = vunpack.c.l.bf16 %v2290
        %v2317 = vunpack.c.h.bf16 %v2290
        %v2318 = vunpack.c.l.bf16 %v2291
        %v2319 = vunpack.c.h.bf16 %v2291
        %v2320 = vunpack.c.l.bf16 %v2292
        %v2321 = vunpack.c.h.bf16 %v2292
        %v2322 = vunpack.c.l.bf16 %v2293
        %v2323 = vunpack.c.h.bf16 %v2293
        %v2324 = vunpack.c.l.bf16 %v2294
        %v2325 = vunpack.c.h.bf16 %v2294
        %v2326 = vunpack.c.l.bf16 %v2295
        %v2327 = vunpack.c.h.bf16 %v2295
        %v2328 = vmul.f32 %v2248, %v2296
        %v2329 = vmul.f32 %v2248, %v2297
        %v2330 = vmul.f32 %v2250, %v2298
        %v2331 = vmul.f32 %v2250, %v2299
        %v2332 = vmul.f32 %v2252, %v2300
        %v2333 = vmul.f32 %v2252, %v2301
        %v2334 = vmul.f32 %v2254, %v2302
        %v2335 = vmul.f32 %v2254, %v2303
        %v2336 = vmul.f32 %v2256, %v2304
        %v2337 = vmul.f32 %v2256, %v2305
        %v2338 = vmul.f32 %v2258, %v2306
        %v2339 = vmul.f32 %v2258, %v2307
        %v2340 = vmul.f32 %v2260, %v2308
        %v2341 = vmul.f32 %v2260, %v2309
        %v2342 = vmul.f32 %v2262, %v2310
        %v2343 = vmul.f32 %v2262, %v2311
        %v2344 = vmul.f32 %v2264, %v2312
        %v2345 = vmul.f32 %v2264, %v2313
        %v2346 = vmul.f32 %v2266, %v2314
        %v2347 = vmul.f32 %v2266, %v2315
        %v2348 = vmul.f32 %v2268, %v2316
        %v2349 = vmul.f32 %v2268, %v2317
        %v2350 = vmul.f32 %v2270, %v2318
        %v2351 = vmul.f32 %v2270, %v2319
        %v2352 = vmul.f32 %v2272, %v2320
        %v2353 = vmul.f32 %v2272, %v2321
        %v2354 = vmul.f32 %v2274, %v2322
        %v2355 = vmul.f32 %v2274, %v2323
        %v2356 = vmul.f32 %v2276, %v2324
        %v2357 = vmul.f32 %v2276, %v2325
        %v2358 = vmul.f32 %v2278, %v2326
        %v2359 = vmul.f32 %v2278, %v2327
        %v2360 = vadd.f32 %v2199, %v2328
        %v2361 = vadd.f32 %v2200, %v2329
        %v2362 = vadd.f32 %v2201, %v2330
        %v2363 = vadd.f32 %v2202, %v2331
        %v2364 = vadd.f32 %v2203, %v2332
        %v2365 = vadd.f32 %v2204, %v2333
        %v2366 = vadd.f32 %v2205, %v2334
        %v2367 = vadd.f32 %v2206, %v2335
        %v2368 = vadd.f32 %v2207, %v2336
        %v2369 = vadd.f32 %v2208, %v2337
        %v2370 = vadd.f32 %v2209, %v2338
        %v2371 = vadd.f32 %v2210, %v2339
        %v2372 = vadd.f32 %v2211, %v2340
        %v2373 = vadd.f32 %v2212, %v2341
        %v2374 = vadd.f32 %v2213, %v2342
        %v2375 = vadd.f32 %v2214, %v2343
        %v2376 = vadd.f32 %v2215, %v2344
        %v2377 = vadd.f32 %v2216, %v2345
        %v2378 = vadd.f32 %v2217, %v2346
        %v2379 = vadd.f32 %v2218, %v2347
        %v2380 = vadd.f32 %v2219, %v2348
        %v2381 = vadd.f32 %v2220, %v2349
        %v2382 = vadd.f32 %v2221, %v2350
        %v2383 = vadd.f32 %v2222, %v2351
        %v2384 = vadd.f32 %v2223, %v2352
        %v2385 = vadd.f32 %v2224, %v2353
        %v2386 = vadd.f32 %v2225, %v2354
        %v2387 = vadd.f32 %v2226, %v2355
        %v2388 = vadd.f32 %v2227, %v2356
        %v2389 = vadd.f32 %v2228, %v2357
        %v2390 = vadd.f32 %v2229, %v2358
        %v2391 = vadd.f32 %v2230, %v2359
        %v2392 = vmul.f32 %v1879, %v1926
        %v2393 = vmul.f32 %v1881, %v1927
        %v2394 = vmul.f32 %v1883, %v1928
        %v2395 = vmul.f32 %v1885, %v1929
        %v2396 = vmul.f32 %v1887, %v1930
        %v2397 = vmul.f32 %v1889, %v1931
        %v2398 = vmul.f32 %v1891, %v1932
        %v2399 = vmul.f32 %v1893, %v1933
        %v2400 = vmul.f32 %v1895, %v1934
        %v2401 = vmul.f32 %v1897, %v1935
        %v2402 = vmul.f32 %v1899, %v1936
        %v2403 = vmul.f32 %v1901, %v1937
        %v2404 = vmul.f32 %v1903, %v1938
        %v2405 = vmul.f32 %v1905, %v1939
        %v2406 = vmul.f32 %v1907, %v1940
        %v2407 = vmul.f32 %v1909, %v1941
        %2408 = vadd.xlane.f32.xlu0 %v2392
        %v2409 = vpop.xlane.xlu0 %2408
        %2410 = vadd.xlane.f32.xlu0 %v2393
        %v2411 = vpop.xlane.xlu0 %2410
        %2412 = vadd.xlane.f32.xlu0 %v2394
        %v2413 = vpop.xlane.xlu0 %2412
        %2414 = vadd.xlane.f32.xlu0 %v2395
        %v2415 = vpop.xlane.xlu0 %2414
        %2416 = vadd.xlane.f32.xlu0 %v2396
        %v2417 = vpop.xlane.xlu0 %2416
        %2418 = vadd.xlane.f32.xlu0 %v2397
        %v2419 = vpop.xlane.xlu0 %2418
        %2420 = vadd.xlane.f32.xlu0 %v2398
        %v2421 = vpop.xlane.xlu0 %2420
        %2422 = vadd.xlane.f32.xlu0 %v2399
        %v2423 = vpop.xlane.xlu0 %2422
        %2424 = vadd.xlane.f32.xlu0 %v2400
        %v2425 = vpop.xlane.xlu0 %2424
        %2426 = vadd.xlane.f32.xlu0 %v2401
        %v2427 = vpop.xlane.xlu0 %2426
        %2428 = vadd.xlane.f32.xlu0 %v2402
        %v2429 = vpop.xlane.xlu0 %2428
        %2430 = vadd.xlane.f32.xlu0 %v2403
        %v2431 = vpop.xlane.xlu0 %2430
        %2432 = vadd.xlane.f32.xlu0 %v2404
        %v2433 = vpop.xlane.xlu0 %2432
        %2434 = vadd.xlane.f32.xlu0 %v2405
        %v2435 = vpop.xlane.xlu0 %2434
        %2436 = vadd.xlane.f32.xlu0 %v2406
        %v2437 = vpop.xlane.xlu0 %2436
        %2438 = vadd.xlane.f32.xlu0 %v2407
        %v2439 = vpop.xlane.xlu0 %2438
        %s2440 = scalar_lea.vmem %s537, 384 [#allocation2]
        %v2441 = vld [vmem:[%s2440] sm:$0xff]
        %v2442 = vld [vmem:[%s2440 + $0x8] sm:$0xff]
        %v2443 = vld [vmem:[%s2440 + $0x10] sm:$0xff]
        %v2444 = vld [vmem:[%s2440 + $0x18] sm:$0xff]
        %v2445 = vld [vmem:[%s2440 + $0x20] sm:$0xff]
        %v2446 = vld [vmem:[%s2440 + $0x28] sm:$0xff]
        %v2447 = vld [vmem:[%s2440 + $0x30] sm:$0xff]
        %v2448 = vld [vmem:[%s2440 + $0x38] sm:$0xff]
        %v2449 = vld [vmem:[%s2440 + $0x40] sm:$0xff]
        %v2450 = vld [vmem:[%s2440 + $0x48] sm:$0xff]
        %v2451 = vld [vmem:[%s2440 + $0x50] sm:$0xff]
        %v2452 = vld [vmem:[%s2440 + $0x58] sm:$0xff]
        %v2453 = vld [vmem:[%s2440 + $0x60] sm:$0xff]
        %v2454 = vld [vmem:[%s2440 + $0x68] sm:$0xff]
        %v2455 = vld [vmem:[%s2440 + $0x70] sm:$0xff]
        %v2456 = vld [vmem:[%s2440 + $0x78] sm:$0xff]
        %v2457 = vunpack.c.l.bf16 %v2441
        %v2458 = vunpack.c.h.bf16 %v2441
        %v2459 = vunpack.c.l.bf16 %v2442
        %v2460 = vunpack.c.h.bf16 %v2442
        %v2461 = vunpack.c.l.bf16 %v2443
        %v2462 = vunpack.c.h.bf16 %v2443
        %v2463 = vunpack.c.l.bf16 %v2444
        %v2464 = vunpack.c.h.bf16 %v2444
        %v2465 = vunpack.c.l.bf16 %v2445
        %v2466 = vunpack.c.h.bf16 %v2445
        %v2467 = vunpack.c.l.bf16 %v2446
        %v2468 = vunpack.c.h.bf16 %v2446
        %v2469 = vunpack.c.l.bf16 %v2447
        %v2470 = vunpack.c.h.bf16 %v2447
        %v2471 = vunpack.c.l.bf16 %v2448
        %v2472 = vunpack.c.h.bf16 %v2448
        %v2473 = vunpack.c.l.bf16 %v2449
        %v2474 = vunpack.c.h.bf16 %v2449
        %v2475 = vunpack.c.l.bf16 %v2450
        %v2476 = vunpack.c.h.bf16 %v2450
        %v2477 = vunpack.c.l.bf16 %v2451
        %v2478 = vunpack.c.h.bf16 %v2451
        %v2479 = vunpack.c.l.bf16 %v2452
        %v2480 = vunpack.c.h.bf16 %v2452
        %v2481 = vunpack.c.l.bf16 %v2453
        %v2482 = vunpack.c.h.bf16 %v2453
        %v2483 = vunpack.c.l.bf16 %v2454
        %v2484 = vunpack.c.h.bf16 %v2454
        %v2485 = vunpack.c.l.bf16 %v2455
        %v2486 = vunpack.c.h.bf16 %v2455
        %v2487 = vunpack.c.l.bf16 %v2456
        %v2488 = vunpack.c.h.bf16 %v2456
        %v2489 = vmul.f32 %v2409, %v2457
        %v2490 = vmul.f32 %v2409, %v2458
        %v2491 = vmul.f32 %v2411, %v2459
        %v2492 = vmul.f32 %v2411, %v2460
        %v2493 = vmul.f32 %v2413, %v2461
        %v2494 = vmul.f32 %v2413, %v2462
        %v2495 = vmul.f32 %v2415, %v2463
        %v2496 = vmul.f32 %v2415, %v2464
        %v2497 = vmul.f32 %v2417, %v2465
        %v2498 = vmul.f32 %v2417, %v2466
        %v2499 = vmul.f32 %v2419, %v2467
        %v2500 = vmul.f32 %v2419, %v2468
        %v2501 = vmul.f32 %v2421, %v2469
        %v2502 = vmul.f32 %v2421, %v2470
        %v2503 = vmul.f32 %v2423, %v2471
        %v2504 = vmul.f32 %v2423, %v2472
        %v2505 = vmul.f32 %v2425, %v2473
        %v2506 = vmul.f32 %v2425, %v2474
        %v2507 = vmul.f32 %v2427, %v2475
        %v2508 = vmul.f32 %v2427, %v2476
        %v2509 = vmul.f32 %v2429, %v2477
        %v2510 = vmul.f32 %v2429, %v2478
        %v2511 = vmul.f32 %v2431, %v2479
        %v2512 = vmul.f32 %v2431, %v2480
        %v2513 = vmul.f32 %v2433, %v2481
        %v2514 = vmul.f32 %v2433, %v2482
        %v2515 = vmul.f32 %v2435, %v2483
        %v2516 = vmul.f32 %v2435, %v2484
        %v2517 = vmul.f32 %v2437, %v2485
        %v2518 = vmul.f32 %v2437, %v2486
        %v2519 = vmul.f32 %v2439, %v2487
        %v2520 = vmul.f32 %v2439, %v2488
        %v2521 = vadd.f32 %v2360, %v2489
        %v2522 = vadd.f32 %v2361, %v2490
        %v2523 = vadd.f32 %v2362, %v2491
        %v2524 = vadd.f32 %v2363, %v2492
        %v2525 = vadd.f32 %v2364, %v2493
        %v2526 = vadd.f32 %v2365, %v2494
        %v2527 = vadd.f32 %v2366, %v2495
        %v2528 = vadd.f32 %v2367, %v2496
        %v2529 = vadd.f32 %v2368, %v2497
        %v2530 = vadd.f32 %v2369, %v2498
        %v2531 = vadd.f32 %v2370, %v2499
        %v2532 = vadd.f32 %v2371, %v2500
        %v2533 = vadd.f32 %v2372, %v2501
        %v2534 = vadd.f32 %v2373, %v2502
        %v2535 = vadd.f32 %v2374, %v2503
        %v2536 = vadd.f32 %v2375, %v2504
        %v2537 = vadd.f32 %v2376, %v2505
        %v2538 = vadd.f32 %v2377, %v2506
        %v2539 = vadd.f32 %v2378, %v2507
        %v2540 = vadd.f32 %v2379, %v2508
        %v2541 = vadd.f32 %v2380, %v2509
        %v2542 = vadd.f32 %v2381, %v2510
        %v2543 = vadd.f32 %v2382, %v2511
        %v2544 = vadd.f32 %v2383, %v2512
        %v2545 = vadd.f32 %v2384, %v2513
        %v2546 = vadd.f32 %v2385, %v2514
        %v2547 = vadd.f32 %v2386, %v2515
        %v2548 = vadd.f32 %v2387, %v2516
        %v2549 = vadd.f32 %v2388, %v2517
        %v2550 = vadd.f32 %v2389, %v2518
        %v2551 = vadd.f32 %v2390, %v2519
        %v2552 = vadd.f32 %v2391, %v2520
        %v2553 = vpack.c.bf16 %v2523, %v2521
        %v2554 = vpack.c.bf16 %v2524, %v2522
        %v2555 = vpack.c.bf16 %v2527, %v2525
        %v2556 = vpack.c.bf16 %v2528, %v2526
        %v2557 = vpack.c.bf16 %v2531, %v2529
        %v2558 = vpack.c.bf16 %v2532, %v2530
        %v2559 = vpack.c.bf16 %v2535, %v2533
        %v2560 = vpack.c.bf16 %v2536, %v2534
        %v2561 = vpack.c.bf16 %v2539, %v2537
        %v2562 = vpack.c.bf16 %v2540, %v2538
        %v2563 = vpack.c.bf16 %v2543, %v2541
        %v2564 = vpack.c.bf16 %v2544, %v2542
        %v2565 = vpack.c.bf16 %v2547, %v2545
        %v2566 = vpack.c.bf16 %v2548, %v2546
        %v2567 = vpack.c.bf16 %v2551, %v2549
        %v2568 = vpack.c.bf16 %v2552, %v2550
        %v2569 = vld [vmem:[%s3] sm:$0xf]
        %v2570 = vld [vmem:[%s3 + $0x4] sm:$0xf]
        %v2571 = vld [vmem:[%s3 + $0x8] sm:$0xf]
        %v2572 = vld [vmem:[%s3 + $0xc] sm:$0xf]
        %v2573 = vld [vmem:[%s3 + $0x10] sm:$0xf]
        %v2574 = vld [vmem:[%s3 + $0x14] sm:$0xf]
        %v2575 = vld [vmem:[%s3 + $0x18] sm:$0xf]
        %v2576 = vld [vmem:[%s3 + $0x1c] sm:$0xf]
        %v2577 = vld [vmem:[%s3 + $0x20] sm:$0xf]
        %v2578 = vld [vmem:[%s3 + $0x24] sm:$0xf]
        %v2579 = vld [vmem:[%s3 + $0x28] sm:$0xf]
        %v2580 = vld [vmem:[%s3 + $0x2c] sm:$0xf]
        %v2581 = vld [vmem:[%s3 + $0x30] sm:$0xf]
        %v2582 = vld [vmem:[%s3 + $0x34] sm:$0xf]
        %v2583 = vld [vmem:[%s3 + $0x38] sm:$0xf]
        %v2584 = vld [vmem:[%s3 + $0x3c] sm:$0xf]
        %v2585 = vld [vmem:[%s3 + $0x40] sm:$0xf]
        %v2586 = vld [vmem:[%s3 + $0x44] sm:$0xf]
        %v2587 = vld [vmem:[%s3 + $0x48] sm:$0xf]
        %v2588 = vld [vmem:[%s3 + $0x4c] sm:$0xf]
        %v2589 = vld [vmem:[%s3 + $0x50] sm:$0xf]
        %v2590 = vld [vmem:[%s3 + $0x54] sm:$0xf]
        %v2591 = vld [vmem:[%s3 + $0x58] sm:$0xf]
        %v2592 = vld [vmem:[%s3 + $0x5c] sm:$0xf]
        %v2593 = vld [vmem:[%s3 + $0x60] sm:$0xf]
        %v2594 = vld [vmem:[%s3 + $0x64] sm:$0xf]
        %v2595 = vld [vmem:[%s3 + $0x68] sm:$0xf]
        %v2596 = vld [vmem:[%s3 + $0x6c] sm:$0xf]
        %v2597 = vld [vmem:[%s3 + $0x70] sm:$0xf]
        %v2598 = vld [vmem:[%s3 + $0x74] sm:$0xf]
        %v2599 = vld [vmem:[%s3 + $0x78] sm:$0xf]
        %v2600 = vld [vmem:[%s3 + $0x7c] sm:$0xf]
        %v2601 = vld [vmem:[%s4] sm:$0x1]
        %v2603 = vlaneseq
        %v2604 = vshrl.u32 %v2603, 7
        %v2605 = vsub.s32 0, %v2604
        %v2606 = vrot.slane %v2601, %v2605
        %v2640 = vunpack.c.l.b16 %v2569
        %v2641 = vunpack.c.l.b16 %v2570
        %v2642 = vunpack.c.l.b16 %v2571
        %v2643 = vunpack.c.l.b16 %v2572
        %v2644 = vunpack.c.l.b16 %v2573
        %v2645 = vunpack.c.l.b16 %v2574
        %v2646 = vunpack.c.l.b16 %v2575
        %v2647 = vunpack.c.l.b16 %v2576
        %v2648 = vunpack.c.l.b16 %v2577
        %v2649 = vunpack.c.l.b16 %v2578
        %v2650 = vunpack.c.l.b16 %v2579
        %v2651 = vunpack.c.l.b16 %v2580
        %v2652 = vunpack.c.l.b16 %v2581
        %v2653 = vunpack.c.l.b16 %v2582
        %v2654 = vunpack.c.l.b16 %v2583
        %v2655 = vunpack.c.l.b16 %v2584
        %v2656 = vunpack.c.l.b16 %v2585
        %v2657 = vunpack.c.l.b16 %v2586
        %v2658 = vunpack.c.l.b16 %v2587
        %v2659 = vunpack.c.l.b16 %v2588
        %v2660 = vunpack.c.l.b16 %v2589
        %v2661 = vunpack.c.l.b16 %v2590
        %v2662 = vunpack.c.l.b16 %v2591
        %v2663 = vunpack.c.l.b16 %v2592
        %v2664 = vunpack.c.l.b16 %v2593
        %v2665 = vunpack.c.l.b16 %v2594
        %v2666 = vunpack.c.l.b16 %v2595
        %v2667 = vunpack.c.l.b16 %v2596
        %v2668 = vunpack.c.l.b16 %v2597
        %v2669 = vunpack.c.l.b16 %v2598
        %v2670 = vunpack.c.l.b16 %v2599
        %v2671 = vunpack.c.l.b16 %v2600
        %v2672 = vpack.c.b16 %v2641, %v2640
        %v2673 = vpack.c.b16 %v2643, %v2642
        %v2674 = vpack.c.b16 %v2645, %v2644
        %v2675 = vpack.c.b16 %v2647, %v2646
        %v2676 = vpack.c.b16 %v2649, %v2648
        %v2677 = vpack.c.b16 %v2651, %v2650
        %v2678 = vpack.c.b16 %v2653, %v2652
        %v2679 = vpack.c.b16 %v2655, %v2654
        %v2680 = vpack.c.b16 %v2657, %v2656
        %v2681 = vpack.c.b16 %v2659, %v2658
        %v2682 = vpack.c.b16 %v2661, %v2660
        %v2683 = vpack.c.b16 %v2663, %v2662
        %v2684 = vpack.c.b16 %v2665, %v2664
        %v2685 = vpack.c.b16 %v2667, %v2666
        %v2686 = vpack.c.b16 %v2669, %v2668
        %v2687 = vpack.c.b16 %v2671, %v2670
        %2704 = vmatprep.subr.bf16.mxu0 0
        %2705 = vmatpush1.bf16.msra.mxu0 %v2679
        %2706 = vmatprep.subr.bf16.mxu0 0
        %2707 = vmatpush1.bf16.msra.mxu0 %v2678
        %2708 = vmatprep.subr.bf16.mxu0 0
        %2709 = vmatpush1.bf16.msra.mxu0 %v2677
        %2710 = vmatprep.subr.bf16.mxu0 0
        %2711 = vmatpush1.bf16.msra.mxu0 %v2676
        %2712 = vmatprep.subr.bf16.mxu0 0
        %2713 = vmatpush1.bf16.msra.mxu0 %v2675
        %2714 = vmatprep.subr.bf16.mxu0 0
        %2715 = vmatpush1.bf16.msra.mxu0 %v2674
        %2716 = vmatprep.subr.bf16.mxu0 0
        %2717 = vmatpush1.bf16.msra.mxu0 %v2673
        %2718 = vmatprep.subr.bf16.mxu0 0
        %2719 = vmatpush1.bf16.msra.mxu0 %v2672
        %2720 = vmatprep.subr.bf16.mxu0 0
        %2721 = vmatpush2.bf16.msra.mxu0 %v2687
        %2722 = vmatprep.subr.bf16.mxu0 0
        %2723 = vmatpush2.bf16.msra.mxu0 %v2686
        %2724 = vmatprep.subr.bf16.mxu0 0
        %2725 = vmatpush2.bf16.msra.mxu0 %v2685
        %2726 = vmatprep.subr.bf16.mxu0 0
        %2727 = vmatpush2.bf16.msra.mxu0 %v2684
        %2728 = vmatprep.subr.bf16.mxu0 0
        %2729 = vmatpush2.bf16.msra.mxu0 %v2683
        %2730 = vmatprep.subr.bf16.mxu0 0
        %2731 = vmatpush2.bf16.msra.mxu0 %v2682
        %2732 = vmatprep.subr.bf16.mxu0 0
        %2733 = vmatpush2.bf16.msra.mxu0 %v2681
        %2734 = vmatprep.subr.bf16.mxu0 0
        %2735 = vmatpush2.bf16.msra.mxu0 %v2680
        %2736 = vmatprep.mubr.bf16.mxu0 %v2554
        %2737 = vmatmul.mubr.bf16.gmra.mxu0 %v2553
        %v2738 = vpop.f32.mrf.mxu0
        %v2739 = vadd.f32 %v2606, %v2738
        %v2740 = vpop.f32.mrf.mxu0
        %v2741 = vpop.f32.mrf.mxu0
        %v2742 = vadd.f32 %v2606, %v2741
        %v2743 = vpop.f32.mrf.mxu0
        %2744 = vmatprep.mubr.bf16.mxu0 %v2556
        %2745 = vmatmul.mubr.bf16.gmra.mxu0 %v2555
        %v2746 = vpop.f32.mrf.mxu0
        %v2747 = vadd.f32 %v2606, %v2746
        %v2748 = vpop.f32.mrf.mxu0
        %v2749 = vpop.f32.mrf.mxu0
        %v2750 = vadd.f32 %v2606, %v2749
        %v2751 = vpop.f32.mrf.mxu0
        %2752 = vmatprep.mubr.bf16.mxu0 %v2558
        %2753 = vmatmul.mubr.bf16.gmra.mxu0 %v2557
        %v2754 = vpop.f32.mrf.mxu0
        %v2755 = vadd.f32 %v2606, %v2754
        %v2756 = vpop.f32.mrf.mxu0
        %v2757 = vpop.f32.mrf.mxu0
        %v2758 = vadd.f32 %v2606, %v2757
        %v2759 = vpop.f32.mrf.mxu0
        %2760 = vmatprep.mubr.bf16.mxu0 %v2560
        %2761 = vmatmul.mubr.bf16.gmra.mxu0 %v2559
        %v2762 = vpop.f32.mrf.mxu0
        %v2763 = vadd.f32 %v2606, %v2762
        %v2764 = vpop.f32.mrf.mxu0
        %v2765 = vpop.f32.mrf.mxu0
        %v2766 = vadd.f32 %v2606, %v2765
        %v2767 = vpop.f32.mrf.mxu0
        %2768 = vmatprep.mubr.bf16.mxu0 %v2562
        %2769 = vmatmul.mubr.bf16.gmra.mxu0 %v2561
        %v2770 = vpop.f32.mrf.mxu0
        %v2771 = vadd.f32 %v2606, %v2770
        %v2772 = vpop.f32.mrf.mxu0
        %v2773 = vpop.f32.mrf.mxu0
        %v2774 = vadd.f32 %v2606, %v2773
        %v2775 = vpop.f32.mrf.mxu0
        %2776 = vmatprep.mubr.bf16.mxu0 %v2564
        %2777 = vmatmul.mubr.bf16.gmra.mxu0 %v2563
        %v2778 = vpop.f32.mrf.mxu0
        %v2779 = vadd.f32 %v2606, %v2778
        %v2780 = vpop.f32.mrf.mxu0
        %v2781 = vpop.f32.mrf.mxu0
        %v2782 = vadd.f32 %v2606, %v2781
        %v2783 = vpop.f32.mrf.mxu0
        %2784 = vmatprep.mubr.bf16.mxu0 %v2566
        %2785 = vmatmul.mubr.bf16.gmra.mxu0 %v2565
        %v2786 = vpop.f32.mrf.mxu0
        %v2787 = vadd.f32 %v2606, %v2786
        %v2788 = vpop.f32.mrf.mxu0
        %v2789 = vpop.f32.mrf.mxu0
        %v2790 = vadd.f32 %v2606, %v2789
        %v2791 = vpop.f32.mrf.mxu0
        %2792 = vmatprep.mubr.bf16.mxu0 %v2568
        %2793 = vmatmul.mubr.bf16.gmra.mxu0 %v2567
        %v2794 = vpop.f32.mrf.mxu0
        %v2795 = vadd.f32 %v2606, %v2794
        %v2796 = vpop.f32.mrf.mxu0
        %v2797 = vpop.f32.mrf.mxu0
        %v2798 = vadd.f32 %v2606, %v2797
        %v2799 = vpop.f32.mrf.mxu0
        %2800 = vdwg.mxu0
        %v2801 = vpack.c.bf16 %v2742, %v2739
        %v2802 = vpack.c.bf16 %v2750, %v2747
        %v2803 = vpack.c.bf16 %v2758, %v2755
        %v2804 = vpack.c.bf16 %v2766, %v2763
        %v2805 = vpack.c.bf16 %v2774, %v2771
        %v2806 = vpack.c.bf16 %v2782, %v2779
        %v2807 = vpack.c.bf16 %v2790, %v2787
        %v2808 = vpack.c.bf16 %v2798, %v2795
        %v2809 = vld [vmem:[%s5] sm:$0xff]
        %v2810 = vld [vmem:[%s5 + $0x8] sm:$0xff]
        %v2811 = vld [vmem:[%s5 + $0x10] sm:$0xff]
        %v2812 = vld [vmem:[%s5 + $0x18] sm:$0xff]
        %v2813 = vld [vmem:[%s5 + $0x20] sm:$0xff]
        %v2814 = vld [vmem:[%s5 + $0x28] sm:$0xff]
        %v2815 = vld [vmem:[%s5 + $0x30] sm:$0xff]
        %v2816 = vld [vmem:[%s5 + $0x38] sm:$0xff]
        %v2817 = vld [vmem:[%s5 + $0x40] sm:$0xff]
        %v2818 = vld [vmem:[%s5 + $0x48] sm:$0xff]
        %v2819 = vld [vmem:[%s5 + $0x50] sm:$0xff]
        %v2820 = vld [vmem:[%s5 + $0x58] sm:$0xff]
        %v2821 = vld [vmem:[%s5 + $0x60] sm:$0xff]
        %v2822 = vld [vmem:[%s5 + $0x68] sm:$0xff]
        %v2823 = vld [vmem:[%s5 + $0x70] sm:$0xff]
        %v2824 = vld [vmem:[%s5 + $0x78] sm:$0xff]
        %v2825 = vld [vmem:[%s6] sm:$0x3]
        %v2827 = vlaneseq
        %v2828 = vshrl.u32 %v2827, 7
        %v2829 = vsub.s32 0, %v2828
        %v2830 = vrot.slane %v2825, %v2829
        %v2831 = vlaneseq
        %v2832 = vshrl.u32 %v2831, 7
        %v2833 = vsub.s32 1, %v2832
        %v2834 = vrot.slane %v2825, %v2833
        %v2853 = vunpack.c.l.b16 %v2809
        %v2854 = vunpack.c.h.b16 %v2809
        %v2855 = vunpack.c.l.b16 %v2810
        %v2856 = vunpack.c.h.b16 %v2810
        %v2857 = vunpack.c.l.b16 %v2811
        %v2858 = vunpack.c.h.b16 %v2811
        %v2859 = vunpack.c.l.b16 %v2812
        %v2860 = vunpack.c.h.b16 %v2812
        %v2861 = vunpack.c.l.b16 %v2813
        %v2862 = vunpack.c.h.b16 %v2813
        %v2863 = vunpack.c.l.b16 %v2814
        %v2864 = vunpack.c.h.b16 %v2814
        %v2865 = vunpack.c.l.b16 %v2815
        %v2866 = vunpack.c.h.b16 %v2815
        %v2867 = vunpack.c.l.b16 %v2816
        %v2868 = vunpack.c.h.b16 %v2816
        %v2869 = vunpack.c.l.b16 %v2817
        %v2870 = vunpack.c.h.b16 %v2817
        %v2871 = vunpack.c.l.b16 %v2818
        %v2872 = vunpack.c.h.b16 %v2818
        %v2873 = vunpack.c.l.b16 %v2819
        %v2874 = vunpack.c.h.b16 %v2819
        %v2875 = vunpack.c.l.b16 %v2820
        %v2876 = vunpack.c.h.b16 %v2820
        %v2877 = vunpack.c.l.b16 %v2821
        %v2878 = vunpack.c.h.b16 %v2821
        %v2879 = vunpack.c.l.b16 %v2822
        %v2880 = vunpack.c.h.b16 %v2822
        %v2881 = vunpack.c.l.b16 %v2823
        %v2882 = vunpack.c.h.b16 %v2823
        %v2883 = vunpack.c.l.b16 %v2824
        %v2884 = vunpack.c.h.b16 %v2824
        %v2885 = vpack.c.b16 %v2855, %v2853
        %v2886 = vpack.c.b16 %v2856, %v2854
        %v2887 = vpack.c.b16 %v2859, %v2857
        %v2888 = vpack.c.b16 %v2860, %v2858
        %v2889 = vpack.c.b16 %v2863, %v2861
        %v2890 = vpack.c.b16 %v2864, %v2862
        %v2891 = vpack.c.b16 %v2867, %v2865
        %v2892 = vpack.c.b16 %v2868, %v2866
        %v2893 = vpack.c.b16 %v2871, %v2869
        %v2894 = vpack.c.b16 %v2872, %v2870
        %v2895 = vpack.c.b16 %v2875, %v2873
        %v2896 = vpack.c.b16 %v2876, %v2874
        %v2897 = vpack.c.b16 %v2879, %v2877
        %v2898 = vpack.c.b16 %v2880, %v2878
        %v2899 = vpack.c.b16 %v2883, %v2881
        %v2900 = vpack.c.b16 %v2884, %v2882
        %2917 = vmatprep.subr.bf16.mxu0 %v2900
        %2918 = vmatpush1.bf16.msra.mxu0 %v2899
        %2919 = vmatprep.subr.bf16.mxu0 %v2898
        %2920 = vmatpush1.bf16.msra.mxu0 %v2897
        %2921 = vmatprep.subr.bf16.mxu0 %v2896
        %2922 = vmatpush1.bf16.msra.mxu0 %v2895
        %2923 = vmatprep.subr.bf16.mxu0 %v2894
        %2924 = vmatpush1.bf16.msra.mxu0 %v2893
        %2925 = vmatprep.subr.bf16.mxu0 %v2892
        %2926 = vmatpush1.bf16.msra.mxu0 %v2891
        %2927 = vmatprep.subr.bf16.mxu0 %v2890
        %2928 = vmatpush1.bf16.msra.mxu0 %v2889
        %2929 = vmatprep.subr.bf16.mxu0 %v2888
        %2930 = vmatpush1.bf16.msra.mxu0 %v2887
        %2931 = vmatprep.subr.bf16.mxu0 %v2886
        %2932 = vmatpush1.bf16.msra.mxu0 %v2885
        %2933 = vmatprep.subr.bf16.mxu0 0
        %2934 = vmatpush2.bf16.msra.mxu0 0
        %2935 = vmatprep.subr.bf16.mxu0 0
        %2936 = vmatpush2.bf16.msra.mxu0 0
        %2937 = vmatprep.subr.bf16.mxu0 0
        %2938 = vmatpush2.bf16.msra.mxu0 0
        %2939 = vmatprep.subr.bf16.mxu0 0
        %2940 = vmatpush2.bf16.msra.mxu0 0
        %2941 = vmatprep.subr.bf16.mxu0 0
        %2942 = vmatpush2.bf16.msra.mxu0 0
        %2943 = vmatprep.subr.bf16.mxu0 0
        %2944 = vmatpush2.bf16.msra.mxu0 0
        %2945 = vmatprep.subr.bf16.mxu0 0
        %2946 = vmatpush2.bf16.msra.mxu0 0
        %2947 = vmatprep.subr.bf16.mxu0 0
        %2948 = vmatpush2.bf16.msra.mxu0 0
        %2949 = vmatprep.mubr.bf16.mxu0 0
        %2950 = vmatmul.mubr.bf16.gmra.mxu0 %v2801
        %v2951 = vpop.f32.mrf.mxu0
        %v2952 = vadd.f32 %v2830, %v2951
        %v2953 = vpop.f32.mrf.mxu0
        %v2954 = vadd.f32 %v2834, %v2953
        %v2955 = vpop.f32.mrf.mxu0
        %v2956 = vadd.f32 %v2830, %v2955
        %v2957 = vpop.f32.mrf.mxu0
        %v2958 = vadd.f32 %v2834, %v2957
        %2959 = vmatprep.mubr.bf16.mxu0 0
        %2960 = vmatmul.mubr.bf16.gmra.mxu0 %v2802
        %v2961 = vpop.f32.mrf.mxu0
        %v2962 = vadd.f32 %v2830, %v2961
        %v2963 = vpop.f32.mrf.mxu0
        %v2964 = vadd.f32 %v2834, %v2963
        %v2965 = vpop.f32.mrf.mxu0
        %v2966 = vadd.f32 %v2830, %v2965
        %v2967 = vpop.f32.mrf.mxu0
        %v2968 = vadd.f32 %v2834, %v2967
        %2969 = vmatprep.mubr.bf16.mxu0 0
        %2970 = vmatmul.mubr.bf16.gmra.mxu0 %v2803
        %v2971 = vpop.f32.mrf.mxu0
        %v2972 = vadd.f32 %v2830, %v2971
        %v2973 = vpop.f32.mrf.mxu0
        %v2974 = vadd.f32 %v2834, %v2973
        %v2975 = vpop.f32.mrf.mxu0
        %v2976 = vadd.f32 %v2830, %v2975
        %v2977 = vpop.f32.mrf.mxu0
        %v2978 = vadd.f32 %v2834, %v2977
        %2979 = vmatprep.mubr.bf16.mxu0 0
        %2980 = vmatmul.mubr.bf16.gmra.mxu0 %v2804
        %v2981 = vpop.f32.mrf.mxu0
        %v2982 = vadd.f32 %v2830, %v2981
        %v2983 = vpop.f32.mrf.mxu0
        %v2984 = vadd.f32 %v2834, %v2983
        %v2985 = vpop.f32.mrf.mxu0
        %v2986 = vadd.f32 %v2830, %v2985
        %v2987 = vpop.f32.mrf.mxu0
        %v2988 = vadd.f32 %v2834, %v2987
        %2989 = vmatprep.mubr.bf16.mxu0 0
        %2990 = vmatmul.mubr.bf16.gmra.mxu0 %v2805
        %v2991 = vpop.f32.mrf.mxu0
        %v2992 = vadd.f32 %v2830, %v2991
        %v2993 = vpop.f32.mrf.mxu0
        %v2994 = vadd.f32 %v2834, %v2993
        %v2995 = vpop.f32.mrf.mxu0
        %v2996 = vadd.f32 %v2830, %v2995
        %v2997 = vpop.f32.mrf.mxu0
        %v2998 = vadd.f32 %v2834, %v2997
        %2999 = vmatprep.mubr.bf16.mxu0 0
        %3000 = vmatmul.mubr.bf16.gmra.mxu0 %v2806
        %v3001 = vpop.f32.mrf.mxu0
        %v3002 = vadd.f32 %v2830, %v3001
        %v3003 = vpop.f32.mrf.mxu0
        %v3004 = vadd.f32 %v2834, %v3003
        %v3005 = vpop.f32.mrf.mxu0
        %v3006 = vadd.f32 %v2830, %v3005
        %v3007 = vpop.f32.mrf.mxu0
        %v3008 = vadd.f32 %v2834, %v3007
        %3009 = vmatprep.mubr.bf16.mxu0 0
        %3010 = vmatmul.mubr.bf16.gmra.mxu0 %v2807
        %v3011 = vpop.f32.mrf.mxu0
        %v3012 = vadd.f32 %v2830, %v3011
        %v3013 = vpop.f32.mrf.mxu0
        %v3014 = vadd.f32 %v2834, %v3013
        %v3015 = vpop.f32.mrf.mxu0
        %v3016 = vadd.f32 %v2830, %v3015
        %v3017 = vpop.f32.mrf.mxu0
        %v3018 = vadd.f32 %v2834, %v3017
        %3019 = vmatprep.mubr.bf16.mxu0 0
        %3020 = vmatmul.mubr.bf16.gmra.mxu0 %v2808
        %v3021 = vpop.f32.mrf.mxu0
        %v3022 = vadd.f32 %v2830, %v3021
        %v3023 = vpop.f32.mrf.mxu0
        %v3024 = vadd.f32 %v2834, %v3023
        %v3025 = vpop.f32.mrf.mxu0
        %v3026 = vadd.f32 %v2830, %v3025
        %v3027 = vpop.f32.mrf.mxu0
        %v3028 = vadd.f32 %v2834, %v3027
        %3029 = vdwg.mxu0
        %3030 = vst [vmem:[%s565] sm:$0xff] %v2952
        %3031 = vst [vmem:[%s565 + $0x8] sm:$0xff] %v2954
        %3032 = vst [vmem:[%s565 + $0x10] sm:$0xff] %v2956
        %3033 = vst [vmem:[%s565 + $0x18] sm:$0xff] %v2958
        %3034 = vst [vmem:[%s565 + $0x20] sm:$0xff] %v2962
        %3035 = vst [vmem:[%s565 + $0x28] sm:$0xff] %v2964
        %3036 = vst [vmem:[%s565 + $0x30] sm:$0xff] %v2966
        %3037 = vst [vmem:[%s565 + $0x38] sm:$0xff] %v2968
        %3038 = vst [vmem:[%s565 + $0x40] sm:$0xff] %v2972
        %3039 = vst [vmem:[%s565 + $0x48] sm:$0xff] %v2974
        %3040 = vst [vmem:[%s565 + $0x50] sm:$0xff] %v2976
        %3041 = vst [vmem:[%s565 + $0x58] sm:$0xff] %v2978
        %3042 = vst [vmem:[%s565 + $0x60] sm:$0xff] %v2982
        %3043 = vst [vmem:[%s565 + $0x68] sm:$0xff] %v2984
        %3044 = vst [vmem:[%s565 + $0x70] sm:$0xff] %v2986
        %3045 = vst [vmem:[%s565 + $0x78] sm:$0xff] %v2988
        %3046 = vst [vmem:[%s565 + $0x80] sm:$0xff] %v2992
        %3047 = vst [vmem:[%s565 + $0x88] sm:$0xff] %v2994
        %3048 = vst [vmem:[%s565 + $0x90] sm:$0xff] %v2996
        %3049 = vst [vmem:[%s565 + $0x98] sm:$0xff] %v2998
        %3050 = vst [vmem:[%s565 + $0xa0] sm:$0xff] %v3002
        %3051 = vst [vmem:[%s565 + $0xa8] sm:$0xff] %v3004
        %3052 = vst [vmem:[%s565 + $0xb0] sm:$0xff] %v3006
        %3053 = vst [vmem:[%s565 + $0xb8] sm:$0xff] %v3008
        %3054 = vst [vmem:[%s565 + $0xc0] sm:$0xff] %v3012
        %3055 = vst [vmem:[%s565 + $0xc8] sm:$0xff] %v3014
        %3056 = vst [vmem:[%s565 + $0xd0] sm:$0xff] %v3016
        %3057 = vst [vmem:[%s565 + $0xd8] sm:$0xff] %v3018
        %3058 = vst [vmem:[%s565 + $0xe0] sm:$0xff] %v3022
        %3059 = vst [vmem:[%s565 + $0xe8] sm:$0xff] %v3024
        %3060 = vst [vmem:[%s565 + $0xf0] sm:$0xff] %v3026
        %3061 = vst [vmem:[%s565 + $0xf8] sm:$0xff] %v3028
        %s3062 = sand.u32 %s181, 1
        %s3063 = scalar_lea.sflag [#allocation4], %s3062
        %s3064 = sand.u32 %s181, 1
        %s3065 = smul.addr %s3064, 256
        %s3066 = scalar_lea.vmem [#allocation3], %s3065
        // Predicated region
        $region87: #{attention_aggregation.1} parent=81 // pred_check
          %p3067 = pneg %p191
        $region88: #{attention_aggregation.1} parent=81 // pred_check_branch
          %3069 = sbr.rel (%p3067) target = $region90
        $region89: #{attention_aggregation.1} parent=81 // pred_region
          %s3070 = smul.u32 16, %s21
          %s3072 = ssub.s32 4096, 4096
          %3073 = vsyncadd %s3063, %s3072
          %s3074 = smul.addr %s3070, 2
          %s3075 = smul.addr %s3074, 128
          %s3076 = scalar_lea.hbm %s7, %s3075
          %s3077 = sshll.u32 %s3066, 4
          %s3078 = int_to_ptr.vmem [resolvable:$true] %s3077
          %3083 = dma.vmem_to_hbm [thread:$0]  %s3078, 4096, %s3076, %s3063, 256, 256, 16
        $region90: #{attention_aggregation.1} parent=81 // pred_fallthru
          _
      $region82: #{attention_aggregation.1} parent=5 // pred_fallthru
        _
      %p3084 = scmp.le.s32.totalorder 2, %s16
      // Predicated region
      $region91: #{attention_aggregation.1} parent=5 // pred_check
        %p3085 = pneg %p3084
      $region92: #{attention_aggregation.1} parent=5 // pred_check_branch
        %3087 = sbr.rel (%p3085) target = $region94
      $region93: #{attention_aggregation.1} parent=5 // pred_region
        %s3088 = ssub.s32 %s16, 2
        // Predicated region
        $region95: #{attention_aggregation.1} parent=93 // pred_check
          %p3089 = pneg %p197
        $region96: #{attention_aggregation.1} parent=93 // pred_check_branch
          %3091 = sbr.rel (%p3089) target = $region98
        $region97: #{attention_aggregation.1} parent=93 // pred_region
          %s3092 = sand.u32 %s182, 1
          %s3093 = scalar_lea.sflag [#allocation4], %s3092
          %s3094 = sand.u32 %s182, 1
          %s3095 = smul.addr %s3094, 256
          %s3096 = scalar_lea.vmem [#allocation3], %s3095
          %3097 = dma.done %s3093, 4096
        $region98: #{attention_aggregation.1} parent=93 // pred_fallthru
          _
      $region94: #{attention_aggregation.1} parent=5 // pred_fallthru
        _
    $region6: #{attention_aggregation.1} parent=1 // loop_footer
      %s20 = sadd.s32 1, %s16
    $region7: #{attention_aggregation.1} parent=1 // loop_footer_branch
      %15 = sbr.rel target = $region3
    $region8: #{attention_aggregation.1} parent=1 // loop_exit
      _
    %3098 = vsyncpa [#allocation4], 1
    %s3099 = scalar_lea.sflag [#allocation4], 1
    %3100 = vsyncpa %s3099, 1

</llo_original>
